<compile_context>
chip_gen: v7x
topology: tpu7x:2x2x1
jax: 0.10.0
libtpu: 0.0.40
codegen_flags: <defaults>
</compile_context>

<pallas_src>
import functools

import jax
import jax.numpy as jnp
from jax.experimental import pallas as pl
from jax.experimental.pallas import tpu as pltpu

_HIGHEST = jax.lax.Precision.HIGHEST
_DEFAULT = jax.lax.Precision.DEFAULT
_MIB = 1024 * 1024
# Cap on each in-kernel one-hot pool/expand matrix (flat path only).
_AUX_MATRIX_BUDGET_BYTES = 4 * _MIB


# --------------------------------------------------------------------------
# Hardware-aware budgets
# --------------------------------------------------------------------------
def _vmem_budgets():
    """(tile_budget_bytes, vmem_limit_bytes, min_batch_grid_steps)."""
    cap = None
    try:
        cap = int(pltpu.get_tpu_info().vmem_capacity_bytes)
    except Exception:
        cap = None
    if cap is None:
        try:
            kind = jax.devices()[0].device_kind.lower()
            cap = 64 * _MIB if "v7" in kind else 128 * _MIB
        except Exception:
            cap = 64 * _MIB  # conservative default
    # Leave ~8 MiB headroom below physical VMEM; never request more than 120 MiB.
    vmem_limit = max(min(cap - 8 * _MIB, 120 * _MIB), 32 * _MIB)
    # Tile buffers (double-buffered in/out + temporaries) get the limit minus
    # ~24 MiB of slack for weights, Mosaic internal scratch, etc.
    tile_budget = max(vmem_limit - 24 * _MIB, 16 * _MIB)
    # 64 MiB parts (v7x-like) have 2 TensorCores: give the parallel batch axis
    # at least 2 grid steps so both cores stream HBM.
    min_steps = 2 if cap < 96 * _MIB else 1
    return tile_budget, vmem_limit, min_steps


def _sublane_tile(itemsize):
    # f32 -> 8, bf16 -> 16, int8/fp8 -> 32 rows per native sublane tile.
    return max(8, 32 // max(1, itemsize))


def _pick_tb(B, per_row_bytes, budget, max_rows, min_steps, align, sublane):
    """Largest batch tile under the VMEM budget / caller caps / layout rules."""
    tb = int(max(1, budget // max(int(per_row_bytes), 1)))
    tb = min(tb, B)
    if max_rows is not None:
        tb = min(tb, max(1, int(max_rows)))
    if min_steps > 1 and B > 1:
        tb = min(tb, pl.cdiv(B, min_steps))
    if align and tb != B:
        # Batch rows are the sublane dim of a 2-D block: keep the block a
        # multiple of the native sublane tile (round DOWN, honoring the caps),
        # or fall back to the layout floor of 8 / full-B for tiny tiles.
        if tb >= sublane:
            tb = (tb // sublane) * sublane
        elif tb >= 8:
            tb = (tb // 8) * 8
        else:
            tb = min(8, B)  # layout requirement wins over the caller cap here
    return max(1, min(tb, B))


def _pick_tl(L, C, tb, itemsize, budget, max_lanes):
    """L tile (multiple of 128, or full L) for the two-pass path."""
    tl = int(budget // max(1, tb * C * (4 * itemsize + 2)))
    tl = (tl // 128) * 128
    if max_lanes is not None:
        tl = min(tl, (max(128, int(max_lanes)) // 128) * 128)
    tl = max(tl, 128)
    return L if tl >= L else tl


def _cost(B, C, L, H, itemsize, flat):
    bytes_accessed = 2 * B * C * L * itemsize + 4 * (C * H + H + C)
    flops = 4 * B * C * H + 4 * B * C * L + (4 * B * C * L * C if flat else 0)
    return pl.CostEstimate(flops=int(flops), transcendentals=int(B * C),
                           bytes_accessed=int(bytes_accessed))


# --------------------------------------------------------------------------
# Kernels
# --------------------------------------------------------------------------
def _se_kernel_3d(x_ref, w1_ref, b1_ref, w2_ref, b2_ref, o_ref):
    """Single-pass path: x block is (TB, C, L) with full C, L per block."""
    x = x_ref[...]                                            # (TB, C, L), input dtype
    # Squeeze: mean over L with fused f32 accumulation (no live f32 tile copy).
    pooled = jnp.mean(x, axis=-1, dtype=jnp.float32)          # (TB, C) f32
    # Excitation (tiny GEMMs, true-f32 nn.Linear numerics).
    h = jnp.dot(pooled, w1_ref[...], preferred_element_type=jnp.float32,
                precision=_HIGHEST) + b1_ref[...]
    h = jnp.maximum(h, 0.0)
    s = jnp.dot(h, w2_ref[...], preferred_element_type=jnp.float32,
                precision=_HIGHEST) + b2_ref[...]
    s = jax.nn.sigmoid(s)                                     # (TB, C) f32
    # Scale in the input dtype.
    o_ref[...] = (x * s.astype(x.dtype)[:, :, None]).astype(o_ref.dtype)


def _se_kernel_flat(x_ref, w1_ref, b1_ref, w2_ref, b2_ref, o_ref, *,
                    C, L, mm_precision):
    """Lane-dense path for L % 128 != 0: x block is (TB, C*L).

    The per-channel reduce and the gate broadcast are tiny MXU matmuls against
    one-hot matrices generated in-kernel from 2-D iota compares (no division,
    no reshape) -- no HBM reads and no extra resident VMEM buffers.
    """
    CL = C * L
    x = x_ref[...]                                            # (TB, C*L)
    dt = x.dtype

    # pool[j, c] = 1  iff  c*L <= j < (c+1)*L     -> (CL, C)
    j = jax.lax.broadcasted_iota(jnp.int32, (CL, C), 0)
    c_lo = jax.lax.broadcasted_iota(jnp.int32, (CL, C), 1) * L
    pool = ((j >= c_lo) & (j < c_lo + L)).astype(dt)
    pooled = jnp.dot(x, pool, preferred_element_type=jnp.float32,
                     precision=mm_precision) * (1.0 / L)      # (TB, C) f32

    h = jnp.dot(pooled, w1_ref[...], preferred_element_type=jnp.float32,
                precision=_HIGHEST) + b1_ref[...]
    h = jnp.maximum(h, 0.0)
    s = jnp.dot(h, w2_ref[...], preferred_element_type=jnp.float32,
                precision=_HIGHEST) + b2_ref[...]
    s = jax.nn.sigmoid(s)                                     # (TB, C) f32

    # exp_m[c, j] = 1  iff  c*L <= j < (c+1)*L    -> (C, CL)
    cc_lo = jax.lax.broadcasted_iota(jnp.int32, (C, CL), 0) * L
    jj = jax.lax.broadcasted_iota(jnp.int32, (C, CL), 1)
    exp_m = ((jj >= cc_lo) & (jj < cc_lo + L)).astype(dt)
    # One-hot copy: produce s_exp directly in the input dtype (no f32 tile temp).
    s_exp = jnp.dot(s.astype(dt), exp_m, preferred_element_type=dt,
                    precision=mm_precision)                   # (TB, C*L), input dtype
    o_ref[...] = (x * s_exp).astype(o_ref.dtype)


def _se_gate_kernel(x_ref, w1_ref, b1_ref, w2_ref, b2_ref, s_ref, acc_ref, *,
                    L, tl, needs_mask):
    """Two-pass path, pass 1: accumulate per-(B, C) sums over L tiles, then gate."""
    lt = pl.program_id(1)

    @pl.when(lt == 0)
    def _init():
        acc_ref[...] = jnp.zeros_like(acc_ref)

    x = x_ref[...]                                            # (TB, C, tl)
    if needs_mask:
        pos = jax.lax.broadcasted_iota(jnp.int32, x.shape, 2) + lt * tl
        x = jnp.where(pos < L, x, jnp.zeros_like(x))
    acc_ref[...] += jnp.sum(x, axis=-1, dtype=jnp.float32)    # (TB, C) f32

    @pl.when(lt == pl.num_programs(1) - 1)
    def _finalize():
        pooled = acc_ref[...] * (1.0 / L)
        h = jnp.dot(pooled, w1_ref[...], preferred_element_type=jnp.float32,
                    precision=_HIGHEST) + b1_ref[...]
        h = jnp.maximum(h, 0.0)
        s = jnp.dot(h, w2_ref[...], preferred_element_type=jnp.float32,
                    precision=_HIGHEST) + b2_ref[...]
        s_ref[...] = jax.nn.sigmoid(s)                        # (TB, C) f32


def _se_scale_kernel(x_ref, s_ref, o_ref):
    """Two-pass path, pass 2: stream x again and scale by the gate."""
    x = x_ref[...]                                            # (TB, C, tl)
    s = s_ref[...]                                            # (TB, C) f32
    o_ref[...] = (x * s.astype(x.dtype)[:, :, None]).astype(o_ref.dtype)


# --------------------------------------------------------------------------
# Wrapper
# --------------------------------------------------------------------------
def se_block(x, w1, b1, w2, b2, *, max_rows_per_block=None,
             max_lanes_per_block=None, force_two_pass=False):
    """x: (B, C, L); w1: (H, C), b1: (H,), w2: (C, H), b2: (C,) (PyTorch Linear layout)."""
    B, C, L = x.shape
    H = w1.shape[0]
    CL = C * L
    dtype = x.dtype
    itemsize = jnp.dtype(dtype).itemsize
    sublane = _sublane_tile(itemsize)

    tile_budget, vmem_limit, min_steps = _vmem_budgets()

    # Present the Linear weights as (in, out) so the kernel uses plain matmuls.
    w1_t = jnp.asarray(w1, dtype=jnp.float32).T               # (C, H)
    w2_t = jnp.asarray(w2, dtype=jnp.float32).T               # (H, C)
    b1_2d = jnp.asarray(b1, dtype=jnp.float32).reshape(1, H)
    b2_2d = jnp.asarray(b2, dtype=jnp.float32).reshape(1, C)

    # HIGHEST only where it matters for exactness: for f32 inputs the one-hot
    # pool/expand matmuls must not truncate x/s to bf16; for narrower inputs
    # DEFAULT precision is already exact for one-hot selection/summation.
    mm_precision = _HIGHEST if jnp.dtype(dtype) == jnp.float32 else _DEFAULT

    weight_specs = [
        pl.BlockSpec((C, H), lambda b: (0, 0)),
        pl.BlockSpec((1, H), lambda b: (0, 0)),
        pl.BlockSpec((H, C), lambda b: (0, 0)),
        pl.BlockSpec((1, C), lambda b: (0, 0)),
    ]

    cost_flat = _cost(B, C, L, H, itemsize, True)
    cost_3d = _cost(B, C, L, H, itemsize, False)

    # ---------------- path selection ----------------
    per_row_3d = CL * (4 * itemsize + 2)       # 2x dbl-buffered in/out + temps
    needs_two_pass = force_two_pass or (per_row_3d > tile_budget)
    use_flat = (not needs_two_pass and (L % 128 != 0) and (CL % 128 == 0)
                and (CL * C * itemsize <= _AUX_MATRIX_BUDGET_BYTES))

    # ---------------- two-pass L-tiled fallback ----------------
    if needs_two_pass:
        # TODO(synk): add a C-tiled variant for channel counts too large for one block.
        per_row_tl = C * 128 * (4 * itemsize + 2)
        tb = _pick_tb(B, per_row_tl, tile_budget, max_rows_per_block,
                      min_steps, align=True, sublane=sublane)
        tl = _pick_tl(L, C, tb, itemsize, tile_budget, max_lanes_per_block)
        needs_mask = (L % tl) != 0
        params_p1 = pltpu.CompilerParams(
            dimension_semantics=("parallel", "arbitrary"),
            vmem_limit_bytes=int(vmem_limit))
        params_p2 = pltpu.CompilerParams(
            dimension_semantics=("parallel", "parallel"),
            vmem_limit_bytes=int(vmem_limit))

        s = pl.pallas_call(
            functools.partial(_se_gate_kernel, L=L, tl=tl, needs_mask=needs_mask),
            out_shape=jax.ShapeDtypeStruct((B, C), jnp.float32),
            grid_spec=pltpu.PrefetchScalarGridSpec(
                num_scalar_prefetch=0,
                grid=(pl.cdiv(B, tb), pl.cdiv(L, tl)),
                in_specs=[pl.BlockSpec((tb, C, tl), lambda b, l: (b, 0, l)),
                          pl.BlockSpec((C, H), lambda b, l: (0, 0)),
                          pl.BlockSpec((1, H), lambda b, l: (0, 0)),
                          pl.BlockSpec((H, C), lambda b, l: (0, 0)),
                          pl.BlockSpec((1, C), lambda b, l: (0, 0))],
                out_specs=pl.BlockSpec((tb, C), lambda b, l: (b, 0)),
                scratch_shapes=[pltpu.VMEM((tb, C), jnp.float32)]),
            compiler_params=params_p1,
            cost_estimate=_cost(B, C, L, H, itemsize, False),
        )(x, w1_t, b1_2d, w2_t, b2_2d)

        return pl.pallas_call(
            _se_scale_kernel,
            out_shape=jax.ShapeDtypeStruct((B, C, L), dtype),
            grid_spec=pltpu.PrefetchScalarGridSpec(
                num_scalar_prefetch=0,
                grid=(pl.cdiv(B, tb), pl.cdiv(L, tl)),
                in_specs=[pl.BlockSpec((tb, C, tl), lambda b, l: (b, 0, l)),
                          pl.BlockSpec((tb, C), lambda b, l: (b, 0))],
                out_specs=pl.BlockSpec((tb, C, tl), lambda b, l: (b, 0, l))),
            compiler_params=params_p2,
            cost_estimate=cost_3d,
        )(x, s)

    params_1d = pltpu.CompilerParams(
        dimension_semantics=("parallel",),
        vmem_limit_bytes=int(vmem_limit))

    # ---------------- lane-dense flat path (small / non-128-multiple L) ------
    if use_flat:
        x_flat = x.reshape(B, CL)
        per_row = CL * (5 * itemsize + 2)
        fixed = 2 * CL * C * itemsize + 8 * (C * H + H + C)   # in-kernel aux + weights
        avail = max(tile_budget - fixed, per_row)
        tb = _pick_tb(B, per_row, avail, max_rows_per_block,
                      min_steps, align=True, sublane=sublane)
        out_flat = pl.pallas_call(
            functools.partial(_se_kernel_flat, C=C, L=L, mm_precision=mm_precision),
            out_shape=jax.ShapeDtypeStruct((B, CL), dtype),
            grid_spec=pltpu.PrefetchScalarGridSpec(
                num_scalar_prefetch=0,
                grid=(pl.cdiv(B, tb),),
                in_specs=[pl.BlockSpec((tb, CL), lambda b: (b, 0))] + weight_specs,
                out_specs=pl.BlockSpec((tb, CL), lambda b: (b, 0))),
            compiler_params=params_1d,
            cost_estimate=cost_flat,
        )(x_flat, w1_t, b1_2d, w2_t, b2_2d)
        return out_flat.reshape(B, C, L)

    # ---------------- general single-pass 3-D path ----------------
    tb = _pick_tb(B, per_row_3d, tile_budget, max_rows_per_block,
                  min_steps, align=False, sublane=sublane)
    return pl.pallas_call(
        _se_kernel_3d,
        out_shape=jax.ShapeDtypeStruct((B, C, L), dtype),
        grid_spec=pltpu.PrefetchScalarGridSpec(
            num_scalar_prefetch=0,
            grid=(pl.cdiv(B, tb),),
            in_specs=[pl.BlockSpec((tb, C, L), lambda b: (b, 0, 0))] + weight_specs,
            out_specs=pl.BlockSpec((tb, C, L), lambda b: (b, 0, 0))),
        compiler_params=params_1d,
        cost_estimate=cost_3d,
    )(x, w1_t, b1_2d, w2_t, b2_2d)


def se_block_ref(x, w1, b1, w2, b2):
    """Pure-JAX reference mirroring the PyTorch forward (f32 Linear math)."""
    pooled = jnp.mean(x.astype(jnp.float32), axis=-1)                     # (B, C)
    h = jnp.maximum(jnp.dot(pooled, w1.T, precision=_HIGHEST) + b1, 0.0)  # (B, H)
    s = jax.nn.sigmoid(jnp.dot(h, w2.T, precision=_HIGHEST) + b2)         # (B, C)
    return x * s[:, :, None].astype(x.dtype)


if __name__ == "__main__":
    key = jax.random.PRNGKey(0)

    def make_params(pkey, C, reduction):
        H = max(1, C // reduction)
        kw1, kb1, kw2, kb2 = jax.random.split(pkey, 4)
        w1 = jax.random.normal(kw1, (H, C), dtype=jnp.float32) * 0.1
        b1 = jax.random.normal(kb1, (H,), dtype=jnp.float32) * 0.1
        w2 = jax.random.normal(kw2, (C, H), dtype=jnp.float32) * 0.1
        b2 = jax.random.normal(kb2, (C,), dtype=jnp.float32) * 0.1
        return w1, b1, w2, b2

    # (B, C, L, reduction, extra kwargs)
    cases = [
        (2, 32, 16, 16, {}),                                  # flat path (SEBlock's typical small-L shape)
        (16, 32, 16, 16, dict(max_rows_per_block=8)),         # flat path, multi-step pipelined batch grid
        (4, 32, 160, 16, {}),                                 # flat path via broadened L % 128 != 0 rule
        (5, 32, 128, 16, dict(max_rows_per_block=2)),         # 3-D path, partial last batch tile
        (4, 32, 256, 16, dict(force_two_pass=True, max_lanes_per_block=128)),  # two-pass, L-tiled
        (3, 32, 200, 8, dict(force_two_pass=True, max_lanes_per_block=128)),   # two-pass, masked L tail
    ]
    for idx, (B, C, L, red, kw) in enumerate(cases):
        kx, kp, key = jax.random.split(key, 3)
        x = jax.random.normal(kx, (B, C, L), dtype=jnp.float32)
        w1, b1, w2, b2 = make_params(kp, C, red)

        out = se_block(x, w1, b1, w2, b2, **kw)
        jax.block_until_ready(out)

        ref = se_block_ref(x, w1, b1, w2, b2)
        assert out.shape == (B, C, L)
        max_err = float(jnp.max(jnp.abs(out - ref)))
        assert jnp.allclose(out, ref, atol=1e-5, rtol=1e-4), (
            f"case {idx} mismatch vs reference (max_abs_err={max_err})")

    print("KERNEL_OK")
</pallas_src>

<mosaic_0001>
module attributes {stable_mosaic.version = 11 : i64} {
  func.func @_se_kernel_flat(%arg0: i32, %arg1: memref<2x512xf32, #tpu.memory_space<vmem>>, %arg2: memref<32x2xf32, #tpu.memory_space<vmem>>, %arg3: memref<1x2xf32, #tpu.memory_space<vmem>>, %arg4: memref<2x32xf32, #tpu.memory_space<vmem>>, %arg5: memref<1x32xf32, #tpu.memory_space<vmem>>, %arg6: memref<2x512xf32, #tpu.memory_space<vmem>>) attributes {dimension_semantics = [#tpu.dimension_semantics<parallel>], iteration_bounds = array<i64: 1>, scalar_prefetch = 0 : i64, scratch_operands = 0 : i64, tpu.core_type = #tpu.core_type<tc>, window_params = [{transform_indices = @transform_0, window_bounds = array<i64: 2, 512>}, {pipeline_mode = #tpu.pipeline_mode<synchronous>, transform_indices = @transform_1, window_bounds = array<i64: 32, 2>}, {pipeline_mode = #tpu.pipeline_mode<synchronous>, transform_indices = @transform_2, window_bounds = array<i64: 1, 2>}, {pipeline_mode = #tpu.pipeline_mode<synchronous>, transform_indices = @transform_3, window_bounds = array<i64: 2, 32>}, {pipeline_mode = #tpu.pipeline_mode<synchronous>, transform_indices = @transform_4, window_bounds = array<i64: 1, 32>}, {transform_indices = @transform_5, window_bounds = array<i64: 2, 512>}]} {
    %c0 = arith.constant 0 : index
    %c0_0 = arith.constant 0 : index
    %0 = vector.load %arg1[%c0, %c0_0] : memref<2x512xf32, #tpu.memory_space<vmem>>, vector<2x512xf32>
    %1 = tpu.iota {dimensions = array<i32: 0>} : vector<512x32xi32>
    %2 = tpu.iota {dimensions = array<i32: 1>} : vector<512x32xi32>
    %c16_i32 = arith.constant 16 : i32
    %3 = vector.broadcast %c16_i32 : i32 to vector<512x32xi32>
    %4 = arith.muli %2, %3 : vector<512x32xi32>
    %5 = arith.cmpi sge, %1, %4 : vector<512x32xi32>
    %c16_i32_1 = arith.constant 16 : i32
    %6 = vector.broadcast %c16_i32_1 : i32 to vector<512x32xi32>
    %7 = arith.addi %4, %6 : vector<512x32xi32>
    %8 = arith.cmpi slt, %1, %7 : vector<512x32xi32>
    %9 = arith.andi %5, %8 : vector<512x32xi1>
    %10 = arith.extui %9 : vector<512x32xi1> to vector<512x32xi32>
    %11 = arith.sitofp %10 : vector<512x32xi32> to vector<512x32xf32>
    %cst = arith.constant dense<0.000000e+00> : vector<2x32xf32>
    %12 = tpu.matmul %0, %11, %cst {dimension_numbers = #tpu.dot_dimension_numbers<[1], [0], [0], [1], [0, 0, 1, 1], [], []>, precision = #tpu.contract_precision<fp32>} : vector<2x512xf32>, vector<512x32xf32>, vector<2x32xf32> -> vector<2x32xf32>
    %cst_2 = arith.constant 6.250000e-02 : f32
    %13 = vector.broadcast %cst_2 : f32 to vector<2x32xf32>
    %14 = arith.mulf %12, %13 : vector<2x32xf32>
    %c0_3 = arith.constant 0 : index
    %c0_4 = arith.constant 0 : index
    %15 = vector.load %arg2[%c0_3, %c0_4] : memref<32x2xf32, #tpu.memory_space<vmem>>, vector<32x2xf32>
    %cst_5 = arith.constant dense<0.000000e+00> : vector<2x2xf32>
    %16 = tpu.matmul %14, %15, %cst_5 {dimension_numbers = #tpu.dot_dimension_numbers<[1], [0], [0], [1], [0, 0, 1, 1], [], []>, precision = #tpu.contract_precision<fp32>} : vector<2x32xf32>, vector<32x2xf32>, vector<2x2xf32> -> vector<2x2xf32>
    %c0_6 = arith.constant 0 : index
    %c0_7 = arith.constant 0 : index
    %17 = vector.load %arg3[%c0_6, %c0_7] : memref<1x2xf32, #tpu.memory_space<vmem>>, vector<1x2xf32>
    %18 = vector.broadcast %17 : vector<1x2xf32> to vector<2x2xf32>
    %19 = arith.addf %16, %18 : vector<2x2xf32>
    %cst_8 = arith.constant 0.000000e+00 : f32
    %20 = vector.broadcast %cst_8 : f32 to vector<2x2xf32>
    %21 = arith.maximumf %19, %20 : vector<2x2xf32>
    %c0_9 = arith.constant 0 : index
    %c0_10 = arith.constant 0 : index
    %22 = vector.load %arg4[%c0_9, %c0_10] : memref<2x32xf32, #tpu.memory_space<vmem>>, vector<2x32xf32>
    %cst_11 = arith.constant dense<0.000000e+00> : vector<2x32xf32>
    %23 = tpu.matmul %21, %22, %cst_11 {dimension_numbers = #tpu.dot_dimension_numbers<[1], [0], [0], [1], [0, 0, 1, 1], [], []>, precision = #tpu.contract_precision<fp32>} : vector<2x2xf32>, vector<2x32xf32>, vector<2x32xf32> -> vector<2x32xf32>
    %c0_12 = arith.constant 0 : index
    %c0_13 = arith.constant 0 : index
    %24 = vector.load %arg5[%c0_12, %c0_13] : memref<1x32xf32, #tpu.memory_space<vmem>>, vector<1x32xf32>
    %25 = vector.broadcast %24 : vector<1x32xf32> to vector<2x32xf32>
    %26 = arith.addf %23, %25 : vector<2x32xf32>
    %27 = arith.negf %26 : vector<2x32xf32>
    %28 = math.exp %27 : vector<2x32xf32>
    %cst_14 = arith.constant 1.000000e+00 : f32
    %29 = vector.broadcast %cst_14 : f32 to vector<2x32xf32>
    %30 = arith.addf %29, %28 : vector<2x32xf32>
    %31 = arith.divf %29, %30 : vector<2x32xf32>
    %32 = tpu.iota {dimensions = array<i32: 0>} : vector<32x512xi32>
    %c16_i32_15 = arith.constant 16 : i32
    %33 = vector.broadcast %c16_i32_15 : i32 to vector<32x512xi32>
    %34 = arith.muli %32, %33 : vector<32x512xi32>
    %35 = tpu.iota {dimensions = array<i32: 1>} : vector<32x512xi32>
    %36 = arith.cmpi sge, %35, %34 : vector<32x512xi32>
    %c16_i32_16 = arith.constant 16 : i32
    %37 = vector.broadcast %c16_i32_16 : i32 to vector<32x512xi32>
    %38 = arith.addi %34, %37 : vector<32x512xi32>
    %39 = arith.cmpi slt, %35, %38 : vector<32x512xi32>
    %40 = arith.andi %36, %39 : vector<32x512xi1>
    %41 = arith.extui %40 : vector<32x512xi1> to vector<32x512xi32>
    %42 = arith.sitofp %41 : vector<32x512xi32> to vector<32x512xf32>
    %cst_17 = arith.constant dense<0.000000e+00> : vector<2x512xf32>
    %43 = tpu.matmul %31, %42, %cst_17 {dimension_numbers = #tpu.dot_dimension_numbers<[1], [0], [0], [1], [0, 0, 1, 1], [], []>, precision = #tpu.contract_precision<fp32>} : vector<2x32xf32>, vector<32x512xf32>, vector<2x512xf32> -> vector<2x512xf32>
    %44 = arith.mulf %0, %43 : vector<2x512xf32>
    %c0_18 = arith.constant 0 : index
    %c0_19 = arith.constant 0 : index
    %45 = vector.load %arg6[%c0_18, %c0_19] : memref<2x512xf32, #tpu.memory_space<vmem>>, vector<2x512xf32>
    tpu.vector_store %arg6[%c0_18, %c0_19], %44 {strides = array<i32>} : memref<2x512xf32, #tpu.memory_space<vmem>>, vector<2x512xf32>,
    return
  }
  func.func @transform_0(%arg0: i32) -> (i32, i32) {
    %c0_i32 = arith.constant 0 : i32
    %c0_i32_0 = arith.constant 0 : i32
    return %arg0, %c0_i32 : i32, i32
  }
  func.func @transform_1(%arg0: i32) -> (i32, i32) {
    %c0_i32 = arith.constant 0 : i32
    %c0_i32_0 = arith.constant 0 : i32
    %c0_i32_1 = arith.constant 0 : i32
    return %c0_i32, %c0_i32_0 : i32, i32
  }
  func.func @transform_2(%arg0: i32) -> (i32, i32) {
    %c0_i32 = arith.constant 0 : i32
    %c0_i32_0 = arith.constant 0 : i32
    %c0_i32_1 = arith.constant 0 : i32
    return %c0_i32, %c0_i32_0 : i32, i32
  }
  func.func @transform_3(%arg0: i32) -> (i32, i32) {
    %c0_i32 = arith.constant 0 : i32
    %c0_i32_0 = arith.constant 0 : i32
    %c0_i32_1 = arith.constant 0 : i32
    return %c0_i32, %c0_i32_0 : i32, i32
  }
  func.func @transform_4(%arg0: i32) -> (i32, i32) {
    %c0_i32 = arith.constant 0 : i32
    %c0_i32_0 = arith.constant 0 : i32
    %c0_i32_1 = arith.constant 0 : i32
    return %c0_i32, %c0_i32_0 : i32, i32
  }
  func.func @transform_5(%arg0: i32) -> (i32, i32) {
    %c0_i32 = arith.constant 0 : i32
    %c0_i32_0 = arith.constant 0 : i32
    return %arg0, %c0_i32 : i32, i32
  }
}

</mosaic_0001>

<llo_original>
// kernel: tpu_custom_call.1
$region0: #{tpu_custom_call.1}
  #allocation0 [shape = 'u32[]', space=smem, size = 0x4, offset = 0x4, fixed_abs, tag = 'smem constant byte address 0x4 - core index']
  #allocation1 [shape = 'u32[144,128]{1,0:T(1,128)}', space=vmem, size = 0x12000, scoped, tag = 'internal scratch']
  %s0 = inlined_call_operand.hbm [shape: f32[2,512], index: 0, kind: input, shape index: {}]
  %s1 = inlined_call_operand.hbm [shape: f32[32,2], index: 1, kind: input, shape index: {}]
  %s2 = inlined_call_operand.hbm [shape: f32[1,2], index: 2, kind: input, shape index: {}]
  %s3 = inlined_call_operand.hbm [shape: f32[2,32], index: 3, kind: input, shape index: {}]
  %s4 = inlined_call_operand.hbm [shape: f32[1,32], index: 4, kind: input, shape index: {}]
  %s5 = inlined_call_operand.hbm [shape: f32[2,512], index: 5, kind: output, shape index: {}]
  %s6 = sld [smem:[#allocation0]]
  $region50: #{tpu_custom_call.1} parent=0
    _
  %s8 = ssub.s32 1, %s6
  %s9 = scalar_select 0, %s8, %s6
  $region1: #{tpu_custom_call.1} parent=0
    #allocation2 [shape = 'u8[4096]{0}', space=vmem, size = 0x1000, scoped, tag = 'input window, operand 0, single buffered']
    #allocation3 [shape = 's32[1]{0}', space=sflag, size = 0x4, scoped, tag = 'scoped memory for tpu_custom_call.1']
    #allocation4 [shape = 's32[1]{0}', space=sflag, size = 0x4, scoped, tag = 'scoped memory for tpu_custom_call.1']
    #allocation5 [shape = 'u8[16384]{0}', space=vmem, size = 0x4000, scoped, tag = 'input window, operand 1, single buffered']
    #allocation6 [shape = 's32[1]{0}', space=sflag, size = 0x4, scoped, tag = 'scoped memory for tpu_custom_call.1']
    #allocation7 [shape = 'u8[512]{0}', space=vmem, size = 0x400, scoped, tag = 'input window, operand 2, single buffered']
    #allocation8 [shape = 'u8[1024]{0}', space=vmem, size = 0x400, scoped, tag = 'input window, operand 3, single buffered']
    #allocation9 [shape = 's32[1]{0}', space=sflag, size = 0x4, scoped, tag = 'scoped memory for tpu_custom_call.1']
    #allocation10 [shape = 'u8[512]{0}', space=vmem, size = 0x400, scoped, tag = 'input window, operand 4, single buffered']
    #allocation11 [shape = 'u8[4096]{0}', space=vmem, size = 0x1000, scoped, tag = 'output window, operand 0, single buffered']
    %10 = vsyncpa [#allocation3], 0
    %11 = vsyncpa [#allocation6], 0
    %12 = vsyncpa [#allocation9], 0
    %13 = vsyncpa [#allocation4], 0
    // Predicated region
    $region2: #{tpu_custom_call.1} parent=1 // pred_check
      _
    $region3: #{tpu_custom_call.1} parent=1 // pred_check_branch
      %15 = sbr.rel (0) target = $region5
    $region4: #{tpu_custom_call.1} parent=1 // pred_region
      %s17 = ssub.s32 128, 128
      %18 = vsyncadd [#allocation3], %s17
      %s20 = sshll.u32 [#allocation2], 4
      %s21 = int_to_ptr.vmem [resolvable:$true] %s20
      %23 = dma.hbm_to_vmem [thread:$0]  %s0, 128, %s21, [#allocation3]
    $region5: #{tpu_custom_call.1} parent=1 // pred_fallthru
      _
    // Predicated region
    $region6: #{tpu_custom_call.1} parent=1 // pred_check
      _
    $region7: #{tpu_custom_call.1} parent=1 // pred_check_branch
      %25 = sbr.rel (0) target = $region9
    $region8: #{tpu_custom_call.1} parent=1 // pred_region
      %s27 = ssub.s32 512, 512
      %28 = vsyncadd [#allocation6], %s27
      %s29 = sshll.u32 [#allocation5], 4
      %s30 = int_to_ptr.vmem [resolvable:$true] %s29
      %35 = dma.hbm_to_vmem [thread:$0]  %s1, 512, %s30, [#allocation6], 128, 128, 8
    $region9: #{tpu_custom_call.1} parent=1 // pred_fallthru
      _
    // Predicated region
    $region10: #{tpu_custom_call.1} parent=1 // pred_check
      _
    $region11: #{tpu_custom_call.1} parent=1 // pred_check_branch
      %37 = sbr.rel (0) target = $region13
    $region12: #{tpu_custom_call.1} parent=1 // pred_region
      %s39 = ssub.s32 16, 16
      %40 = vsyncadd [#allocation6], %s39
      %s42 = sshll.u32 [#allocation7], 4
      %s43 = int_to_ptr.vmem [resolvable:$true] %s42
      %45 = dma.hbm_to_vmem [thread:$0]  %s2, 16, %s43, [#allocation6]
    $region13: #{tpu_custom_call.1} parent=1 // pred_fallthru
      _
    // Predicated region
    $region14: #{tpu_custom_call.1} parent=1 // pred_check
      _
    $region15: #{tpu_custom_call.1} parent=1 // pred_check_branch
      %47 = sbr.rel (0) target = $region17
    $region16: #{tpu_custom_call.1} parent=1 // pred_region
      %s49 = ssub.s32 32, 32
      %50 = vsyncadd [#allocation9], %s49
      %s52 = sshll.u32 [#allocation8], 4
      %s53 = int_to_ptr.vmem [resolvable:$true] %s52
      %55 = dma.hbm_to_vmem [thread:$0]  %s3, 32, %s53, [#allocation9]
    $region17: #{tpu_custom_call.1} parent=1 // pred_fallthru
      _
    // Predicated region
    $region18: #{tpu_custom_call.1} parent=1 // pred_check
      _
    $region19: #{tpu_custom_call.1} parent=1 // pred_check_branch
      %57 = sbr.rel (0) target = $region21
    $region20: #{tpu_custom_call.1} parent=1 // pred_region
      %s59 = ssub.s32 16, 16
      %60 = vsyncadd [#allocation9], %s59
      %s62 = sshll.u32 [#allocation10], 4
      %s63 = int_to_ptr.vmem [resolvable:$true] %s62
      %65 = dma.hbm_to_vmem [thread:$0]  %s4, 16, %s63, [#allocation9]
    $region21: #{tpu_custom_call.1} parent=1 // pred_fallthru
      _
    // Predicated region
    $region22: #{tpu_custom_call.1} parent=1 // pred_check
      _
    $region23: #{tpu_custom_call.1} parent=1 // pred_check_branch
      %67 = sbr.rel (0) target = $region25
    $region24: #{tpu_custom_call.1} parent=1 // pred_region
      %68 = dma.done [#allocation3], 128
    $region25: #{tpu_custom_call.1} parent=1 // pred_fallthru
      _
    // Predicated region
    $region26: #{tpu_custom_call.1} parent=1 // pred_check
      _
    $region27: #{tpu_custom_call.1} parent=1 // pred_check_branch
      %70 = sbr.rel (0) target = $region29
    $region28: #{tpu_custom_call.1} parent=1 // pred_region
      %71 = dma.done [#allocation6], 512
    $region29: #{tpu_custom_call.1} parent=1 // pred_fallthru
      _
    // Predicated region
    $region30: #{tpu_custom_call.1} parent=1 // pred_check
      _
    $region31: #{tpu_custom_call.1} parent=1 // pred_check_branch
      %73 = sbr.rel (0) target = $region33
    $region32: #{tpu_custom_call.1} parent=1 // pred_region
      %74 = dma.done [#allocation6], 16
    $region33: #{tpu_custom_call.1} parent=1 // pred_fallthru
      _
    // Predicated region
    $region34: #{tpu_custom_call.1} parent=1 // pred_check
      _
    $region35: #{tpu_custom_call.1} parent=1 // pred_check_branch
      %76 = sbr.rel (0) target = $region37
    $region36: #{tpu_custom_call.1} parent=1 // pred_region
      %77 = dma.done [#allocation9], 32
    $region37: #{tpu_custom_call.1} parent=1 // pred_fallthru
      _
    // Predicated region
    $region38: #{tpu_custom_call.1} parent=1 // pred_check
      _
    $region39: #{tpu_custom_call.1} parent=1 // pred_check_branch
      %79 = sbr.rel (0) target = $region41
    $region40: #{tpu_custom_call.1} parent=1 // pred_region
      %80 = dma.done [#allocation9], 16
    $region41: #{tpu_custom_call.1} parent=1 // pred_fallthru
      _
    %v81 = vld [vmem:[#allocation2] sm:$0xff]
    %v82 = vlaneseq
    %v83 = vshrl.u32 %v82, 7
    %v84 = vadd.s32 %v83, 8
    %v85 = vadd.s32 %v83, 16
    %v86 = vadd.s32 %v83, 24
    %v87 = vadd.s32 %v83, 32
    %v88 = vadd.s32 %v83, 40
    %v89 = vadd.s32 %v83, 48
    %v90 = vadd.s32 %v83, 56
    %v91 = vadd.s32 %v83, 64
    %v92 = vadd.s32 %v83, 72
    %v93 = vadd.s32 %v83, 80
    %v94 = vadd.s32 %v83, 88
    %v95 = vadd.s32 %v83, 96
    %v96 = vadd.s32 %v83, 104
    %v97 = vadd.s32 %v83, 112
    %v98 = vadd.s32 %v83, 120
    %v99 = vadd.s32 %v83, 128
    %v100 = vadd.s32 %v83, 136
    %v101 = vadd.s32 %v83, 144
    %v102 = vadd.s32 %v83, 152
    %v103 = vadd.s32 %v83, 160
    %v104 = vadd.s32 %v83, 168
    %v105 = vadd.s32 %v83, 176
    %v106 = vadd.s32 %v83, 184
    %v107 = vadd.s32 %v83, 192
    %v108 = vadd.s32 %v83, 200
    %v109 = vadd.s32 %v83, 208
    %v110 = vadd.s32 %v83, 216
    %v111 = vadd.s32 %v83, 224
    %v112 = vadd.s32 %v83, 232
    %v113 = vadd.s32 %v83, 240
    %v114 = vadd.s32 %v83, 248
    %v115 = vadd.s32 %v83, 256
    %v116 = vadd.s32 %v83, 264
    %v117 = vadd.s32 %v83, 272
    %v118 = vadd.s32 %v83, 280
    %v119 = vadd.s32 %v83, 288
    %v120 = vadd.s32 %v83, 296
    %v121 = vadd.s32 %v83, 304
    %v122 = vadd.s32 %v83, 312
    %v123 = vadd.s32 %v83, 320
    %v124 = vadd.s32 %v83, 328
    %v125 = vadd.s32 %v83, 336
    %v126 = vadd.s32 %v83, 344
    %v127 = vadd.s32 %v83, 352
    %v128 = vadd.s32 %v83, 360
    %v129 = vadd.s32 %v83, 368
    %v130 = vadd.s32 %v83, 376
    %v131 = vadd.s32 %v83, 384
    %v132 = vadd.s32 %v83, 392
    %v133 = vadd.s32 %v83, 400
    %v134 = vadd.s32 %v83, 408
    %v135 = vadd.s32 %v83, 416
    %v136 = vadd.s32 %v83, 424
    %v137 = vadd.s32 %v83, 432
    %v138 = vadd.s32 %v83, 440
    %v139 = vadd.s32 %v83, 448
    %v140 = vadd.s32 %v83, 456
    %v141 = vadd.s32 %v83, 464
    %v142 = vadd.s32 %v83, 472
    %v143 = vadd.s32 %v83, 480
    %v144 = vadd.s32 %v83, 488
    %v145 = vadd.s32 %v83, 496
    %v146 = vadd.s32 %v83, 504
    %v147 = vlaneseq
    %v148 = vand.u32 %v147, 127
    %v149 = vmul.u32 %v148, 16
    %vm150 = vcmp.ge.s32.totalorder %v83, %v149
    %vm151 = vcmp.ge.s32.totalorder %v84, %v149
    %vm152 = vcmp.ge.s32.totalorder %v85, %v149
    %vm153 = vcmp.ge.s32.totalorder %v86, %v149
    %vm154 = vcmp.ge.s32.totalorder %v87, %v149
    %vm155 = vcmp.ge.s32.totalorder %v88, %v149
    %vm156 = vcmp.ge.s32.totalorder %v89, %v149
    %vm157 = vcmp.ge.s32.totalorder %v90, %v149
    %vm158 = vcmp.ge.s32.totalorder %v91, %v149
    %vm159 = vcmp.ge.s32.totalorder %v92, %v149
    %vm160 = vcmp.ge.s32.totalorder %v93, %v149
    %vm161 = vcmp.ge.s32.totalorder %v94, %v149
    %vm162 = vcmp.ge.s32.totalorder %v95, %v149
    %vm163 = vcmp.ge.s32.totalorder %v96, %v149
    %vm164 = vcmp.ge.s32.totalorder %v97, %v149
    %vm165 = vcmp.ge.s32.totalorder %v98, %v149
    %vm166 = vcmp.ge.s32.totalorder %v99, %v149
    %vm167 = vcmp.ge.s32.totalorder %v100, %v149
    %vm168 = vcmp.ge.s32.totalorder %v101, %v149
    %vm169 = vcmp.ge.s32.totalorder %v102, %v149
    %vm170 = vcmp.ge.s32.totalorder %v103, %v149
    %vm171 = vcmp.ge.s32.totalorder %v104, %v149
    %vm172 = vcmp.ge.s32.totalorder %v105, %v149
    %vm173 = vcmp.ge.s32.totalorder %v106, %v149
    %vm174 = vcmp.ge.s32.totalorder %v107, %v149
    %vm175 = vcmp.ge.s32.totalorder %v108, %v149
    %vm176 = vcmp.ge.s32.totalorder %v109, %v149
    %vm177 = vcmp.ge.s32.totalorder %v110, %v149
    %vm178 = vcmp.ge.s32.totalorder %v111, %v149
    %vm179 = vcmp.ge.s32.totalorder %v112, %v149
    %vm180 = vcmp.ge.s32.totalorder %v113, %v149
    %vm181 = vcmp.ge.s32.totalorder %v114, %v149
    %vm182 = vcmp.ge.s32.totalorder %v115, %v149
    %vm183 = vcmp.ge.s32.totalorder %v116, %v149
    %vm184 = vcmp.ge.s32.totalorder %v117, %v149
    %vm185 = vcmp.ge.s32.totalorder %v118, %v149
    %vm186 = vcmp.ge.s32.totalorder %v119, %v149
    %vm187 = vcmp.ge.s32.totalorder %v120, %v149
    %vm188 = vcmp.ge.s32.totalorder %v121, %v149
    %vm189 = vcmp.ge.s32.totalorder %v122, %v149
    %vm190 = vcmp.ge.s32.totalorder %v123, %v149
    %vm191 = vcmp.ge.s32.totalorder %v124, %v149
    %vm192 = vcmp.ge.s32.totalorder %v125, %v149
    %vm193 = vcmp.ge.s32.totalorder %v126, %v149
    %vm194 = vcmp.ge.s32.totalorder %v127, %v149
    %vm195 = vcmp.ge.s32.totalorder %v128, %v149
    %vm196 = vcmp.ge.s32.totalorder %v129, %v149
    %vm197 = vcmp.ge.s32.totalorder %v130, %v149
    %vm198 = vcmp.ge.s32.totalorder %v131, %v149
    %vm199 = vcmp.ge.s32.totalorder %v132, %v149
    %vm200 = vcmp.ge.s32.totalorder %v133, %v149
    %vm201 = vcmp.ge.s32.totalorder %v134, %v149
    %vm202 = vcmp.ge.s32.totalorder %v135, %v149
    %vm203 = vcmp.ge.s32.totalorder %v136, %v149
    %vm204 = vcmp.ge.s32.totalorder %v137, %v149
    %vm205 = vcmp.ge.s32.totalorder %v138, %v149
    %vm206 = vcmp.ge.s32.totalorder %v139, %v149
    %vm207 = vcmp.ge.s32.totalorder %v140, %v149
    %vm208 = vcmp.ge.s32.totalorder %v141, %v149
    %vm209 = vcmp.ge.s32.totalorder %v142, %v149
    %vm210 = vcmp.ge.s32.totalorder %v143, %v149
    %vm211 = vcmp.ge.s32.totalorder %v144, %v149
    %vm212 = vcmp.ge.s32.totalorder %v145, %v149
    %vm213 = vcmp.ge.s32.totalorder %v146, %v149
    %v214 = vadd.s32 %v149, 16
    %vm215 = vcmp.lt.s32.totalorder %v83, %v214
    %vm216 = vcmp.lt.s32.totalorder %v84, %v214
    %vm217 = vcmp.lt.s32.totalorder %v85, %v214
    %vm218 = vcmp.lt.s32.totalorder %v86, %v214
    %vm219 = vcmp.lt.s32.totalorder %v87, %v214
    %vm220 = vcmp.lt.s32.totalorder %v88, %v214
    %vm221 = vcmp.lt.s32.totalorder %v89, %v214
    %vm222 = vcmp.lt.s32.totalorder %v90, %v214
    %vm223 = vcmp.lt.s32.totalorder %v91, %v214
    %vm224 = vcmp.lt.s32.totalorder %v92, %v214
    %vm225 = vcmp.lt.s32.totalorder %v93, %v214
    %vm226 = vcmp.lt.s32.totalorder %v94, %v214
    %vm227 = vcmp.lt.s32.totalorder %v95, %v214
    %vm228 = vcmp.lt.s32.totalorder %v96, %v214
    %vm229 = vcmp.lt.s32.totalorder %v97, %v214
    %vm230 = vcmp.lt.s32.totalorder %v98, %v214
    %vm231 = vcmp.lt.s32.totalorder %v99, %v214
    %vm232 = vcmp.lt.s32.totalorder %v100, %v214
    %vm233 = vcmp.lt.s32.totalorder %v101, %v214
    %vm234 = vcmp.lt.s32.totalorder %v102, %v214
    %vm235 = vcmp.lt.s32.totalorder %v103, %v214
    %vm236 = vcmp.lt.s32.totalorder %v104, %v214
    %vm237 = vcmp.lt.s32.totalorder %v105, %v214
    %vm238 = vcmp.lt.s32.totalorder %v106, %v214
    %vm239 = vcmp.lt.s32.totalorder %v107, %v214
    %vm240 = vcmp.lt.s32.totalorder %v108, %v214
    %vm241 = vcmp.lt.s32.totalorder %v109, %v214
    %vm242 = vcmp.lt.s32.totalorder %v110, %v214
    %vm243 = vcmp.lt.s32.totalorder %v111, %v214
    %vm244 = vcmp.lt.s32.totalorder %v112, %v214
    %vm245 = vcmp.lt.s32.totalorder %v113, %v214
    %vm246 = vcmp.lt.s32.totalorder %v114, %v214
    %vm247 = vcmp.lt.s32.totalorder %v115, %v214
    %vm248 = vcmp.lt.s32.totalorder %v116, %v214
    %vm249 = vcmp.lt.s32.totalorder %v117, %v214
    %vm250 = vcmp.lt.s32.totalorder %v118, %v214
    %vm251 = vcmp.lt.s32.totalorder %v119, %v214
    %vm252 = vcmp.lt.s32.totalorder %v120, %v214
    %vm253 = vcmp.lt.s32.totalorder %v121, %v214
    %vm254 = vcmp.lt.s32.totalorder %v122, %v214
    %vm255 = vcmp.lt.s32.totalorder %v123, %v214
    %vm256 = vcmp.lt.s32.totalorder %v124, %v214
    %vm257 = vcmp.lt.s32.totalorder %v125, %v214
    %vm258 = vcmp.lt.s32.totalorder %v126, %v214
    %vm259 = vcmp.lt.s32.totalorder %v127, %v214
    %vm260 = vcmp.lt.s32.totalorder %v128, %v214
    %vm261 = vcmp.lt.s32.totalorder %v129, %v214
    %vm262 = vcmp.lt.s32.totalorder %v130, %v214
    %vm263 = vcmp.lt.s32.totalorder %v131, %v214
    %vm264 = vcmp.lt.s32.totalorder %v132, %v214
    %vm265 = vcmp.lt.s32.totalorder %v133, %v214
    %vm266 = vcmp.lt.s32.totalorder %v134, %v214
    %vm267 = vcmp.lt.s32.totalorder %v135, %v214
    %vm268 = vcmp.lt.s32.totalorder %v136, %v214
    %vm269 = vcmp.lt.s32.totalorder %v137, %v214
    %vm270 = vcmp.lt.s32.totalorder %v138, %v214
    %vm271 = vcmp.lt.s32.totalorder %v139, %v214
    %vm272 = vcmp.lt.s32.totalorder %v140, %v214
    %vm273 = vcmp.lt.s32.totalorder %v141, %v214
    %vm274 = vcmp.lt.s32.totalorder %v142, %v214
    %vm275 = vcmp.lt.s32.totalorder %v143, %v214
    %vm276 = vcmp.lt.s32.totalorder %v144, %v214
    %vm277 = vcmp.lt.s32.totalorder %v145, %v214
    %vm278 = vcmp.lt.s32.totalorder %v146, %v214
    %vm279 = vmand %vm150, %vm215
    %vm280 = vmand %vm151, %vm216
    %vm281 = vmand %vm152, %vm217
    %vm282 = vmand %vm153, %vm218
    %vm283 = vmand %vm154, %vm219
    %vm284 = vmand %vm155, %vm220
    %vm285 = vmand %vm156, %vm221
    %vm286 = vmand %vm157, %vm222
    %vm287 = vmand %vm158, %vm223
    %vm288 = vmand %vm159, %vm224
    %vm289 = vmand %vm160, %vm225
    %vm290 = vmand %vm161, %vm226
    %vm291 = vmand %vm162, %vm227
    %vm292 = vmand %vm163, %vm228
    %vm293 = vmand %vm164, %vm229
    %vm294 = vmand %vm165, %vm230
    %vm295 = vmand %vm166, %vm231
    %vm296 = vmand %vm167, %vm232
    %vm297 = vmand %vm168, %vm233
    %vm298 = vmand %vm169, %vm234
    %vm299 = vmand %vm170, %vm235
    %vm300 = vmand %vm171, %vm236
    %vm301 = vmand %vm172, %vm237
    %vm302 = vmand %vm173, %vm238
    %vm303 = vmand %vm174, %vm239
    %vm304 = vmand %vm175, %vm240
    %vm305 = vmand %vm176, %vm241
    %vm306 = vmand %vm177, %vm242
    %vm307 = vmand %vm178, %vm243
    %vm308 = vmand %vm179, %vm244
    %vm309 = vmand %vm180, %vm245
    %vm310 = vmand %vm181, %vm246
    %vm311 = vmand %vm182, %vm247
    %vm312 = vmand %vm183, %vm248
    %vm313 = vmand %vm184, %vm249
    %vm314 = vmand %vm185, %vm250
    %vm315 = vmand %vm186, %vm251
    %vm316 = vmand %vm187, %vm252
    %vm317 = vmand %vm188, %vm253
    %vm318 = vmand %vm189, %vm254
    %vm319 = vmand %vm190, %vm255
    %vm320 = vmand %vm191, %vm256
    %vm321 = vmand %vm192, %vm257
    %vm322 = vmand %vm193, %vm258
    %vm323 = vmand %vm194, %vm259
    %vm324 = vmand %vm195, %vm260
    %vm325 = vmand %vm196, %vm261
    %vm326 = vmand %vm197, %vm262
    %vm327 = vmand %vm198, %vm263
    %vm328 = vmand %vm199, %vm264
    %vm329 = vmand %vm200, %vm265
    %vm330 = vmand %vm201, %vm266
    %vm331 = vmand %vm202, %vm267
    %vm332 = vmand %vm203, %vm268
    %vm333 = vmand %vm204, %vm269
    %vm334 = vmand %vm205, %vm270
    %vm335 = vmand %vm206, %vm271
    %vm336 = vmand %vm207, %vm272
    %vm337 = vmand %vm208, %vm273
    %vm338 = vmand %vm209, %vm274
    %vm339 = vmand %vm210, %vm275
    %vm340 = vmand %vm211, %vm276
    %vm341 = vmand %vm212, %vm277
    %vm342 = vmand %vm213, %vm278
    %v343 = vsel %vm279, 1, 0
    %v344 = vsel %vm280, 1, 0
    %v345 = vsel %vm281, 1, 0
    %v346 = vsel %vm282, 1, 0
    %v347 = vsel %vm283, 1, 0
    %v348 = vsel %vm284, 1, 0
    %v349 = vsel %vm285, 1, 0
    %v350 = vsel %vm286, 1, 0
    %v351 = vsel %vm287, 1, 0
    %v352 = vsel %vm288, 1, 0
    %v353 = vsel %vm289, 1, 0
    %v354 = vsel %vm290, 1, 0
    %v355 = vsel %vm291, 1, 0
    %v356 = vsel %vm292, 1, 0
    %v357 = vsel %vm293, 1, 0
    %v358 = vsel %vm294, 1, 0
    %v359 = vsel %vm295, 1, 0
    %v360 = vsel %vm296, 1, 0
    %v361 = vsel %vm297, 1, 0
    %v362 = vsel %vm298, 1, 0
    %v363 = vsel %vm299, 1, 0
    %v364 = vsel %vm300, 1, 0
    %v365 = vsel %vm301, 1, 0
    %v366 = vsel %vm302, 1, 0
    %v367 = vsel %vm303, 1, 0
    %v368 = vsel %vm304, 1, 0
    %v369 = vsel %vm305, 1, 0
    %v370 = vsel %vm306, 1, 0
    %v371 = vsel %vm307, 1, 0
    %v372 = vsel %vm308, 1, 0
    %v373 = vsel %vm309, 1, 0
    %v374 = vsel %vm310, 1, 0
    %v375 = vsel %vm311, 1, 0
    %v376 = vsel %vm312, 1, 0
    %v377 = vsel %vm313, 1, 0
    %v378 = vsel %vm314, 1, 0
    %v379 = vsel %vm315, 1, 0
    %v380 = vsel %vm316, 1, 0
    %v381 = vsel %vm317, 1, 0
    %v382 = vsel %vm318, 1, 0
    %v383 = vsel %vm319, 1, 0
    %v384 = vsel %vm320, 1, 0
    %v385 = vsel %vm321, 1, 0
    %v386 = vsel %vm322, 1, 0
    %v387 = vsel %vm323, 1, 0
    %v388 = vsel %vm324, 1, 0
    %v389 = vsel %vm325, 1, 0
    %v390 = vsel %vm326, 1, 0
    %v391 = vsel %vm327, 1, 0
    %v392 = vsel %vm328, 1, 0
    %v393 = vsel %vm329, 1, 0
    %v394 = vsel %vm330, 1, 0
    %v395 = vsel %vm331, 1, 0
    %v396 = vsel %vm332, 1, 0
    %v397 = vsel %vm333, 1, 0
    %v398 = vsel %vm334, 1, 0
    %v399 = vsel %vm335, 1, 0
    %v400 = vsel %vm336, 1, 0
    %v401 = vsel %vm337, 1, 0
    %v402 = vsel %vm338, 1, 0
    %v403 = vsel %vm339, 1, 0
    %v404 = vsel %vm340, 1, 0
    %v405 = vsel %vm341, 1, 0
    %v406 = vsel %vm342, 1, 0
    %v407 = vcvt.s32.f32 %v343
    %v408 = vcvt.s32.f32 %v344
    %v409 = vcvt.s32.f32 %v345
    %v410 = vcvt.s32.f32 %v346
    %v411 = vcvt.s32.f32 %v347
    %v412 = vcvt.s32.f32 %v348
    %v413 = vcvt.s32.f32 %v349
    %v414 = vcvt.s32.f32 %v350
    %v415 = vcvt.s32.f32 %v351
    %v416 = vcvt.s32.f32 %v352
    %v417 = vcvt.s32.f32 %v353
    %v418 = vcvt.s32.f32 %v354
    %v419 = vcvt.s32.f32 %v355
    %v420 = vcvt.s32.f32 %v356
    %v421 = vcvt.s32.f32 %v357
    %v422 = vcvt.s32.f32 %v358
    %v423 = vcvt.s32.f32 %v359
    %v424 = vcvt.s32.f32 %v360
    %v425 = vcvt.s32.f32 %v361
    %v426 = vcvt.s32.f32 %v362
    %v427 = vcvt.s32.f32 %v363
    %v428 = vcvt.s32.f32 %v364
    %v429 = vcvt.s32.f32 %v365
    %v430 = vcvt.s32.f32 %v366
    %v431 = vcvt.s32.f32 %v367
    %v432 = vcvt.s32.f32 %v368
    %v433 = vcvt.s32.f32 %v369
    %v434 = vcvt.s32.f32 %v370
    %v435 = vcvt.s32.f32 %v371
    %v436 = vcvt.s32.f32 %v372
    %v437 = vcvt.s32.f32 %v373
    %v438 = vcvt.s32.f32 %v374
    %v439 = vcvt.s32.f32 %v375
    %v440 = vcvt.s32.f32 %v376
    %v441 = vcvt.s32.f32 %v377
    %v442 = vcvt.s32.f32 %v378
    %v443 = vcvt.s32.f32 %v379
    %v444 = vcvt.s32.f32 %v380
    %v445 = vcvt.s32.f32 %v381
    %v446 = vcvt.s32.f32 %v382
    %v447 = vcvt.s32.f32 %v383
    %v448 = vcvt.s32.f32 %v384
    %v449 = vcvt.s32.f32 %v385
    %v450 = vcvt.s32.f32 %v386
    %v451 = vcvt.s32.f32 %v387
    %v452 = vcvt.s32.f32 %v388
    %v453 = vcvt.s32.f32 %v389
    %v454 = vcvt.s32.f32 %v390
    %v455 = vcvt.s32.f32 %v391
    %v456 = vcvt.s32.f32 %v392
    %v457 = vcvt.s32.f32 %v393
    %v458 = vcvt.s32.f32 %v394
    %v459 = vcvt.s32.f32 %v395
    %v460 = vcvt.s32.f32 %v396
    %v461 = vcvt.s32.f32 %v397
    %v462 = vcvt.s32.f32 %v398
    %v463 = vcvt.s32.f32 %v399
    %v464 = vcvt.s32.f32 %v400
    %v465 = vcvt.s32.f32 %v401
    %v466 = vcvt.s32.f32 %v402
    %v467 = vcvt.s32.f32 %v403
    %v468 = vcvt.s32.f32 %v404
    %v469 = vcvt.s32.f32 %v405
    %v470 = vcvt.s32.f32 %v406
    %v472 = vcombine.high %v81, %v81
    %v474 = vunpack.c.l.s4 1983009808
    %v475 = vunpack.c.0.s8 %v474
    %v476 = vlaneseq
    %v477 = vshrl.u32 %v476, 7
    %v478 = vsub.s32 %v475, %v477
    %v479 = vrot.slane %v81, %v478
    %v481 = vunpack.c.l.s4 1983009808
    %v482 = vunpack.c.0.s8 %v481
    %v483 = vlaneseq
    %v484 = vshrl.u32 %v483, 7
    %v485 = vsub.s32 %v482, %v484
    %v486 = vrot.slane %v472, %v485
    %v487 = vcombine.high %v479, %v479
    %v488 = vcombine.high %v486, %v486
    %493 = vmatprep.subr.mxu0 0.0
    %v494 = vand.u32 %v407, 4294901760
    %495 = vmatpush1.msra.mxu0 %v494
    %496 = vmatprep.subr.mxu0 0.0
    %v497 = vand.u32 %v408, 4294901760
    %498 = vmatpush1.msra.mxu0 %v497
    %499 = vmatprep.subr.mxu0 0.0
    %v500 = vand.u32 %v409, 4294901760
    %501 = vmatpush1.msra.mxu0 %v500
    %502 = vmatprep.subr.mxu0 0.0
    %v503 = vand.u32 %v410, 4294901760
    %504 = vmatpush1.msra.mxu0 %v503
    %505 = vmatprep.subr.mxu0 0.0
    %v506 = vand.u32 %v411, 4294901760
    %507 = vmatpush1.msra.mxu0 %v506
    %508 = vmatprep.subr.mxu0 0.0
    %v509 = vand.u32 %v412, 4294901760
    %510 = vmatpush1.msra.mxu0 %v509
    %511 = vmatprep.subr.mxu0 0.0
    %v512 = vand.u32 %v413, 4294901760
    %513 = vmatpush1.msra.mxu0 %v512
    %514 = vmatprep.subr.mxu0 0.0
    %v515 = vand.u32 %v414, 4294901760
    %516 = vmatpush1.msra.mxu0 %v515
    %517 = vmatprep.subr.mxu0 0.0
    %v518 = vand.u32 %v415, 4294901760
    %519 = vmatpush1.msra.mxu0 %v518
    %520 = vmatprep.subr.mxu0 0.0
    %v521 = vand.u32 %v416, 4294901760
    %522 = vmatpush1.msra.mxu0 %v521
    %523 = vmatprep.subr.mxu0 0.0
    %v524 = vand.u32 %v417, 4294901760
    %525 = vmatpush1.msra.mxu0 %v524
    %526 = vmatprep.subr.mxu0 0.0
    %v527 = vand.u32 %v418, 4294901760
    %528 = vmatpush1.msra.mxu0 %v527
    %529 = vmatprep.subr.mxu0 0.0
    %v530 = vand.u32 %v419, 4294901760
    %531 = vmatpush1.msra.mxu0 %v530
    %532 = vmatprep.subr.mxu0 0.0
    %v533 = vand.u32 %v420, 4294901760
    %534 = vmatpush1.msra.mxu0 %v533
    %535 = vmatprep.subr.mxu0 0.0
    %v536 = vand.u32 %v421, 4294901760
    %537 = vmatpush1.msra.mxu0 %v536
    %538 = vmatprep.subr.mxu0 0.0
    %v539 = vand.u32 %v422, 4294901760
    %540 = vmatpush1.msra.mxu0 %v539
    %541 = vmatprep.subr.mxu0 0.0
    %v542 = vand.u32 %v423, 4294901760
    %543 = vmatpush1.msra.mxu0 %v542
    %544 = vmatprep.subr.mxu0 0.0
    %v545 = vand.u32 %v424, 4294901760
    %546 = vmatpush1.msra.mxu0 %v545
    %547 = vmatprep.subr.mxu0 0.0
    %v548 = vand.u32 %v425, 4294901760
    %549 = vmatpush1.msra.mxu0 %v548
    %550 = vmatprep.subr.mxu0 0.0
    %v551 = vand.u32 %v426, 4294901760
    %552 = vmatpush1.msra.mxu0 %v551
    %553 = vmatprep.subr.mxu0 0.0
    %v554 = vand.u32 %v427, 4294901760
    %555 = vmatpush1.msra.mxu0 %v554
    %556 = vmatprep.subr.mxu0 0.0
    %v557 = vand.u32 %v428, 4294901760
    %558 = vmatpush1.msra.mxu0 %v557
    %559 = vmatprep.subr.mxu0 0.0
    %v560 = vand.u32 %v429, 4294901760
    %561 = vmatpush1.msra.mxu0 %v560
    %562 = vmatprep.subr.mxu0 0.0
    %v563 = vand.u32 %v430, 4294901760
    %564 = vmatpush1.msra.mxu0 %v563
    %565 = vmatprep.subr.mxu0 0.0
    %v566 = vand.u32 %v431, 4294901760
    %567 = vmatpush1.msra.mxu0 %v566
    %568 = vmatprep.subr.mxu0 0.0
    %v569 = vand.u32 %v432, 4294901760
    %570 = vmatpush1.msra.mxu0 %v569
    %571 = vmatprep.subr.mxu0 0.0
    %v572 = vand.u32 %v433, 4294901760
    %573 = vmatpush1.msra.mxu0 %v572
    %574 = vmatprep.subr.mxu0 0.0
    %v575 = vand.u32 %v434, 4294901760
    %576 = vmatpush1.msra.mxu0 %v575
    %577 = vmatprep.subr.mxu0 0.0
    %v578 = vand.u32 %v435, 4294901760
    %579 = vmatpush1.msra.mxu0 %v578
    %580 = vmatprep.subr.mxu0 0.0
    %v581 = vand.u32 %v436, 4294901760
    %582 = vmatpush1.msra.mxu0 %v581
    %583 = vmatprep.subr.mxu0 0.0
    %v584 = vand.u32 %v437, 4294901760
    %585 = vmatpush1.msra.mxu0 %v584
    %586 = vmatprep.subr.mxu0 0.0
    %v587 = vand.u32 %v438, 4294901760
    %588 = vmatpush1.msra.mxu0 %v587
    %v589 = vand.u32 %v487, 4294901760
    %v590 = vsub.f32 %v487, %v589
    %v591 = vand.u32 %v590, 4294901760
    %v592 = vsub.f32 %v590, %v591
    %v593 = vand.u32 %v592, 4294901760
    %594 = vmatprep.mubr.f32.mxu0 %v593
    %v595 = vand.u32 %v479, 4294901760
    %v596 = vsub.f32 %v479, %v595
    %v597 = vand.u32 %v596, 4294901760
    %v598 = vsub.f32 %v596, %v597
    %v599 = vand.u32 %v598, 4294901760
    %600 = vmatmul.mubr.f32.gmra.mrb[0].mxu0 %v599
    %v601 = vpop.f32.mrb[0].mxu0
    %v602 = vadd.f32 0.0, %v601
    %v603 = vpop.f32.mrb[0].mxu0
    %604 = vdwg.mxu0
    %605 = vmatprep.subr.mxu0 0.0
    %v606 = vand.u32 %v407, 4294901760
    %v607 = vsub.f32 %v407, %v606
    %v608 = vand.u32 %v607, 4294901760
    %v609 = vsub.f32 %v607, %v608
    %v610 = vand.u32 %v609, 4294901760
    %611 = vmatpush1.msra.mxu0 %v610
    %612 = vmatprep.subr.mxu0 0.0
    %v613 = vand.u32 %v408, 4294901760
    %v614 = vsub.f32 %v408, %v613
    %v615 = vand.u32 %v614, 4294901760
    %v616 = vsub.f32 %v614, %v615
    %v617 = vand.u32 %v616, 4294901760
    %618 = vmatpush1.msra.mxu0 %v617
    %619 = vmatprep.subr.mxu0 0.0
    %v620 = vand.u32 %v409, 4294901760
    %v621 = vsub.f32 %v409, %v620
    %v622 = vand.u32 %v621, 4294901760
    %v623 = vsub.f32 %v621, %v622
    %v624 = vand.u32 %v623, 4294901760
    %625 = vmatpush1.msra.mxu0 %v624
    %626 = vmatprep.subr.mxu0 0.0
    %v627 = vand.u32 %v410, 4294901760
    %v628 = vsub.f32 %v410, %v627
    %v629 = vand.u32 %v628, 4294901760
    %v630 = vsub.f32 %v628, %v629
    %v631 = vand.u32 %v630, 4294901760
    %632 = vmatpush1.msra.mxu0 %v631
    %633 = vmatprep.subr.mxu0 0.0
    %v634 = vand.u32 %v411, 4294901760
    %v635 = vsub.f32 %v411, %v634
    %v636 = vand.u32 %v635, 4294901760
    %v637 = vsub.f32 %v635, %v636
    %v638 = vand.u32 %v637, 4294901760
    %639 = vmatpush1.msra.mxu0 %v638
    %640 = vmatprep.subr.mxu0 0.0
    %v641 = vand.u32 %v412, 4294901760
    %v642 = vsub.f32 %v412, %v641
    %v643 = vand.u32 %v642, 4294901760
    %v644 = vsub.f32 %v642, %v643
    %v645 = vand.u32 %v644, 4294901760
    %646 = vmatpush1.msra.mxu0 %v645
    %647 = vmatprep.subr.mxu0 0.0
    %v648 = vand.u32 %v413, 4294901760
    %v649 = vsub.f32 %v413, %v648
    %v650 = vand.u32 %v649, 4294901760
    %v651 = vsub.f32 %v649, %v650
    %v652 = vand.u32 %v651, 4294901760
    %653 = vmatpush1.msra.mxu0 %v652
    %654 = vmatprep.subr.mxu0 0.0
    %v655 = vand.u32 %v414, 4294901760
    %v656 = vsub.f32 %v414, %v655
    %v657 = vand.u32 %v656, 4294901760
    %v658 = vsub.f32 %v656, %v657
    %v659 = vand.u32 %v658, 4294901760
    %660 = vmatpush1.msra.mxu0 %v659
    %661 = vmatprep.subr.mxu0 0.0
    %v662 = vand.u32 %v415, 4294901760
    %v663 = vsub.f32 %v415, %v662
    %v664 = vand.u32 %v663, 4294901760
    %v665 = vsub.f32 %v663, %v664
    %v666 = vand.u32 %v665, 4294901760
    %667 = vmatpush1.msra.mxu0 %v666
    %668 = vmatprep.subr.mxu0 0.0
    %v669 = vand.u32 %v416, 4294901760
    %v670 = vsub.f32 %v416, %v669
    %v671 = vand.u32 %v670, 4294901760
    %v672 = vsub.f32 %v670, %v671
    %v673 = vand.u32 %v672, 4294901760
    %674 = vmatpush1.msra.mxu0 %v673
    %675 = vmatprep.subr.mxu0 0.0
    %v676 = vand.u32 %v417, 4294901760
    %v677 = vsub.f32 %v417, %v676
    %v678 = vand.u32 %v677, 4294901760
    %v679 = vsub.f32 %v677, %v678
    %v680 = vand.u32 %v679, 4294901760
    %681 = vmatpush1.msra.mxu0 %v680
    %682 = vmatprep.subr.mxu0 0.0
    %v683 = vand.u32 %v418, 4294901760
    %v684 = vsub.f32 %v418, %v683
    %v685 = vand.u32 %v684, 4294901760
    %v686 = vsub.f32 %v684, %v685
    %v687 = vand.u32 %v686, 4294901760
    %688 = vmatpush1.msra.mxu0 %v687
    %689 = vmatprep.subr.mxu0 0.0
    %v690 = vand.u32 %v419, 4294901760
    %v691 = vsub.f32 %v419, %v690
    %v692 = vand.u32 %v691, 4294901760
    %v693 = vsub.f32 %v691, %v692
    %v694 = vand.u32 %v693, 4294901760
    %695 = vmatpush1.msra.mxu0 %v694
    %696 = vmatprep.subr.mxu0 0.0
    %v697 = vand.u32 %v420, 4294901760
    %v698 = vsub.f32 %v420, %v697
    %v699 = vand.u32 %v698, 4294901760
    %v700 = vsub.f32 %v698, %v699
    %v701 = vand.u32 %v700, 4294901760
    %702 = vmatpush1.msra.mxu0 %v701
    %703 = vmatprep.subr.mxu0 0.0
    %v704 = vand.u32 %v421, 4294901760
    %v705 = vsub.f32 %v421, %v704
    %v706 = vand.u32 %v705, 4294901760
    %v707 = vsub.f32 %v705, %v706
    %v708 = vand.u32 %v707, 4294901760
    %709 = vmatpush1.msra.mxu0 %v708
    %710 = vmatprep.subr.mxu0 0.0
    %v711 = vand.u32 %v422, 4294901760
    %v712 = vsub.f32 %v422, %v711
    %v713 = vand.u32 %v712, 4294901760
    %v714 = vsub.f32 %v712, %v713
    %v715 = vand.u32 %v714, 4294901760
    %716 = vmatpush1.msra.mxu0 %v715
    %717 = vmatprep.subr.mxu0 0.0
    %v718 = vand.u32 %v423, 4294901760
    %v719 = vsub.f32 %v423, %v718
    %v720 = vand.u32 %v719, 4294901760
    %v721 = vsub.f32 %v719, %v720
    %v722 = vand.u32 %v721, 4294901760
    %723 = vmatpush1.msra.mxu0 %v722
    %724 = vmatprep.subr.mxu0 0.0
    %v725 = vand.u32 %v424, 4294901760
    %v726 = vsub.f32 %v424, %v725
    %v727 = vand.u32 %v726, 4294901760
    %v728 = vsub.f32 %v726, %v727
    %v729 = vand.u32 %v728, 4294901760
    %730 = vmatpush1.msra.mxu0 %v729
    %731 = vmatprep.subr.mxu0 0.0
    %v732 = vand.u32 %v425, 4294901760
    %v733 = vsub.f32 %v425, %v732
    %v734 = vand.u32 %v733, 4294901760
    %v735 = vsub.f32 %v733, %v734
    %v736 = vand.u32 %v735, 4294901760
    %737 = vmatpush1.msra.mxu0 %v736
    %738 = vmatprep.subr.mxu0 0.0
    %v739 = vand.u32 %v426, 4294901760
    %v740 = vsub.f32 %v426, %v739
    %v741 = vand.u32 %v740, 4294901760
    %v742 = vsub.f32 %v740, %v741
    %v743 = vand.u32 %v742, 4294901760
    %744 = vmatpush1.msra.mxu0 %v743
    %745 = vmatprep.subr.mxu0 0.0
    %v746 = vand.u32 %v427, 4294901760
    %v747 = vsub.f32 %v427, %v746
    %v748 = vand.u32 %v747, 4294901760
    %v749 = vsub.f32 %v747, %v748
    %v750 = vand.u32 %v749, 4294901760
    %751 = vmatpush1.msra.mxu0 %v750
    %752 = vmatprep.subr.mxu0 0.0
    %v753 = vand.u32 %v428, 4294901760
    %v754 = vsub.f32 %v428, %v753
    %v755 = vand.u32 %v754, 4294901760
    %v756 = vsub.f32 %v754, %v755
    %v757 = vand.u32 %v756, 4294901760
    %758 = vmatpush1.msra.mxu0 %v757
    %759 = vmatprep.subr.mxu0 0.0
    %v760 = vand.u32 %v429, 4294901760
    %v761 = vsub.f32 %v429, %v760
    %v762 = vand.u32 %v761, 4294901760
    %v763 = vsub.f32 %v761, %v762
    %v764 = vand.u32 %v763, 4294901760
    %765 = vmatpush1.msra.mxu0 %v764
    %766 = vmatprep.subr.mxu0 0.0
    %v767 = vand.u32 %v430, 4294901760
    %v768 = vsub.f32 %v430, %v767
    %v769 = vand.u32 %v768, 4294901760
    %v770 = vsub.f32 %v768, %v769
    %v771 = vand.u32 %v770, 4294901760
    %772 = vmatpush1.msra.mxu0 %v771
    %773 = vmatprep.subr.mxu0 0.0
    %v774 = vand.u32 %v431, 4294901760
    %v775 = vsub.f32 %v431, %v774
    %v776 = vand.u32 %v775, 4294901760
    %v777 = vsub.f32 %v775, %v776
    %v778 = vand.u32 %v777, 4294901760
    %779 = vmatpush1.msra.mxu0 %v778
    %780 = vmatprep.subr.mxu0 0.0
    %v781 = vand.u32 %v432, 4294901760
    %v782 = vsub.f32 %v432, %v781
    %v783 = vand.u32 %v782, 4294901760
    %v784 = vsub.f32 %v782, %v783
    %v785 = vand.u32 %v784, 4294901760
    %786 = vmatpush1.msra.mxu0 %v785
    %787 = vmatprep.subr.mxu0 0.0
    %v788 = vand.u32 %v433, 4294901760
    %v789 = vsub.f32 %v433, %v788
    %v790 = vand.u32 %v789, 4294901760
    %v791 = vsub.f32 %v789, %v790
    %v792 = vand.u32 %v791, 4294901760
    %793 = vmatpush1.msra.mxu0 %v792
    %794 = vmatprep.subr.mxu0 0.0
    %v795 = vand.u32 %v434, 4294901760
    %v796 = vsub.f32 %v434, %v795
    %v797 = vand.u32 %v796, 4294901760
    %v798 = vsub.f32 %v796, %v797
    %v799 = vand.u32 %v798, 4294901760
    %800 = vmatpush1.msra.mxu0 %v799
    %801 = vmatprep.subr.mxu0 0.0
    %v802 = vand.u32 %v435, 4294901760
    %v803 = vsub.f32 %v435, %v802
    %v804 = vand.u32 %v803, 4294901760
    %v805 = vsub.f32 %v803, %v804
    %v806 = vand.u32 %v805, 4294901760
    %807 = vmatpush1.msra.mxu0 %v806
    %808 = vmatprep.subr.mxu0 0.0
    %v809 = vand.u32 %v436, 4294901760
    %v810 = vsub.f32 %v436, %v809
    %v811 = vand.u32 %v810, 4294901760
    %v812 = vsub.f32 %v810, %v811
    %v813 = vand.u32 %v812, 4294901760
    %814 = vmatpush1.msra.mxu0 %v813
    %815 = vmatprep.subr.mxu0 0.0
    %v816 = vand.u32 %v437, 4294901760
    %v817 = vsub.f32 %v437, %v816
    %v818 = vand.u32 %v817, 4294901760
    %v819 = vsub.f32 %v817, %v818
    %v820 = vand.u32 %v819, 4294901760
    %821 = vmatpush1.msra.mxu0 %v820
    %822 = vmatprep.subr.mxu0 0.0
    %v823 = vand.u32 %v438, 4294901760
    %v824 = vsub.f32 %v438, %v823
    %v825 = vand.u32 %v824, 4294901760
    %v826 = vsub.f32 %v824, %v825
    %v827 = vand.u32 %v826, 4294901760
    %828 = vmatpush1.msra.mxu0 %v827
    %v829 = vand.u32 %v487, 4294901760
    %830 = vmatprep.mubr.f32.mxu0 %v829
    %v831 = vand.u32 %v479, 4294901760
    %832 = vmatmul.mubr.f32.gmra.mrb[0].mxu0 %v831
    %v833 = vpop.f32.mrb[0].mxu0
    %v834 = vadd.f32 %v602, %v833
    %v835 = vpop.f32.mrb[0].mxu0
    %836 = vdwg.mxu0
    %837 = vmatprep.subr.mxu0 0.0
    %v838 = vand.u32 %v407, 4294901760
    %v839 = vsub.f32 %v407, %v838
    %840 = vmatpush1.msra.mxu0 %v839
    %841 = vmatprep.subr.mxu0 0.0
    %v842 = vand.u32 %v408, 4294901760
    %v843 = vsub.f32 %v408, %v842
    %844 = vmatpush1.msra.mxu0 %v843
    %845 = vmatprep.subr.mxu0 0.0
    %v846 = vand.u32 %v409, 4294901760
    %v847 = vsub.f32 %v409, %v846
    %848 = vmatpush1.msra.mxu0 %v847
    %849 = vmatprep.subr.mxu0 0.0
    %v850 = vand.u32 %v410, 4294901760
    %v851 = vsub.f32 %v410, %v850
    %852 = vmatpush1.msra.mxu0 %v851
    %853 = vmatprep.subr.mxu0 0.0
    %v854 = vand.u32 %v411, 4294901760
    %v855 = vsub.f32 %v411, %v854
    %856 = vmatpush1.msra.mxu0 %v855
    %857 = vmatprep.subr.mxu0 0.0
    %v858 = vand.u32 %v412, 4294901760
    %v859 = vsub.f32 %v412, %v858
    %860 = vmatpush1.msra.mxu0 %v859
    %861 = vmatprep.subr.mxu0 0.0
    %v862 = vand.u32 %v413, 4294901760
    %v863 = vsub.f32 %v413, %v862
    %864 = vmatpush1.msra.mxu0 %v863
    %865 = vmatprep.subr.mxu0 0.0
    %v866 = vand.u32 %v414, 4294901760
    %v867 = vsub.f32 %v414, %v866
    %868 = vmatpush1.msra.mxu0 %v867
    %869 = vmatprep.subr.mxu0 0.0
    %v870 = vand.u32 %v415, 4294901760
    %v871 = vsub.f32 %v415, %v870
    %872 = vmatpush1.msra.mxu0 %v871
    %873 = vmatprep.subr.mxu0 0.0
    %v874 = vand.u32 %v416, 4294901760
    %v875 = vsub.f32 %v416, %v874
    %876 = vmatpush1.msra.mxu0 %v875
    %877 = vmatprep.subr.mxu0 0.0
    %v878 = vand.u32 %v417, 4294901760
    %v879 = vsub.f32 %v417, %v878
    %880 = vmatpush1.msra.mxu0 %v879
    %881 = vmatprep.subr.mxu0 0.0
    %v882 = vand.u32 %v418, 4294901760
    %v883 = vsub.f32 %v418, %v882
    %884 = vmatpush1.msra.mxu0 %v883
    %885 = vmatprep.subr.mxu0 0.0
    %v886 = vand.u32 %v419, 4294901760
    %v887 = vsub.f32 %v419, %v886
    %888 = vmatpush1.msra.mxu0 %v887
    %889 = vmatprep.subr.mxu0 0.0
    %v890 = vand.u32 %v420, 4294901760
    %v891 = vsub.f32 %v420, %v890
    %892 = vmatpush1.msra.mxu0 %v891
    %893 = vmatprep.subr.mxu0 0.0
    %v894 = vand.u32 %v421, 4294901760
    %v895 = vsub.f32 %v421, %v894
    %896 = vmatpush1.msra.mxu0 %v895
    %897 = vmatprep.subr.mxu0 0.0
    %v898 = vand.u32 %v422, 4294901760
    %v899 = vsub.f32 %v422, %v898
    %900 = vmatpush1.msra.mxu0 %v899
    %901 = vmatprep.subr.mxu0 0.0
    %v902 = vand.u32 %v423, 4294901760
    %v903 = vsub.f32 %v423, %v902
    %904 = vmatpush1.msra.mxu0 %v903
    %905 = vmatprep.subr.mxu0 0.0
    %v906 = vand.u32 %v424, 4294901760
    %v907 = vsub.f32 %v424, %v906
    %908 = vmatpush1.msra.mxu0 %v907
    %909 = vmatprep.subr.mxu0 0.0
    %v910 = vand.u32 %v425, 4294901760
    %v911 = vsub.f32 %v425, %v910
    %912 = vmatpush1.msra.mxu0 %v911
    %913 = vmatprep.subr.mxu0 0.0
    %v914 = vand.u32 %v426, 4294901760
    %v915 = vsub.f32 %v426, %v914
    %916 = vmatpush1.msra.mxu0 %v915
    %917 = vmatprep.subr.mxu0 0.0
    %v918 = vand.u32 %v427, 4294901760
    %v919 = vsub.f32 %v427, %v918
    %920 = vmatpush1.msra.mxu0 %v919
    %921 = vmatprep.subr.mxu0 0.0
    %v922 = vand.u32 %v428, 4294901760
    %v923 = vsub.f32 %v428, %v922
    %924 = vmatpush1.msra.mxu0 %v923
    %925 = vmatprep.subr.mxu0 0.0
    %v926 = vand.u32 %v429, 4294901760
    %v927 = vsub.f32 %v429, %v926
    %928 = vmatpush1.msra.mxu0 %v927
    %929 = vmatprep.subr.mxu0 0.0
    %v930 = vand.u32 %v430, 4294901760
    %v931 = vsub.f32 %v430, %v930
    %932 = vmatpush1.msra.mxu0 %v931
    %933 = vmatprep.subr.mxu0 0.0
    %v934 = vand.u32 %v431, 4294901760
    %v935 = vsub.f32 %v431, %v934
    %936 = vmatpush1.msra.mxu0 %v935
    %937 = vmatprep.subr.mxu0 0.0
    %v938 = vand.u32 %v432, 4294901760
    %v939 = vsub.f32 %v432, %v938
    %940 = vmatpush1.msra.mxu0 %v939
    %941 = vmatprep.subr.mxu0 0.0
    %v942 = vand.u32 %v433, 4294901760
    %v943 = vsub.f32 %v433, %v942
    %944 = vmatpush1.msra.mxu0 %v943
    %945 = vmatprep.subr.mxu0 0.0
    %v946 = vand.u32 %v434, 4294901760
    %v947 = vsub.f32 %v434, %v946
    %948 = vmatpush1.msra.mxu0 %v947
    %949 = vmatprep.subr.mxu0 0.0
    %v950 = vand.u32 %v435, 4294901760
    %v951 = vsub.f32 %v435, %v950
    %952 = vmatpush1.msra.mxu0 %v951
    %953 = vmatprep.subr.mxu0 0.0
    %v954 = vand.u32 %v436, 4294901760
    %v955 = vsub.f32 %v436, %v954
    %956 = vmatpush1.msra.mxu0 %v955
    %957 = vmatprep.subr.mxu0 0.0
    %v958 = vand.u32 %v437, 4294901760
    %v959 = vsub.f32 %v437, %v958
    %960 = vmatpush1.msra.mxu0 %v959
    %961 = vmatprep.subr.mxu0 0.0
    %v962 = vand.u32 %v438, 4294901760
    %v963 = vsub.f32 %v438, %v962
    %964 = vmatpush1.msra.mxu0 %v963
    %v965 = vand.u32 %v487, 4294901760
    %v966 = vsub.f32 %v487, %v965
    %967 = vmatprep.mubr.f32.mxu0 %v966
    %v968 = vand.u32 %v479, 4294901760
    %v969 = vsub.f32 %v479, %v968
    %970 = vmatmul.mubr.f32.gmra.mrb[0].mxu0 %v969
    %v971 = vpop.f32.mrb[0].mxu0
    %v972 = vadd.f32 %v834, %v971
    %v973 = vpop.f32.mrb[0].mxu0
    %974 = vdwg.mxu0
    %975 = vmatprep.subr.mxu0 0.0
    %v976 = vand.u32 %v407, 4294901760
    %977 = vmatpush1.msra.mxu0 %v976
    %978 = vmatprep.subr.mxu0 0.0
    %v979 = vand.u32 %v408, 4294901760
    %980 = vmatpush1.msra.mxu0 %v979
    %981 = vmatprep.subr.mxu0 0.0
    %v982 = vand.u32 %v409, 4294901760
    %983 = vmatpush1.msra.mxu0 %v982
    %984 = vmatprep.subr.mxu0 0.0
    %v985 = vand.u32 %v410, 4294901760
    %986 = vmatpush1.msra.mxu0 %v985
    %987 = vmatprep.subr.mxu0 0.0
    %v988 = vand.u32 %v411, 4294901760
    %989 = vmatpush1.msra.mxu0 %v988
    %990 = vmatprep.subr.mxu0 0.0
    %v991 = vand.u32 %v412, 4294901760
    %992 = vmatpush1.msra.mxu0 %v991
    %993 = vmatprep.subr.mxu0 0.0
    %v994 = vand.u32 %v413, 4294901760
    %995 = vmatpush1.msra.mxu0 %v994
    %996 = vmatprep.subr.mxu0 0.0
    %v997 = vand.u32 %v414, 4294901760
    %998 = vmatpush1.msra.mxu0 %v997
    %999 = vmatprep.subr.mxu0 0.0
    %v1000 = vand.u32 %v415, 4294901760
    %1001 = vmatpush1.msra.mxu0 %v1000
    %1002 = vmatprep.subr.mxu0 0.0
    %v1003 = vand.u32 %v416, 4294901760
    %1004 = vmatpush1.msra.mxu0 %v1003
    %1005 = vmatprep.subr.mxu0 0.0
    %v1006 = vand.u32 %v417, 4294901760
    %1007 = vmatpush1.msra.mxu0 %v1006
    %1008 = vmatprep.subr.mxu0 0.0
    %v1009 = vand.u32 %v418, 4294901760
    %1010 = vmatpush1.msra.mxu0 %v1009
    %1011 = vmatprep.subr.mxu0 0.0
    %v1012 = vand.u32 %v419, 4294901760
    %1013 = vmatpush1.msra.mxu0 %v1012
    %1014 = vmatprep.subr.mxu0 0.0
    %v1015 = vand.u32 %v420, 4294901760
    %1016 = vmatpush1.msra.mxu0 %v1015
    %1017 = vmatprep.subr.mxu0 0.0
    %v1018 = vand.u32 %v421, 4294901760
    %1019 = vmatpush1.msra.mxu0 %v1018
    %1020 = vmatprep.subr.mxu0 0.0
    %v1021 = vand.u32 %v422, 4294901760
    %1022 = vmatpush1.msra.mxu0 %v1021
    %1023 = vmatprep.subr.mxu0 0.0
    %v1024 = vand.u32 %v423, 4294901760
    %1025 = vmatpush1.msra.mxu0 %v1024
    %1026 = vmatprep.subr.mxu0 0.0
    %v1027 = vand.u32 %v424, 4294901760
    %1028 = vmatpush1.msra.mxu0 %v1027
    %1029 = vmatprep.subr.mxu0 0.0
    %v1030 = vand.u32 %v425, 4294901760
    %1031 = vmatpush1.msra.mxu0 %v1030
    %1032 = vmatprep.subr.mxu0 0.0
    %v1033 = vand.u32 %v426, 4294901760
    %1034 = vmatpush1.msra.mxu0 %v1033
    %1035 = vmatprep.subr.mxu0 0.0
    %v1036 = vand.u32 %v427, 4294901760
    %1037 = vmatpush1.msra.mxu0 %v1036
    %1038 = vmatprep.subr.mxu0 0.0
    %v1039 = vand.u32 %v428, 4294901760
    %1040 = vmatpush1.msra.mxu0 %v1039
    %1041 = vmatprep.subr.mxu0 0.0
    %v1042 = vand.u32 %v429, 4294901760
    %1043 = vmatpush1.msra.mxu0 %v1042
    %1044 = vmatprep.subr.mxu0 0.0
    %v1045 = vand.u32 %v430, 4294901760
    %1046 = vmatpush1.msra.mxu0 %v1045
    %1047 = vmatprep.subr.mxu0 0.0
    %v1048 = vand.u32 %v431, 4294901760
    %1049 = vmatpush1.msra.mxu0 %v1048
    %1050 = vmatprep.subr.mxu0 0.0
    %v1051 = vand.u32 %v432, 4294901760
    %1052 = vmatpush1.msra.mxu0 %v1051
    %1053 = vmatprep.subr.mxu0 0.0
    %v1054 = vand.u32 %v433, 4294901760
    %1055 = vmatpush1.msra.mxu0 %v1054
    %1056 = vmatprep.subr.mxu0 0.0
    %v1057 = vand.u32 %v434, 4294901760
    %1058 = vmatpush1.msra.mxu0 %v1057
    %1059 = vmatprep.subr.mxu0 0.0
    %v1060 = vand.u32 %v435, 4294901760
    %1061 = vmatpush1.msra.mxu0 %v1060
    %1062 = vmatprep.subr.mxu0 0.0
    %v1063 = vand.u32 %v436, 4294901760
    %1064 = vmatpush1.msra.mxu0 %v1063
    %1065 = vmatprep.subr.mxu0 0.0
    %v1066 = vand.u32 %v437, 4294901760
    %1067 = vmatpush1.msra.mxu0 %v1066
    %1068 = vmatprep.subr.mxu0 0.0
    %v1069 = vand.u32 %v438, 4294901760
    %1070 = vmatpush1.msra.mxu0 %v1069
    %v1071 = vand.u32 %v487, 4294901760
    %v1072 = vsub.f32 %v487, %v1071
    %v1073 = vand.u32 %v1072, 4294901760
    %1074 = vmatprep.mubr.f32.mxu0 %v1073
    %v1075 = vand.u32 %v479, 4294901760
    %v1076 = vsub.f32 %v479, %v1075
    %v1077 = vand.u32 %v1076, 4294901760
    %1078 = vmatmul.mubr.f32.gmra.mrb[0].mxu0 %v1077
    %v1079 = vpop.f32.mrb[0].mxu0
    %v1080 = vadd.f32 %v972, %v1079
    %v1081 = vpop.f32.mrb[0].mxu0
    %1082 = vdwg.mxu0
    %1083 = vmatprep.subr.mxu0 0.0
    %v1084 = vand.u32 %v407, 4294901760
    %v1085 = vsub.f32 %v407, %v1084
    %v1086 = vand.u32 %v1085, 4294901760
    %1087 = vmatpush1.msra.mxu0 %v1086
    %1088 = vmatprep.subr.mxu0 0.0
    %v1089 = vand.u32 %v408, 4294901760
    %v1090 = vsub.f32 %v408, %v1089
    %v1091 = vand.u32 %v1090, 4294901760
    %1092 = vmatpush1.msra.mxu0 %v1091
    %1093 = vmatprep.subr.mxu0 0.0
    %v1094 = vand.u32 %v409, 4294901760
    %v1095 = vsub.f32 %v409, %v1094
    %v1096 = vand.u32 %v1095, 4294901760
    %1097 = vmatpush1.msra.mxu0 %v1096
    %1098 = vmatprep.subr.mxu0 0.0
    %v1099 = vand.u32 %v410, 4294901760
    %v1100 = vsub.f32 %v410, %v1099
    %v1101 = vand.u32 %v1100, 4294901760
    %1102 = vmatpush1.msra.mxu0 %v1101
    %1103 = vmatprep.subr.mxu0 0.0
    %v1104 = vand.u32 %v411, 4294901760
    %v1105 = vsub.f32 %v411, %v1104
    %v1106 = vand.u32 %v1105, 4294901760
    %1107 = vmatpush1.msra.mxu0 %v1106
    %1108 = vmatprep.subr.mxu0 0.0
    %v1109 = vand.u32 %v412, 4294901760
    %v1110 = vsub.f32 %v412, %v1109
    %v1111 = vand.u32 %v1110, 4294901760
    %1112 = vmatpush1.msra.mxu0 %v1111
    %1113 = vmatprep.subr.mxu0 0.0
    %v1114 = vand.u32 %v413, 4294901760
    %v1115 = vsub.f32 %v413, %v1114
    %v1116 = vand.u32 %v1115, 4294901760
    %1117 = vmatpush1.msra.mxu0 %v1116
    %1118 = vmatprep.subr.mxu0 0.0
    %v1119 = vand.u32 %v414, 4294901760
    %v1120 = vsub.f32 %v414, %v1119
    %v1121 = vand.u32 %v1120, 4294901760
    %1122 = vmatpush1.msra.mxu0 %v1121
    %1123 = vmatprep.subr.mxu0 0.0
    %v1124 = vand.u32 %v415, 4294901760
    %v1125 = vsub.f32 %v415, %v1124
    %v1126 = vand.u32 %v1125, 4294901760
    %1127 = vmatpush1.msra.mxu0 %v1126
    %1128 = vmatprep.subr.mxu0 0.0
    %v1129 = vand.u32 %v416, 4294901760
    %v1130 = vsub.f32 %v416, %v1129
    %v1131 = vand.u32 %v1130, 4294901760
    %1132 = vmatpush1.msra.mxu0 %v1131
    %1133 = vmatprep.subr.mxu0 0.0
    %v1134 = vand.u32 %v417, 4294901760
    %v1135 = vsub.f32 %v417, %v1134
    %v1136 = vand.u32 %v1135, 4294901760
    %1137 = vmatpush1.msra.mxu0 %v1136
    %1138 = vmatprep.subr.mxu0 0.0
    %v1139 = vand.u32 %v418, 4294901760
    %v1140 = vsub.f32 %v418, %v1139
    %v1141 = vand.u32 %v1140, 4294901760
    %1142 = vmatpush1.msra.mxu0 %v1141
    %1143 = vmatprep.subr.mxu0 0.0
    %v1144 = vand.u32 %v419, 4294901760
    %v1145 = vsub.f32 %v419, %v1144
    %v1146 = vand.u32 %v1145, 4294901760
    %1147 = vmatpush1.msra.mxu0 %v1146
    %1148 = vmatprep.subr.mxu0 0.0
    %v1149 = vand.u32 %v420, 4294901760
    %v1150 = vsub.f32 %v420, %v1149
    %v1151 = vand.u32 %v1150, 4294901760
    %1152 = vmatpush1.msra.mxu0 %v1151
    %1153 = vmatprep.subr.mxu0 0.0
    %v1154 = vand.u32 %v421, 4294901760
    %v1155 = vsub.f32 %v421, %v1154
    %v1156 = vand.u32 %v1155, 4294901760
    %1157 = vmatpush1.msra.mxu0 %v1156
    %1158 = vmatprep.subr.mxu0 0.0
    %v1159 = vand.u32 %v422, 4294901760
    %v1160 = vsub.f32 %v422, %v1159
    %v1161 = vand.u32 %v1160, 4294901760
    %1162 = vmatpush1.msra.mxu0 %v1161
    %1163 = vmatprep.subr.mxu0 0.0
    %v1164 = vand.u32 %v423, 4294901760
    %v1165 = vsub.f32 %v423, %v1164
    %v1166 = vand.u32 %v1165, 4294901760
    %1167 = vmatpush1.msra.mxu0 %v1166
    %1168 = vmatprep.subr.mxu0 0.0
    %v1169 = vand.u32 %v424, 4294901760
    %v1170 = vsub.f32 %v424, %v1169
    %v1171 = vand.u32 %v1170, 4294901760
    %1172 = vmatpush1.msra.mxu0 %v1171
    %1173 = vmatprep.subr.mxu0 0.0
    %v1174 = vand.u32 %v425, 4294901760
    %v1175 = vsub.f32 %v425, %v1174
    %v1176 = vand.u32 %v1175, 4294901760
    %1177 = vmatpush1.msra.mxu0 %v1176
    %1178 = vmatprep.subr.mxu0 0.0
    %v1179 = vand.u32 %v426, 4294901760
    %v1180 = vsub.f32 %v426, %v1179
    %v1181 = vand.u32 %v1180, 4294901760
    %1182 = vmatpush1.msra.mxu0 %v1181
    %1183 = vmatprep.subr.mxu0 0.0
    %v1184 = vand.u32 %v427, 4294901760
    %v1185 = vsub.f32 %v427, %v1184
    %v1186 = vand.u32 %v1185, 4294901760
    %1187 = vmatpush1.msra.mxu0 %v1186
    %1188 = vmatprep.subr.mxu0 0.0
    %v1189 = vand.u32 %v428, 4294901760
    %v1190 = vsub.f32 %v428, %v1189
    %v1191 = vand.u32 %v1190, 4294901760
    %1192 = vmatpush1.msra.mxu0 %v1191
    %1193 = vmatprep.subr.mxu0 0.0
    %v1194 = vand.u32 %v429, 4294901760
    %v1195 = vsub.f32 %v429, %v1194
    %v1196 = vand.u32 %v1195, 4294901760
    %1197 = vmatpush1.msra.mxu0 %v1196
    %1198 = vmatprep.subr.mxu0 0.0
    %v1199 = vand.u32 %v430, 4294901760
    %v1200 = vsub.f32 %v430, %v1199
    %v1201 = vand.u32 %v1200, 4294901760
    %1202 = vmatpush1.msra.mxu0 %v1201
    %1203 = vmatprep.subr.mxu0 0.0
    %v1204 = vand.u32 %v431, 4294901760
    %v1205 = vsub.f32 %v431, %v1204
    %v1206 = vand.u32 %v1205, 4294901760
    %1207 = vmatpush1.msra.mxu0 %v1206
    %1208 = vmatprep.subr.mxu0 0.0
    %v1209 = vand.u32 %v432, 4294901760
    %v1210 = vsub.f32 %v432, %v1209
    %v1211 = vand.u32 %v1210, 4294901760
    %1212 = vmatpush1.msra.mxu0 %v1211
    %1213 = vmatprep.subr.mxu0 0.0
    %v1214 = vand.u32 %v433, 4294901760
    %v1215 = vsub.f32 %v433, %v1214
    %v1216 = vand.u32 %v1215, 4294901760
    %1217 = vmatpush1.msra.mxu0 %v1216
    %1218 = vmatprep.subr.mxu0 0.0
    %v1219 = vand.u32 %v434, 4294901760
    %v1220 = vsub.f32 %v434, %v1219
    %v1221 = vand.u32 %v1220, 4294901760
    %1222 = vmatpush1.msra.mxu0 %v1221
    %1223 = vmatprep.subr.mxu0 0.0
    %v1224 = vand.u32 %v435, 4294901760
    %v1225 = vsub.f32 %v435, %v1224
    %v1226 = vand.u32 %v1225, 4294901760
    %1227 = vmatpush1.msra.mxu0 %v1226
    %1228 = vmatprep.subr.mxu0 0.0
    %v1229 = vand.u32 %v436, 4294901760
    %v1230 = vsub.f32 %v436, %v1229
    %v1231 = vand.u32 %v1230, 4294901760
    %1232 = vmatpush1.msra.mxu0 %v1231
    %1233 = vmatprep.subr.mxu0 0.0
    %v1234 = vand.u32 %v437, 4294901760
    %v1235 = vsub.f32 %v437, %v1234
    %v1236 = vand.u32 %v1235, 4294901760
    %1237 = vmatpush1.msra.mxu0 %v1236
    %1238 = vmatprep.subr.mxu0 0.0
    %v1239 = vand.u32 %v438, 4294901760
    %v1240 = vsub.f32 %v438, %v1239
    %v1241 = vand.u32 %v1240, 4294901760
    %1242 = vmatpush1.msra.mxu0 %v1241
    %v1243 = vand.u32 %v487, 4294901760
    %1244 = vmatprep.mubr.f32.mxu0 %v1243
    %v1245 = vand.u32 %v479, 4294901760
    %1246 = vmatmul.mubr.f32.gmra.mrb[0].mxu0 %v1245
    %v1247 = vpop.f32.mrb[0].mxu0
    %v1248 = vadd.f32 %v1080, %v1247
    %v1249 = vpop.f32.mrb[0].mxu0
    %1250 = vdwg.mxu0
    %1251 = vmatprep.subr.mxu0 0.0
    %v1252 = vand.u32 %v407, 4294901760
    %1253 = vmatpush1.msra.mxu0 %v1252
    %1254 = vmatprep.subr.mxu0 0.0
    %v1255 = vand.u32 %v408, 4294901760
    %1256 = vmatpush1.msra.mxu0 %v1255
    %1257 = vmatprep.subr.mxu0 0.0
    %v1258 = vand.u32 %v409, 4294901760
    %1259 = vmatpush1.msra.mxu0 %v1258
    %1260 = vmatprep.subr.mxu0 0.0
    %v1261 = vand.u32 %v410, 4294901760
    %1262 = vmatpush1.msra.mxu0 %v1261
    %1263 = vmatprep.subr.mxu0 0.0
    %v1264 = vand.u32 %v411, 4294901760
    %1265 = vmatpush1.msra.mxu0 %v1264
    %1266 = vmatprep.subr.mxu0 0.0
    %v1267 = vand.u32 %v412, 4294901760
    %1268 = vmatpush1.msra.mxu0 %v1267
    %1269 = vmatprep.subr.mxu0 0.0
    %v1270 = vand.u32 %v413, 4294901760
    %1271 = vmatpush1.msra.mxu0 %v1270
    %1272 = vmatprep.subr.mxu0 0.0
    %v1273 = vand.u32 %v414, 4294901760
    %1274 = vmatpush1.msra.mxu0 %v1273
    %1275 = vmatprep.subr.mxu0 0.0
    %v1276 = vand.u32 %v415, 4294901760
    %1277 = vmatpush1.msra.mxu0 %v1276
    %1278 = vmatprep.subr.mxu0 0.0
    %v1279 = vand.u32 %v416, 4294901760
    %1280 = vmatpush1.msra.mxu0 %v1279
    %1281 = vmatprep.subr.mxu0 0.0
    %v1282 = vand.u32 %v417, 4294901760
    %1283 = vmatpush1.msra.mxu0 %v1282
    %1284 = vmatprep.subr.mxu0 0.0
    %v1285 = vand.u32 %v418, 4294901760
    %1286 = vmatpush1.msra.mxu0 %v1285
    %1287 = vmatprep.subr.mxu0 0.0
    %v1288 = vand.u32 %v419, 4294901760
    %1289 = vmatpush1.msra.mxu0 %v1288
    %1290 = vmatprep.subr.mxu0 0.0
    %v1291 = vand.u32 %v420, 4294901760
    %1292 = vmatpush1.msra.mxu0 %v1291
    %1293 = vmatprep.subr.mxu0 0.0
    %v1294 = vand.u32 %v421, 4294901760
    %1295 = vmatpush1.msra.mxu0 %v1294
    %1296 = vmatprep.subr.mxu0 0.0
    %v1297 = vand.u32 %v422, 4294901760
    %1298 = vmatpush1.msra.mxu0 %v1297
    %1299 = vmatprep.subr.mxu0 0.0
    %v1300 = vand.u32 %v423, 4294901760
    %1301 = vmatpush1.msra.mxu0 %v1300
    %1302 = vmatprep.subr.mxu0 0.0
    %v1303 = vand.u32 %v424, 4294901760
    %1304 = vmatpush1.msra.mxu0 %v1303
    %1305 = vmatprep.subr.mxu0 0.0
    %v1306 = vand.u32 %v425, 4294901760
    %1307 = vmatpush1.msra.mxu0 %v1306
    %1308 = vmatprep.subr.mxu0 0.0
    %v1309 = vand.u32 %v426, 4294901760
    %1310 = vmatpush1.msra.mxu0 %v1309
    %1311 = vmatprep.subr.mxu0 0.0
    %v1312 = vand.u32 %v427, 4294901760
    %1313 = vmatpush1.msra.mxu0 %v1312
    %1314 = vmatprep.subr.mxu0 0.0
    %v1315 = vand.u32 %v428, 4294901760
    %1316 = vmatpush1.msra.mxu0 %v1315
    %1317 = vmatprep.subr.mxu0 0.0
    %v1318 = vand.u32 %v429, 4294901760
    %1319 = vmatpush1.msra.mxu0 %v1318
    %1320 = vmatprep.subr.mxu0 0.0
    %v1321 = vand.u32 %v430, 4294901760
    %1322 = vmatpush1.msra.mxu0 %v1321
    %1323 = vmatprep.subr.mxu0 0.0
    %v1324 = vand.u32 %v431, 4294901760
    %1325 = vmatpush1.msra.mxu0 %v1324
    %1326 = vmatprep.subr.mxu0 0.0
    %v1327 = vand.u32 %v432, 4294901760
    %1328 = vmatpush1.msra.mxu0 %v1327
    %1329 = vmatprep.subr.mxu0 0.0
    %v1330 = vand.u32 %v433, 4294901760
    %1331 = vmatpush1.msra.mxu0 %v1330
    %1332 = vmatprep.subr.mxu0 0.0
    %v1333 = vand.u32 %v434, 4294901760
    %1334 = vmatpush1.msra.mxu0 %v1333
    %1335 = vmatprep.subr.mxu0 0.0
    %v1336 = vand.u32 %v435, 4294901760
    %1337 = vmatpush1.msra.mxu0 %v1336
    %1338 = vmatprep.subr.mxu0 0.0
    %v1339 = vand.u32 %v436, 4294901760
    %1340 = vmatpush1.msra.mxu0 %v1339
    %1341 = vmatprep.subr.mxu0 0.0
    %v1342 = vand.u32 %v437, 4294901760
    %1343 = vmatpush1.msra.mxu0 %v1342
    %1344 = vmatprep.subr.mxu0 0.0
    %v1345 = vand.u32 %v438, 4294901760
    %1346 = vmatpush1.msra.mxu0 %v1345
    %v1347 = vand.u32 %v487, 4294901760
    %1348 = vmatprep.mubr.f32.mxu0 %v1347
    %v1349 = vand.u32 %v479, 4294901760
    %1350 = vmatmul.mubr.f32.gmra.mrb[0].mxu0 %v1349
    %v1351 = vpop.f32.mrb[0].mxu0
    %v1352 = vadd.f32 %v1248, %v1351
    %v1353 = vpop.f32.mrb[0].mxu0
    %1354 = vdwg.mxu0
    %1355 = vmatprep.subr.mxu0 0.0
    %v1356 = vand.u32 %v439, 4294901760
    %1357 = vmatpush1.msra.mxu0 %v1356
    %1358 = vmatprep.subr.mxu0 0.0
    %v1359 = vand.u32 %v440, 4294901760
    %1360 = vmatpush1.msra.mxu0 %v1359
    %1361 = vmatprep.subr.mxu0 0.0
    %v1362 = vand.u32 %v441, 4294901760
    %1363 = vmatpush1.msra.mxu0 %v1362
    %1364 = vmatprep.subr.mxu0 0.0
    %v1365 = vand.u32 %v442, 4294901760
    %1366 = vmatpush1.msra.mxu0 %v1365
    %1367 = vmatprep.subr.mxu0 0.0
    %v1368 = vand.u32 %v443, 4294901760
    %1369 = vmatpush1.msra.mxu0 %v1368
    %1370 = vmatprep.subr.mxu0 0.0
    %v1371 = vand.u32 %v444, 4294901760
    %1372 = vmatpush1.msra.mxu0 %v1371
    %1373 = vmatprep.subr.mxu0 0.0
    %v1374 = vand.u32 %v445, 4294901760
    %1375 = vmatpush1.msra.mxu0 %v1374
    %1376 = vmatprep.subr.mxu0 0.0
    %v1377 = vand.u32 %v446, 4294901760
    %1378 = vmatpush1.msra.mxu0 %v1377
    %1379 = vmatprep.subr.mxu0 0.0
    %v1380 = vand.u32 %v447, 4294901760
    %1381 = vmatpush1.msra.mxu0 %v1380
    %1382 = vmatprep.subr.mxu0 0.0
    %v1383 = vand.u32 %v448, 4294901760
    %1384 = vmatpush1.msra.mxu0 %v1383
    %1385 = vmatprep.subr.mxu0 0.0
    %v1386 = vand.u32 %v449, 4294901760
    %1387 = vmatpush1.msra.mxu0 %v1386
    %1388 = vmatprep.subr.mxu0 0.0
    %v1389 = vand.u32 %v450, 4294901760
    %1390 = vmatpush1.msra.mxu0 %v1389
    %1391 = vmatprep.subr.mxu0 0.0
    %v1392 = vand.u32 %v451, 4294901760
    %1393 = vmatpush1.msra.mxu0 %v1392
    %1394 = vmatprep.subr.mxu0 0.0
    %v1395 = vand.u32 %v452, 4294901760
    %1396 = vmatpush1.msra.mxu0 %v1395
    %1397 = vmatprep.subr.mxu0 0.0
    %v1398 = vand.u32 %v453, 4294901760
    %1399 = vmatpush1.msra.mxu0 %v1398
    %1400 = vmatprep.subr.mxu0 0.0
    %v1401 = vand.u32 %v454, 4294901760
    %1402 = vmatpush1.msra.mxu0 %v1401
    %1403 = vmatprep.subr.mxu0 0.0
    %v1404 = vand.u32 %v455, 4294901760
    %1405 = vmatpush1.msra.mxu0 %v1404
    %1406 = vmatprep.subr.mxu0 0.0
    %v1407 = vand.u32 %v456, 4294901760
    %1408 = vmatpush1.msra.mxu0 %v1407
    %1409 = vmatprep.subr.mxu0 0.0
    %v1410 = vand.u32 %v457, 4294901760
    %1411 = vmatpush1.msra.mxu0 %v1410
    %1412 = vmatprep.subr.mxu0 0.0
    %v1413 = vand.u32 %v458, 4294901760
    %1414 = vmatpush1.msra.mxu0 %v1413
    %1415 = vmatprep.subr.mxu0 0.0
    %v1416 = vand.u32 %v459, 4294901760
    %1417 = vmatpush1.msra.mxu0 %v1416
    %1418 = vmatprep.subr.mxu0 0.0
    %v1419 = vand.u32 %v460, 4294901760
    %1420 = vmatpush1.msra.mxu0 %v1419
    %1421 = vmatprep.subr.mxu0 0.0
    %v1422 = vand.u32 %v461, 4294901760
    %1423 = vmatpush1.msra.mxu0 %v1422
    %1424 = vmatprep.subr.mxu0 0.0
    %v1425 = vand.u32 %v462, 4294901760
    %1426 = vmatpush1.msra.mxu0 %v1425
    %1427 = vmatprep.subr.mxu0 0.0
    %v1428 = vand.u32 %v463, 4294901760
    %1429 = vmatpush1.msra.mxu0 %v1428
    %1430 = vmatprep.subr.mxu0 0.0
    %v1431 = vand.u32 %v464, 4294901760
    %1432 = vmatpush1.msra.mxu0 %v1431
    %1433 = vmatprep.subr.mxu0 0.0
    %v1434 = vand.u32 %v465, 4294901760
    %1435 = vmatpush1.msra.mxu0 %v1434
    %1436 = vmatprep.subr.mxu0 0.0
    %v1437 = vand.u32 %v466, 4294901760
    %1438 = vmatpush1.msra.mxu0 %v1437
    %1439 = vmatprep.subr.mxu0 0.0
    %v1440 = vand.u32 %v467, 4294901760
    %1441 = vmatpush1.msra.mxu0 %v1440
    %1442 = vmatprep.subr.mxu0 0.0
    %v1443 = vand.u32 %v468, 4294901760
    %1444 = vmatpush1.msra.mxu0 %v1443
    %1445 = vmatprep.subr.mxu0 0.0
    %v1446 = vand.u32 %v469, 4294901760
    %1447 = vmatpush1.msra.mxu0 %v1446
    %1448 = vmatprep.subr.mxu0 0.0
    %v1449 = vand.u32 %v470, 4294901760
    %1450 = vmatpush1.msra.mxu0 %v1449
    %v1451 = vand.u32 %v488, 4294901760
    %v1452 = vsub.f32 %v488, %v1451
    %v1453 = vand.u32 %v1452, 4294901760
    %v1454 = vsub.f32 %v1452, %v1453
    %v1455 = vand.u32 %v1454, 4294901760
    %1456 = vmatprep.mubr.f32.mxu0 %v1455
    %v1457 = vand.u32 %v486, 4294901760
    %v1458 = vsub.f32 %v486, %v1457
    %v1459 = vand.u32 %v1458, 4294901760
    %v1460 = vsub.f32 %v1458, %v1459
    %v1461 = vand.u32 %v1460, 4294901760
    %1462 = vmatmul.mubr.f32.gmra.mrb[0].mxu0 %v1461
    %v1463 = vpop.f32.mrb[0].mxu0
    %v1464 = vadd.f32 %v1352, %v1463
    %v1465 = vpop.f32.mrb[0].mxu0
    %1466 = vdwg.mxu0
    %1467 = vmatprep.subr.mxu0 0.0
    %v1468 = vand.u32 %v439, 4294901760
    %v1469 = vsub.f32 %v439, %v1468
    %v1470 = vand.u32 %v1469, 4294901760
    %v1471 = vsub.f32 %v1469, %v1470
    %v1472 = vand.u32 %v1471, 4294901760
    %1473 = vmatpush1.msra.mxu0 %v1472
    %1474 = vmatprep.subr.mxu0 0.0
    %v1475 = vand.u32 %v440, 4294901760
    %v1476 = vsub.f32 %v440, %v1475
    %v1477 = vand.u32 %v1476, 4294901760
    %v1478 = vsub.f32 %v1476, %v1477
    %v1479 = vand.u32 %v1478, 4294901760
    %1480 = vmatpush1.msra.mxu0 %v1479
    %1481 = vmatprep.subr.mxu0 0.0
    %v1482 = vand.u32 %v441, 4294901760
    %v1483 = vsub.f32 %v441, %v1482
    %v1484 = vand.u32 %v1483, 4294901760
    %v1485 = vsub.f32 %v1483, %v1484
    %v1486 = vand.u32 %v1485, 4294901760
    %1487 = vmatpush1.msra.mxu0 %v1486
    %1488 = vmatprep.subr.mxu0 0.0
    %v1489 = vand.u32 %v442, 4294901760
    %v1490 = vsub.f32 %v442, %v1489
    %v1491 = vand.u32 %v1490, 4294901760
    %v1492 = vsub.f32 %v1490, %v1491
    %v1493 = vand.u32 %v1492, 4294901760
    %1494 = vmatpush1.msra.mxu0 %v1493
    %1495 = vmatprep.subr.mxu0 0.0
    %v1496 = vand.u32 %v443, 4294901760
    %v1497 = vsub.f32 %v443, %v1496
    %v1498 = vand.u32 %v1497, 4294901760
    %v1499 = vsub.f32 %v1497, %v1498
    %v1500 = vand.u32 %v1499, 4294901760
    %1501 = vmatpush1.msra.mxu0 %v1500
    %1502 = vmatprep.subr.mxu0 0.0
    %v1503 = vand.u32 %v444, 4294901760
    %v1504 = vsub.f32 %v444, %v1503
    %v1505 = vand.u32 %v1504, 4294901760
    %v1506 = vsub.f32 %v1504, %v1505
    %v1507 = vand.u32 %v1506, 4294901760
    %1508 = vmatpush1.msra.mxu0 %v1507
    %1509 = vmatprep.subr.mxu0 0.0
    %v1510 = vand.u32 %v445, 4294901760
    %v1511 = vsub.f32 %v445, %v1510
    %v1512 = vand.u32 %v1511, 4294901760
    %v1513 = vsub.f32 %v1511, %v1512
    %v1514 = vand.u32 %v1513, 4294901760
    %1515 = vmatpush1.msra.mxu0 %v1514
    %1516 = vmatprep.subr.mxu0 0.0
    %v1517 = vand.u32 %v446, 4294901760
    %v1518 = vsub.f32 %v446, %v1517
    %v1519 = vand.u32 %v1518, 4294901760
    %v1520 = vsub.f32 %v1518, %v1519
    %v1521 = vand.u32 %v1520, 4294901760
    %1522 = vmatpush1.msra.mxu0 %v1521
    %1523 = vmatprep.subr.mxu0 0.0
    %v1524 = vand.u32 %v447, 4294901760
    %v1525 = vsub.f32 %v447, %v1524
    %v1526 = vand.u32 %v1525, 4294901760
    %v1527 = vsub.f32 %v1525, %v1526
    %v1528 = vand.u32 %v1527, 4294901760
    %1529 = vmatpush1.msra.mxu0 %v1528
    %1530 = vmatprep.subr.mxu0 0.0
    %v1531 = vand.u32 %v448, 4294901760
    %v1532 = vsub.f32 %v448, %v1531
    %v1533 = vand.u32 %v1532, 4294901760
    %v1534 = vsub.f32 %v1532, %v1533
    %v1535 = vand.u32 %v1534, 4294901760
    %1536 = vmatpush1.msra.mxu0 %v1535
    %1537 = vmatprep.subr.mxu0 0.0
    %v1538 = vand.u32 %v449, 4294901760
    %v1539 = vsub.f32 %v449, %v1538
    %v1540 = vand.u32 %v1539, 4294901760
    %v1541 = vsub.f32 %v1539, %v1540
    %v1542 = vand.u32 %v1541, 4294901760
    %1543 = vmatpush1.msra.mxu0 %v1542
    %1544 = vmatprep.subr.mxu0 0.0
    %v1545 = vand.u32 %v450, 4294901760
    %v1546 = vsub.f32 %v450, %v1545
    %v1547 = vand.u32 %v1546, 4294901760
    %v1548 = vsub.f32 %v1546, %v1547
    %v1549 = vand.u32 %v1548, 4294901760
    %1550 = vmatpush1.msra.mxu0 %v1549
    %1551 = vmatprep.subr.mxu0 0.0
    %v1552 = vand.u32 %v451, 4294901760
    %v1553 = vsub.f32 %v451, %v1552
    %v1554 = vand.u32 %v1553, 4294901760
    %v1555 = vsub.f32 %v1553, %v1554
    %v1556 = vand.u32 %v1555, 4294901760
    %1557 = vmatpush1.msra.mxu0 %v1556
    %1558 = vmatprep.subr.mxu0 0.0
    %v1559 = vand.u32 %v452, 4294901760
    %v1560 = vsub.f32 %v452, %v1559
    %v1561 = vand.u32 %v1560, 4294901760
    %v1562 = vsub.f32 %v1560, %v1561
    %v1563 = vand.u32 %v1562, 4294901760
    %1564 = vmatpush1.msra.mxu0 %v1563
    %1565 = vmatprep.subr.mxu0 0.0
    %v1566 = vand.u32 %v453, 4294901760
    %v1567 = vsub.f32 %v453, %v1566
    %v1568 = vand.u32 %v1567, 4294901760
    %v1569 = vsub.f32 %v1567, %v1568
    %v1570 = vand.u32 %v1569, 4294901760
    %1571 = vmatpush1.msra.mxu0 %v1570
    %1572 = vmatprep.subr.mxu0 0.0
    %v1573 = vand.u32 %v454, 4294901760
    %v1574 = vsub.f32 %v454, %v1573
    %v1575 = vand.u32 %v1574, 4294901760
    %v1576 = vsub.f32 %v1574, %v1575
    %v1577 = vand.u32 %v1576, 4294901760
    %1578 = vmatpush1.msra.mxu0 %v1577
    %1579 = vmatprep.subr.mxu0 0.0
    %v1580 = vand.u32 %v455, 4294901760
    %v1581 = vsub.f32 %v455, %v1580
    %v1582 = vand.u32 %v1581, 4294901760
    %v1583 = vsub.f32 %v1581, %v1582
    %v1584 = vand.u32 %v1583, 4294901760
    %1585 = vmatpush1.msra.mxu0 %v1584
    %1586 = vmatprep.subr.mxu0 0.0
    %v1587 = vand.u32 %v456, 4294901760
    %v1588 = vsub.f32 %v456, %v1587
    %v1589 = vand.u32 %v1588, 4294901760
    %v1590 = vsub.f32 %v1588, %v1589
    %v1591 = vand.u32 %v1590, 4294901760
    %1592 = vmatpush1.msra.mxu0 %v1591
    %1593 = vmatprep.subr.mxu0 0.0
    %v1594 = vand.u32 %v457, 4294901760
    %v1595 = vsub.f32 %v457, %v1594
    %v1596 = vand.u32 %v1595, 4294901760
    %v1597 = vsub.f32 %v1595, %v1596
    %v1598 = vand.u32 %v1597, 4294901760
    %1599 = vmatpush1.msra.mxu0 %v1598
    %1600 = vmatprep.subr.mxu0 0.0
    %v1601 = vand.u32 %v458, 4294901760
    %v1602 = vsub.f32 %v458, %v1601
    %v1603 = vand.u32 %v1602, 4294901760
    %v1604 = vsub.f32 %v1602, %v1603
    %v1605 = vand.u32 %v1604, 4294901760
    %1606 = vmatpush1.msra.mxu0 %v1605
    %1607 = vmatprep.subr.mxu0 0.0
    %v1608 = vand.u32 %v459, 4294901760
    %v1609 = vsub.f32 %v459, %v1608
    %v1610 = vand.u32 %v1609, 4294901760
    %v1611 = vsub.f32 %v1609, %v1610
    %v1612 = vand.u32 %v1611, 4294901760
    %1613 = vmatpush1.msra.mxu0 %v1612
    %1614 = vmatprep.subr.mxu0 0.0
    %v1615 = vand.u32 %v460, 4294901760
    %v1616 = vsub.f32 %v460, %v1615
    %v1617 = vand.u32 %v1616, 4294901760
    %v1618 = vsub.f32 %v1616, %v1617
    %v1619 = vand.u32 %v1618, 4294901760
    %1620 = vmatpush1.msra.mxu0 %v1619
    %1621 = vmatprep.subr.mxu0 0.0
    %v1622 = vand.u32 %v461, 4294901760
    %v1623 = vsub.f32 %v461, %v1622
    %v1624 = vand.u32 %v1623, 4294901760
    %v1625 = vsub.f32 %v1623, %v1624
    %v1626 = vand.u32 %v1625, 4294901760
    %1627 = vmatpush1.msra.mxu0 %v1626
    %1628 = vmatprep.subr.mxu0 0.0
    %v1629 = vand.u32 %v462, 4294901760
    %v1630 = vsub.f32 %v462, %v1629
    %v1631 = vand.u32 %v1630, 4294901760
    %v1632 = vsub.f32 %v1630, %v1631
    %v1633 = vand.u32 %v1632, 4294901760
    %1634 = vmatpush1.msra.mxu0 %v1633
    %1635 = vmatprep.subr.mxu0 0.0
    %v1636 = vand.u32 %v463, 4294901760
    %v1637 = vsub.f32 %v463, %v1636
    %v1638 = vand.u32 %v1637, 4294901760
    %v1639 = vsub.f32 %v1637, %v1638
    %v1640 = vand.u32 %v1639, 4294901760
    %1641 = vmatpush1.msra.mxu0 %v1640
    %1642 = vmatprep.subr.mxu0 0.0
    %v1643 = vand.u32 %v464, 4294901760
    %v1644 = vsub.f32 %v464, %v1643
    %v1645 = vand.u32 %v1644, 4294901760
    %v1646 = vsub.f32 %v1644, %v1645
    %v1647 = vand.u32 %v1646, 4294901760
    %1648 = vmatpush1.msra.mxu0 %v1647
    %1649 = vmatprep.subr.mxu0 0.0
    %v1650 = vand.u32 %v465, 4294901760
    %v1651 = vsub.f32 %v465, %v1650
    %v1652 = vand.u32 %v1651, 4294901760
    %v1653 = vsub.f32 %v1651, %v1652
    %v1654 = vand.u32 %v1653, 4294901760
    %1655 = vmatpush1.msra.mxu0 %v1654
    %1656 = vmatprep.subr.mxu0 0.0
    %v1657 = vand.u32 %v466, 4294901760
    %v1658 = vsub.f32 %v466, %v1657
    %v1659 = vand.u32 %v1658, 4294901760
    %v1660 = vsub.f32 %v1658, %v1659
    %v1661 = vand.u32 %v1660, 4294901760
    %1662 = vmatpush1.msra.mxu0 %v1661
    %1663 = vmatprep.subr.mxu0 0.0
    %v1664 = vand.u32 %v467, 4294901760
    %v1665 = vsub.f32 %v467, %v1664
    %v1666 = vand.u32 %v1665, 4294901760
    %v1667 = vsub.f32 %v1665, %v1666
    %v1668 = vand.u32 %v1667, 4294901760
    %1669 = vmatpush1.msra.mxu0 %v1668
    %1670 = vmatprep.subr.mxu0 0.0
    %v1671 = vand.u32 %v468, 4294901760
    %v1672 = vsub.f32 %v468, %v1671
    %v1673 = vand.u32 %v1672, 4294901760
    %v1674 = vsub.f32 %v1672, %v1673
    %v1675 = vand.u32 %v1674, 4294901760
    %1676 = vmatpush1.msra.mxu0 %v1675
    %1677 = vmatprep.subr.mxu0 0.0
    %v1678 = vand.u32 %v469, 4294901760
    %v1679 = vsub.f32 %v469, %v1678
    %v1680 = vand.u32 %v1679, 4294901760
    %v1681 = vsub.f32 %v1679, %v1680
    %v1682 = vand.u32 %v1681, 4294901760
    %1683 = vmatpush1.msra.mxu0 %v1682
    %1684 = vmatprep.subr.mxu0 0.0
    %v1685 = vand.u32 %v470, 4294901760
    %v1686 = vsub.f32 %v470, %v1685
    %v1687 = vand.u32 %v1686, 4294901760
    %v1688 = vsub.f32 %v1686, %v1687
    %v1689 = vand.u32 %v1688, 4294901760
    %1690 = vmatpush1.msra.mxu0 %v1689
    %v1691 = vand.u32 %v488, 4294901760
    %1692 = vmatprep.mubr.f32.mxu0 %v1691
    %v1693 = vand.u32 %v486, 4294901760
    %1694 = vmatmul.mubr.f32.gmra.mrb[0].mxu0 %v1693
    %v1695 = vpop.f32.mrb[0].mxu0
    %v1696 = vadd.f32 %v1464, %v1695
    %v1697 = vpop.f32.mrb[0].mxu0
    %1698 = vdwg.mxu0
    %1699 = vmatprep.subr.mxu0 0.0
    %v1700 = vand.u32 %v439, 4294901760
    %v1701 = vsub.f32 %v439, %v1700
    %1702 = vmatpush1.msra.mxu0 %v1701
    %1703 = vmatprep.subr.mxu0 0.0
    %v1704 = vand.u32 %v440, 4294901760
    %v1705 = vsub.f32 %v440, %v1704
    %1706 = vmatpush1.msra.mxu0 %v1705
    %1707 = vmatprep.subr.mxu0 0.0
    %v1708 = vand.u32 %v441, 4294901760
    %v1709 = vsub.f32 %v441, %v1708
    %1710 = vmatpush1.msra.mxu0 %v1709
    %1711 = vmatprep.subr.mxu0 0.0
    %v1712 = vand.u32 %v442, 4294901760
    %v1713 = vsub.f32 %v442, %v1712
    %1714 = vmatpush1.msra.mxu0 %v1713
    %1715 = vmatprep.subr.mxu0 0.0
    %v1716 = vand.u32 %v443, 4294901760
    %v1717 = vsub.f32 %v443, %v1716
    %1718 = vmatpush1.msra.mxu0 %v1717
    %1719 = vmatprep.subr.mxu0 0.0
    %v1720 = vand.u32 %v444, 4294901760
    %v1721 = vsub.f32 %v444, %v1720
    %1722 = vmatpush1.msra.mxu0 %v1721
    %1723 = vmatprep.subr.mxu0 0.0
    %v1724 = vand.u32 %v445, 4294901760
    %v1725 = vsub.f32 %v445, %v1724
    %1726 = vmatpush1.msra.mxu0 %v1725
    %1727 = vmatprep.subr.mxu0 0.0
    %v1728 = vand.u32 %v446, 4294901760
    %v1729 = vsub.f32 %v446, %v1728
    %1730 = vmatpush1.msra.mxu0 %v1729
    %1731 = vmatprep.subr.mxu0 0.0
    %v1732 = vand.u32 %v447, 4294901760
    %v1733 = vsub.f32 %v447, %v1732
    %1734 = vmatpush1.msra.mxu0 %v1733
    %1735 = vmatprep.subr.mxu0 0.0
    %v1736 = vand.u32 %v448, 4294901760
    %v1737 = vsub.f32 %v448, %v1736
    %1738 = vmatpush1.msra.mxu0 %v1737
    %1739 = vmatprep.subr.mxu0 0.0
    %v1740 = vand.u32 %v449, 4294901760
    %v1741 = vsub.f32 %v449, %v1740
    %1742 = vmatpush1.msra.mxu0 %v1741
    %1743 = vmatprep.subr.mxu0 0.0
    %v1744 = vand.u32 %v450, 4294901760
    %v1745 = vsub.f32 %v450, %v1744
    %1746 = vmatpush1.msra.mxu0 %v1745
    %1747 = vmatprep.subr.mxu0 0.0
    %v1748 = vand.u32 %v451, 4294901760
    %v1749 = vsub.f32 %v451, %v1748
    %1750 = vmatpush1.msra.mxu0 %v1749
    %1751 = vmatprep.subr.mxu0 0.0
    %v1752 = vand.u32 %v452, 4294901760
    %v1753 = vsub.f32 %v452, %v1752
    %1754 = vmatpush1.msra.mxu0 %v1753
    %1755 = vmatprep.subr.mxu0 0.0
    %v1756 = vand.u32 %v453, 4294901760
    %v1757 = vsub.f32 %v453, %v1756
    %1758 = vmatpush1.msra.mxu0 %v1757
    %1759 = vmatprep.subr.mxu0 0.0
    %v1760 = vand.u32 %v454, 4294901760
    %v1761 = vsub.f32 %v454, %v1760
    %1762 = vmatpush1.msra.mxu0 %v1761
    %1763 = vmatprep.subr.mxu0 0.0
    %v1764 = vand.u32 %v455, 4294901760
    %v1765 = vsub.f32 %v455, %v1764
    %1766 = vmatpush1.msra.mxu0 %v1765
    %1767 = vmatprep.subr.mxu0 0.0
    %v1768 = vand.u32 %v456, 4294901760
    %v1769 = vsub.f32 %v456, %v1768
    %1770 = vmatpush1.msra.mxu0 %v1769
    %1771 = vmatprep.subr.mxu0 0.0
    %v1772 = vand.u32 %v457, 4294901760
    %v1773 = vsub.f32 %v457, %v1772
    %1774 = vmatpush1.msra.mxu0 %v1773
    %1775 = vmatprep.subr.mxu0 0.0
    %v1776 = vand.u32 %v458, 4294901760
    %v1777 = vsub.f32 %v458, %v1776
    %1778 = vmatpush1.msra.mxu0 %v1777
    %1779 = vmatprep.subr.mxu0 0.0
    %v1780 = vand.u32 %v459, 4294901760
    %v1781 = vsub.f32 %v459, %v1780
    %1782 = vmatpush1.msra.mxu0 %v1781
    %1783 = vmatprep.subr.mxu0 0.0
    %v1784 = vand.u32 %v460, 4294901760
    %v1785 = vsub.f32 %v460, %v1784
    %1786 = vmatpush1.msra.mxu0 %v1785
    %1787 = vmatprep.subr.mxu0 0.0
    %v1788 = vand.u32 %v461, 4294901760
    %v1789 = vsub.f32 %v461, %v1788
    %1790 = vmatpush1.msra.mxu0 %v1789
    %1791 = vmatprep.subr.mxu0 0.0
    %v1792 = vand.u32 %v462, 4294901760
    %v1793 = vsub.f32 %v462, %v1792
    %1794 = vmatpush1.msra.mxu0 %v1793
    %1795 = vmatprep.subr.mxu0 0.0
    %v1796 = vand.u32 %v463, 4294901760
    %v1797 = vsub.f32 %v463, %v1796
    %1798 = vmatpush1.msra.mxu0 %v1797
    %1799 = vmatprep.subr.mxu0 0.0
    %v1800 = vand.u32 %v464, 4294901760
    %v1801 = vsub.f32 %v464, %v1800
    %1802 = vmatpush1.msra.mxu0 %v1801
    %1803 = vmatprep.subr.mxu0 0.0
    %v1804 = vand.u32 %v465, 4294901760
    %v1805 = vsub.f32 %v465, %v1804
    %1806 = vmatpush1.msra.mxu0 %v1805
    %1807 = vmatprep.subr.mxu0 0.0
    %v1808 = vand.u32 %v466, 4294901760
    %v1809 = vsub.f32 %v466, %v1808
    %1810 = vmatpush1.msra.mxu0 %v1809
    %1811 = vmatprep.subr.mxu0 0.0
    %v1812 = vand.u32 %v467, 4294901760
    %v1813 = vsub.f32 %v467, %v1812
    %1814 = vmatpush1.msra.mxu0 %v1813
    %1815 = vmatprep.subr.mxu0 0.0
    %v1816 = vand.u32 %v468, 4294901760
    %v1817 = vsub.f32 %v468, %v1816
    %1818 = vmatpush1.msra.mxu0 %v1817
    %1819 = vmatprep.subr.mxu0 0.0
    %v1820 = vand.u32 %v469, 4294901760
    %v1821 = vsub.f32 %v469, %v1820
    %1822 = vmatpush1.msra.mxu0 %v1821
    %1823 = vmatprep.subr.mxu0 0.0
    %v1824 = vand.u32 %v470, 4294901760
    %v1825 = vsub.f32 %v470, %v1824
    %1826 = vmatpush1.msra.mxu0 %v1825
    %v1827 = vand.u32 %v488, 4294901760
    %v1828 = vsub.f32 %v488, %v1827
    %1829 = vmatprep.mubr.f32.mxu0 %v1828
    %v1830 = vand.u32 %v486, 4294901760
    %v1831 = vsub.f32 %v486, %v1830
    %1832 = vmatmul.mubr.f32.gmra.mrb[0].mxu0 %v1831
    %v1833 = vpop.f32.mrb[0].mxu0
    %v1834 = vadd.f32 %v1696, %v1833
    %v1835 = vpop.f32.mrb[0].mxu0
    %1836 = vdwg.mxu0
    %1837 = vmatprep.subr.mxu0 0.0
    %v1838 = vand.u32 %v439, 4294901760
    %1839 = vmatpush1.msra.mxu0 %v1838
    %1840 = vmatprep.subr.mxu0 0.0
    %v1841 = vand.u32 %v440, 4294901760
    %1842 = vmatpush1.msra.mxu0 %v1841
    %1843 = vmatprep.subr.mxu0 0.0
    %v1844 = vand.u32 %v441, 4294901760
    %1845 = vmatpush1.msra.mxu0 %v1844
    %1846 = vmatprep.subr.mxu0 0.0
    %v1847 = vand.u32 %v442, 4294901760
    %1848 = vmatpush1.msra.mxu0 %v1847
    %1849 = vmatprep.subr.mxu0 0.0
    %v1850 = vand.u32 %v443, 4294901760
    %1851 = vmatpush1.msra.mxu0 %v1850
    %1852 = vmatprep.subr.mxu0 0.0
    %v1853 = vand.u32 %v444, 4294901760
    %1854 = vmatpush1.msra.mxu0 %v1853
    %1855 = vmatprep.subr.mxu0 0.0
    %v1856 = vand.u32 %v445, 4294901760
    %1857 = vmatpush1.msra.mxu0 %v1856
    %1858 = vmatprep.subr.mxu0 0.0
    %v1859 = vand.u32 %v446, 4294901760
    %1860 = vmatpush1.msra.mxu0 %v1859
    %1861 = vmatprep.subr.mxu0 0.0
    %v1862 = vand.u32 %v447, 4294901760
    %1863 = vmatpush1.msra.mxu0 %v1862
    %1864 = vmatprep.subr.mxu0 0.0
    %v1865 = vand.u32 %v448, 4294901760
    %1866 = vmatpush1.msra.mxu0 %v1865
    %1867 = vmatprep.subr.mxu0 0.0
    %v1868 = vand.u32 %v449, 4294901760
    %1869 = vmatpush1.msra.mxu0 %v1868
    %1870 = vmatprep.subr.mxu0 0.0
    %v1871 = vand.u32 %v450, 4294901760
    %1872 = vmatpush1.msra.mxu0 %v1871
    %1873 = vmatprep.subr.mxu0 0.0
    %v1874 = vand.u32 %v451, 4294901760
    %1875 = vmatpush1.msra.mxu0 %v1874
    %1876 = vmatprep.subr.mxu0 0.0
    %v1877 = vand.u32 %v452, 4294901760
    %1878 = vmatpush1.msra.mxu0 %v1877
    %1879 = vmatprep.subr.mxu0 0.0
    %v1880 = vand.u32 %v453, 4294901760
    %1881 = vmatpush1.msra.mxu0 %v1880
    %1882 = vmatprep.subr.mxu0 0.0
    %v1883 = vand.u32 %v454, 4294901760
    %1884 = vmatpush1.msra.mxu0 %v1883
    %1885 = vmatprep.subr.mxu0 0.0
    %v1886 = vand.u32 %v455, 4294901760
    %1887 = vmatpush1.msra.mxu0 %v1886
    %1888 = vmatprep.subr.mxu0 0.0
    %v1889 = vand.u32 %v456, 4294901760
    %1890 = vmatpush1.msra.mxu0 %v1889
    %1891 = vmatprep.subr.mxu0 0.0
    %v1892 = vand.u32 %v457, 4294901760
    %1893 = vmatpush1.msra.mxu0 %v1892
    %1894 = vmatprep.subr.mxu0 0.0
    %v1895 = vand.u32 %v458, 4294901760
    %1896 = vmatpush1.msra.mxu0 %v1895
    %1897 = vmatprep.subr.mxu0 0.0
    %v1898 = vand.u32 %v459, 4294901760
    %1899 = vmatpush1.msra.mxu0 %v1898
    %1900 = vmatprep.subr.mxu0 0.0
    %v1901 = vand.u32 %v460, 4294901760
    %1902 = vmatpush1.msra.mxu0 %v1901
    %1903 = vmatprep.subr.mxu0 0.0
    %v1904 = vand.u32 %v461, 4294901760
    %1905 = vmatpush1.msra.mxu0 %v1904
    %1906 = vmatprep.subr.mxu0 0.0
    %v1907 = vand.u32 %v462, 4294901760
    %1908 = vmatpush1.msra.mxu0 %v1907
    %1909 = vmatprep.subr.mxu0 0.0
    %v1910 = vand.u32 %v463, 4294901760
    %1911 = vmatpush1.msra.mxu0 %v1910
    %1912 = vmatprep.subr.mxu0 0.0
    %v1913 = vand.u32 %v464, 4294901760
    %1914 = vmatpush1.msra.mxu0 %v1913
    %1915 = vmatprep.subr.mxu0 0.0
    %v1916 = vand.u32 %v465, 4294901760
    %1917 = vmatpush1.msra.mxu0 %v1916
    %1918 = vmatprep.subr.mxu0 0.0
    %v1919 = vand.u32 %v466, 4294901760
    %1920 = vmatpush1.msra.mxu0 %v1919
    %1921 = vmatprep.subr.mxu0 0.0
    %v1922 = vand.u32 %v467, 4294901760
    %1923 = vmatpush1.msra.mxu0 %v1922
    %1924 = vmatprep.subr.mxu0 0.0
    %v1925 = vand.u32 %v468, 4294901760
    %1926 = vmatpush1.msra.mxu0 %v1925
    %1927 = vmatprep.subr.mxu0 0.0
    %v1928 = vand.u32 %v469, 4294901760
    %1929 = vmatpush1.msra.mxu0 %v1928
    %1930 = vmatprep.subr.mxu0 0.0
    %v1931 = vand.u32 %v470, 4294901760
    %1932 = vmatpush1.msra.mxu0 %v1931
    %v1933 = vand.u32 %v488, 4294901760
    %v1934 = vsub.f32 %v488, %v1933
    %v1935 = vand.u32 %v1934, 4294901760
    %1936 = vmatprep.mubr.f32.mxu0 %v1935
    %v1937 = vand.u32 %v486, 4294901760
    %v1938 = vsub.f32 %v486, %v1937
    %v1939 = vand.u32 %v1938, 4294901760
    %1940 = vmatmul.mubr.f32.gmra.mrb[0].mxu0 %v1939
    %v1941 = vpop.f32.mrb[0].mxu0
    %v1942 = vadd.f32 %v1834, %v1941
    %v1943 = vpop.f32.mrb[0].mxu0
    %1944 = vdwg.mxu0
    %1945 = vmatprep.subr.mxu0 0.0
    %v1946 = vand.u32 %v439, 4294901760
    %v1947 = vsub.f32 %v439, %v1946
    %v1948 = vand.u32 %v1947, 4294901760
    %1949 = vmatpush1.msra.mxu0 %v1948
    %1950 = vmatprep.subr.mxu0 0.0
    %v1951 = vand.u32 %v440, 4294901760
    %v1952 = vsub.f32 %v440, %v1951
    %v1953 = vand.u32 %v1952, 4294901760
    %1954 = vmatpush1.msra.mxu0 %v1953
    %1955 = vmatprep.subr.mxu0 0.0
    %v1956 = vand.u32 %v441, 4294901760
    %v1957 = vsub.f32 %v441, %v1956
    %v1958 = vand.u32 %v1957, 4294901760
    %1959 = vmatpush1.msra.mxu0 %v1958
    %1960 = vmatprep.subr.mxu0 0.0
    %v1961 = vand.u32 %v442, 4294901760
    %v1962 = vsub.f32 %v442, %v1961
    %v1963 = vand.u32 %v1962, 4294901760
    %1964 = vmatpush1.msra.mxu0 %v1963
    %1965 = vmatprep.subr.mxu0 0.0
    %v1966 = vand.u32 %v443, 4294901760
    %v1967 = vsub.f32 %v443, %v1966
    %v1968 = vand.u32 %v1967, 4294901760
    %1969 = vmatpush1.msra.mxu0 %v1968
    %1970 = vmatprep.subr.mxu0 0.0
    %v1971 = vand.u32 %v444, 4294901760
    %v1972 = vsub.f32 %v444, %v1971
    %v1973 = vand.u32 %v1972, 4294901760
    %1974 = vmatpush1.msra.mxu0 %v1973
    %1975 = vmatprep.subr.mxu0 0.0
    %v1976 = vand.u32 %v445, 4294901760
    %v1977 = vsub.f32 %v445, %v1976
    %v1978 = vand.u32 %v1977, 4294901760
    %1979 = vmatpush1.msra.mxu0 %v1978
    %1980 = vmatprep.subr.mxu0 0.0
    %v1981 = vand.u32 %v446, 4294901760
    %v1982 = vsub.f32 %v446, %v1981
    %v1983 = vand.u32 %v1982, 4294901760
    %1984 = vmatpush1.msra.mxu0 %v1983
    %1985 = vmatprep.subr.mxu0 0.0
    %v1986 = vand.u32 %v447, 4294901760
    %v1987 = vsub.f32 %v447, %v1986
    %v1988 = vand.u32 %v1987, 4294901760
    %1989 = vmatpush1.msra.mxu0 %v1988
    %1990 = vmatprep.subr.mxu0 0.0
    %v1991 = vand.u32 %v448, 4294901760
    %v1992 = vsub.f32 %v448, %v1991
    %v1993 = vand.u32 %v1992, 4294901760
    %1994 = vmatpush1.msra.mxu0 %v1993
    %1995 = vmatprep.subr.mxu0 0.0
    %v1996 = vand.u32 %v449, 4294901760
    %v1997 = vsub.f32 %v449, %v1996
    %v1998 = vand.u32 %v1997, 4294901760
    %1999 = vmatpush1.msra.mxu0 %v1998
    %2000 = vmatprep.subr.mxu0 0.0
    %v2001 = vand.u32 %v450, 4294901760
    %v2002 = vsub.f32 %v450, %v2001
    %v2003 = vand.u32 %v2002, 4294901760
    %2004 = vmatpush1.msra.mxu0 %v2003
    %2005 = vmatprep.subr.mxu0 0.0
    %v2006 = vand.u32 %v451, 4294901760
    %v2007 = vsub.f32 %v451, %v2006
    %v2008 = vand.u32 %v2007, 4294901760
    %2009 = vmatpush1.msra.mxu0 %v2008
    %2010 = vmatprep.subr.mxu0 0.0
    %v2011 = vand.u32 %v452, 4294901760
    %v2012 = vsub.f32 %v452, %v2011
    %v2013 = vand.u32 %v2012, 4294901760
    %2014 = vmatpush1.msra.mxu0 %v2013
    %2015 = vmatprep.subr.mxu0 0.0
    %v2016 = vand.u32 %v453, 4294901760
    %v2017 = vsub.f32 %v453, %v2016
    %v2018 = vand.u32 %v2017, 4294901760
    %2019 = vmatpush1.msra.mxu0 %v2018
    %2020 = vmatprep.subr.mxu0 0.0
    %v2021 = vand.u32 %v454, 4294901760
    %v2022 = vsub.f32 %v454, %v2021
    %v2023 = vand.u32 %v2022, 4294901760
    %2024 = vmatpush1.msra.mxu0 %v2023
    %2025 = vmatprep.subr.mxu0 0.0
    %v2026 = vand.u32 %v455, 4294901760
    %v2027 = vsub.f32 %v455, %v2026
    %v2028 = vand.u32 %v2027, 4294901760
    %2029 = vmatpush1.msra.mxu0 %v2028
    %2030 = vmatprep.subr.mxu0 0.0
    %v2031 = vand.u32 %v456, 4294901760
    %v2032 = vsub.f32 %v456, %v2031
    %v2033 = vand.u32 %v2032, 4294901760
    %2034 = vmatpush1.msra.mxu0 %v2033
    %2035 = vmatprep.subr.mxu0 0.0
    %v2036 = vand.u32 %v457, 4294901760
    %v2037 = vsub.f32 %v457, %v2036
    %v2038 = vand.u32 %v2037, 4294901760
    %2039 = vmatpush1.msra.mxu0 %v2038
    %2040 = vmatprep.subr.mxu0 0.0
    %v2041 = vand.u32 %v458, 4294901760
    %v2042 = vsub.f32 %v458, %v2041
    %v2043 = vand.u32 %v2042, 4294901760
    %2044 = vmatpush1.msra.mxu0 %v2043
    %2045 = vmatprep.subr.mxu0 0.0
    %v2046 = vand.u32 %v459, 4294901760
    %v2047 = vsub.f32 %v459, %v2046
    %v2048 = vand.u32 %v2047, 4294901760
    %2049 = vmatpush1.msra.mxu0 %v2048
    %2050 = vmatprep.subr.mxu0 0.0
    %v2051 = vand.u32 %v460, 4294901760
    %v2052 = vsub.f32 %v460, %v2051
    %v2053 = vand.u32 %v2052, 4294901760
    %2054 = vmatpush1.msra.mxu0 %v2053
    %2055 = vmatprep.subr.mxu0 0.0
    %v2056 = vand.u32 %v461, 4294901760
    %v2057 = vsub.f32 %v461, %v2056
    %v2058 = vand.u32 %v2057, 4294901760
    %2059 = vmatpush1.msra.mxu0 %v2058
    %2060 = vmatprep.subr.mxu0 0.0
    %v2061 = vand.u32 %v462, 4294901760
    %v2062 = vsub.f32 %v462, %v2061
    %v2063 = vand.u32 %v2062, 4294901760
    %2064 = vmatpush1.msra.mxu0 %v2063
    %2065 = vmatprep.subr.mxu0 0.0
    %v2066 = vand.u32 %v463, 4294901760
    %v2067 = vsub.f32 %v463, %v2066
    %v2068 = vand.u32 %v2067, 4294901760
    %2069 = vmatpush1.msra.mxu0 %v2068
    %2070 = vmatprep.subr.mxu0 0.0
    %v2071 = vand.u32 %v464, 4294901760
    %v2072 = vsub.f32 %v464, %v2071
    %v2073 = vand.u32 %v2072, 4294901760
    %2074 = vmatpush1.msra.mxu0 %v2073
    %2075 = vmatprep.subr.mxu0 0.0
    %v2076 = vand.u32 %v465, 4294901760
    %v2077 = vsub.f32 %v465, %v2076
    %v2078 = vand.u32 %v2077, 4294901760
    %2079 = vmatpush1.msra.mxu0 %v2078
    %2080 = vmatprep.subr.mxu0 0.0
    %v2081 = vand.u32 %v466, 4294901760
    %v2082 = vsub.f32 %v466, %v2081
    %v2083 = vand.u32 %v2082, 4294901760
    %2084 = vmatpush1.msra.mxu0 %v2083
    %2085 = vmatprep.subr.mxu0 0.0
    %v2086 = vand.u32 %v467, 4294901760
    %v2087 = vsub.f32 %v467, %v2086
    %v2088 = vand.u32 %v2087, 4294901760
    %2089 = vmatpush1.msra.mxu0 %v2088
    %2090 = vmatprep.subr.mxu0 0.0
    %v2091 = vand.u32 %v468, 4294901760
    %v2092 = vsub.f32 %v468, %v2091
    %v2093 = vand.u32 %v2092, 4294901760
    %2094 = vmatpush1.msra.mxu0 %v2093
    %2095 = vmatprep.subr.mxu0 0.0
    %v2096 = vand.u32 %v469, 4294901760
    %v2097 = vsub.f32 %v469, %v2096
    %v2098 = vand.u32 %v2097, 4294901760
    %2099 = vmatpush1.msra.mxu0 %v2098
    %2100 = vmatprep.subr.mxu0 0.0
    %v2101 = vand.u32 %v470, 4294901760
    %v2102 = vsub.f32 %v470, %v2101
    %v2103 = vand.u32 %v2102, 4294901760
    %2104 = vmatpush1.msra.mxu0 %v2103
    %v2105 = vand.u32 %v488, 4294901760
    %2106 = vmatprep.mubr.f32.mxu0 %v2105
    %v2107 = vand.u32 %v486, 4294901760
    %2108 = vmatmul.mubr.f32.gmra.mrb[0].mxu0 %v2107
    %v2109 = vpop.f32.mrb[0].mxu0
    %v2110 = vadd.f32 %v1942, %v2109
    %v2111 = vpop.f32.mrb[0].mxu0
    %2112 = vdwg.mxu0
    %2113 = vmatprep.subr.mxu0 0.0
    %v2114 = vand.u32 %v439, 4294901760
    %2115 = vmatpush1.msra.mxu0 %v2114
    %2116 = vmatprep.subr.mxu0 0.0
    %v2117 = vand.u32 %v440, 4294901760
    %2118 = vmatpush1.msra.mxu0 %v2117
    %2119 = vmatprep.subr.mxu0 0.0
    %v2120 = vand.u32 %v441, 4294901760
    %2121 = vmatpush1.msra.mxu0 %v2120
    %2122 = vmatprep.subr.mxu0 0.0
    %v2123 = vand.u32 %v442, 4294901760
    %2124 = vmatpush1.msra.mxu0 %v2123
    %2125 = vmatprep.subr.mxu0 0.0
    %v2126 = vand.u32 %v443, 4294901760
    %2127 = vmatpush1.msra.mxu0 %v2126
    %2128 = vmatprep.subr.mxu0 0.0
    %v2129 = vand.u32 %v444, 4294901760
    %2130 = vmatpush1.msra.mxu0 %v2129
    %2131 = vmatprep.subr.mxu0 0.0
    %v2132 = vand.u32 %v445, 4294901760
    %2133 = vmatpush1.msra.mxu0 %v2132
    %2134 = vmatprep.subr.mxu0 0.0
    %v2135 = vand.u32 %v446, 4294901760
    %2136 = vmatpush1.msra.mxu0 %v2135
    %2137 = vmatprep.subr.mxu0 0.0
    %v2138 = vand.u32 %v447, 4294901760
    %2139 = vmatpush1.msra.mxu0 %v2138
    %2140 = vmatprep.subr.mxu0 0.0
    %v2141 = vand.u32 %v448, 4294901760
    %2142 = vmatpush1.msra.mxu0 %v2141
    %2143 = vmatprep.subr.mxu0 0.0
    %v2144 = vand.u32 %v449, 4294901760
    %2145 = vmatpush1.msra.mxu0 %v2144
    %2146 = vmatprep.subr.mxu0 0.0
    %v2147 = vand.u32 %v450, 4294901760
    %2148 = vmatpush1.msra.mxu0 %v2147
    %2149 = vmatprep.subr.mxu0 0.0
    %v2150 = vand.u32 %v451, 4294901760
    %2151 = vmatpush1.msra.mxu0 %v2150
    %2152 = vmatprep.subr.mxu0 0.0
    %v2153 = vand.u32 %v452, 4294901760
    %2154 = vmatpush1.msra.mxu0 %v2153
    %2155 = vmatprep.subr.mxu0 0.0
    %v2156 = vand.u32 %v453, 4294901760
    %2157 = vmatpush1.msra.mxu0 %v2156
    %2158 = vmatprep.subr.mxu0 0.0
    %v2159 = vand.u32 %v454, 4294901760
    %2160 = vmatpush1.msra.mxu0 %v2159
    %2161 = vmatprep.subr.mxu0 0.0
    %v2162 = vand.u32 %v455, 4294901760
    %2163 = vmatpush1.msra.mxu0 %v2162
    %2164 = vmatprep.subr.mxu0 0.0
    %v2165 = vand.u32 %v456, 4294901760
    %2166 = vmatpush1.msra.mxu0 %v2165
    %2167 = vmatprep.subr.mxu0 0.0
    %v2168 = vand.u32 %v457, 4294901760
    %2169 = vmatpush1.msra.mxu0 %v2168
    %2170 = vmatprep.subr.mxu0 0.0
    %v2171 = vand.u32 %v458, 4294901760
    %2172 = vmatpush1.msra.mxu0 %v2171
    %2173 = vmatprep.subr.mxu0 0.0
    %v2174 = vand.u32 %v459, 4294901760
    %2175 = vmatpush1.msra.mxu0 %v2174
    %2176 = vmatprep.subr.mxu0 0.0
    %v2177 = vand.u32 %v460, 4294901760
    %2178 = vmatpush1.msra.mxu0 %v2177
    %2179 = vmatprep.subr.mxu0 0.0
    %v2180 = vand.u32 %v461, 4294901760
    %2181 = vmatpush1.msra.mxu0 %v2180
    %2182 = vmatprep.subr.mxu0 0.0
    %v2183 = vand.u32 %v462, 4294901760
    %2184 = vmatpush1.msra.mxu0 %v2183
    %2185 = vmatprep.subr.mxu0 0.0
    %v2186 = vand.u32 %v463, 4294901760
    %2187 = vmatpush1.msra.mxu0 %v2186
    %2188 = vmatprep.subr.mxu0 0.0
    %v2189 = vand.u32 %v464, 4294901760
    %2190 = vmatpush1.msra.mxu0 %v2189
    %2191 = vmatprep.subr.mxu0 0.0
    %v2192 = vand.u32 %v465, 4294901760
    %2193 = vmatpush1.msra.mxu0 %v2192
    %2194 = vmatprep.subr.mxu0 0.0
    %v2195 = vand.u32 %v466, 4294901760
    %2196 = vmatpush1.msra.mxu0 %v2195
    %2197 = vmatprep.subr.mxu0 0.0
    %v2198 = vand.u32 %v467, 4294901760
    %2199 = vmatpush1.msra.mxu0 %v2198
    %2200 = vmatprep.subr.mxu0 0.0
    %v2201 = vand.u32 %v468, 4294901760
    %2202 = vmatpush1.msra.mxu0 %v2201
    %2203 = vmatprep.subr.mxu0 0.0
    %v2204 = vand.u32 %v469, 4294901760
    %2205 = vmatpush1.msra.mxu0 %v2204
    %2206 = vmatprep.subr.mxu0 0.0
    %v2207 = vand.u32 %v470, 4294901760
    %2208 = vmatpush1.msra.mxu0 %v2207
    %v2209 = vand.u32 %v488, 4294901760
    %2210 = vmatprep.mubr.f32.mxu0 %v2209
    %v2211 = vand.u32 %v486, 4294901760
    %2212 = vmatmul.mubr.f32.gmra.mrb[0].mxu0 %v2211
    %v2213 = vpop.f32.mrb[0].mxu0
    %v2214 = vadd.f32 %v2110, %v2213
    %v2215 = vpop.f32.mrb[0].mxu0
    %2216 = vdwg.mxu0
    %v2217 = vmul.f32 %v2214, 0.0625
    %v2218 = vld [vmem:[#allocation5] sm:$0xff]
    %v2219 = vld [vmem:[#allocation5 + $0x8] sm:$0xff]
    %v2220 = vld [vmem:[#allocation5 + $0x10] sm:$0xff]
    %v2221 = vld [vmem:[#allocation5 + $0x18] sm:$0xff]
    %v2222 = vld [vmem:[#allocation7] sm:$0x1]
    %v2224 = vlaneseq
    %v2225 = vshrl.u32 %v2224, 7
    %v2226 = vsub.s32 0, %v2225
    %v2227 = vrot.slane %v2222, %v2226
    %vm2229 = vcmask 261120
    %v2231 = vsel %vm2229, %v2217, 0
    %2233 = vmatprep.subr.mxu0 0.0
    %v2234 = vand.u32 %v2218, 4294901760
    %2235 = vmatpush1.msra.mxu0 %v2234
    %2236 = vmatprep.subr.mxu0 0.0
    %v2237 = vand.u32 %v2219, 4294901760
    %2238 = vmatpush1.msra.mxu0 %v2237
    %2239 = vmatprep.subr.mxu0 0.0
    %v2240 = vand.u32 %v2220, 4294901760
    %2241 = vmatpush1.msra.mxu0 %v2240
    %2242 = vmatprep.subr.mxu0 0.0
    %v2243 = vand.u32 %v2221, 4294901760
    %2244 = vmatpush1.msra.mxu0 %v2243
    %2245 = vmatprep.subr.mxu0 0.0
    %2246 = vmatpush1.msra.mxu0 0.0
    %2247 = vmatprep.subr.mxu0 0.0
    %2248 = vmatpush1.msra.mxu0 0.0
    %2249 = vmatprep.subr.mxu0 0.0
    %2250 = vmatpush1.msra.mxu0 0.0
    %2251 = vmatprep.subr.mxu0 0.0
    %2252 = vmatpush1.msra.mxu0 0.0
    %2253 = vmatprep.subr.mxu0 0.0
    %2254 = vmatpush1.msra.mxu0 0.0
    %2255 = vmatprep.subr.mxu0 0.0
    %2256 = vmatpush1.msra.mxu0 0.0
    %2257 = vmatprep.subr.mxu0 0.0
    %2258 = vmatpush1.msra.mxu0 0.0
    %2259 = vmatprep.subr.mxu0 0.0
    %2260 = vmatpush1.msra.mxu0 0.0
    %2261 = vmatprep.subr.mxu0 0.0
    %2262 = vmatpush1.msra.mxu0 0.0
    %2263 = vmatprep.subr.mxu0 0.0
    %2264 = vmatpush1.msra.mxu0 0.0
    %2265 = vmatprep.subr.mxu0 0.0
    %2266 = vmatpush1.msra.mxu0 0.0
    %2267 = vmatprep.subr.mxu0 0.0
    %2268 = vmatpush1.msra.mxu0 0.0
    %2269 = vmatprep.subr.mxu0 0.0
    %2270 = vmatpush1.msra.mxu0 0.0
    %2271 = vmatprep.subr.mxu0 0.0
    %2272 = vmatpush1.msra.mxu0 0.0
    %2273 = vmatprep.subr.mxu0 0.0
    %2274 = vmatpush1.msra.mxu0 0.0
    %2275 = vmatprep.subr.mxu0 0.0
    %2276 = vmatpush1.msra.mxu0 0.0
    %2277 = vmatprep.subr.mxu0 0.0
    %2278 = vmatpush1.msra.mxu0 0.0
    %2279 = vmatprep.subr.mxu0 0.0
    %2280 = vmatpush1.msra.mxu0 0.0
    %2281 = vmatprep.subr.mxu0 0.0
    %2282 = vmatpush1.msra.mxu0 0.0
    %2283 = vmatprep.subr.mxu0 0.0
    %2284 = vmatpush1.msra.mxu0 0.0
    %2285 = vmatprep.subr.mxu0 0.0
    %2286 = vmatpush1.msra.mxu0 0.0
    %2287 = vmatprep.subr.mxu0 0.0
    %2288 = vmatpush1.msra.mxu0 0.0
    %2289 = vmatprep.subr.mxu0 0.0
    %2290 = vmatpush1.msra.mxu0 0.0
    %2291 = vmatprep.subr.mxu0 0.0
    %2292 = vmatpush1.msra.mxu0 0.0
    %2293 = vmatprep.subr.mxu0 0.0
    %2294 = vmatpush1.msra.mxu0 0.0
    %2295 = vmatprep.subr.mxu0 0.0
    %2296 = vmatpush1.msra.mxu0 0.0
    %2297 = vmatprep.subr.mxu0 0.0
    %2298 = vmatpush1.msra.mxu0 0.0
    %2299 = vmatprep.subr.mxu0 0.0
    %2300 = vmatpush1.msra.mxu0 0.0
    %2301 = vmatprep.mubr.f32.mxu0 0.0
    %v2302 = vand.u32 %v2231, 4294901760
    %v2303 = vsub.f32 %v2231, %v2302
    %v2304 = vand.u32 %v2303, 4294901760
    %v2305 = vsub.f32 %v2303, %v2304
    %v2306 = vand.u32 %v2305, 4294901760
    %2307 = vmatmul.mubr.f32.gmra.mrb[0].mxu0 %v2306
    %v2308 = vpop.f32.mrb[0].mxu0
    %v2309 = vadd.f32 %v2227, %v2308
    %v2310 = vpop.f32.mrb[0].mxu0
    %2311 = vdwg.mxu0
    %2312 = vmatprep.subr.mxu0 0.0
    %v2313 = vand.u32 %v2218, 4294901760
    %v2314 = vsub.f32 %v2218, %v2313
    %v2315 = vand.u32 %v2314, 4294901760
    %v2316 = vsub.f32 %v2314, %v2315
    %v2317 = vand.u32 %v2316, 4294901760
    %2318 = vmatpush1.msra.mxu0 %v2317
    %2319 = vmatprep.subr.mxu0 0.0
    %v2320 = vand.u32 %v2219, 4294901760
    %v2321 = vsub.f32 %v2219, %v2320
    %v2322 = vand.u32 %v2321, 4294901760
    %v2323 = vsub.f32 %v2321, %v2322
    %v2324 = vand.u32 %v2323, 4294901760
    %2325 = vmatpush1.msra.mxu0 %v2324
    %2326 = vmatprep.subr.mxu0 0.0
    %v2327 = vand.u32 %v2220, 4294901760
    %v2328 = vsub.f32 %v2220, %v2327
    %v2329 = vand.u32 %v2328, 4294901760
    %v2330 = vsub.f32 %v2328, %v2329
    %v2331 = vand.u32 %v2330, 4294901760
    %2332 = vmatpush1.msra.mxu0 %v2331
    %2333 = vmatprep.subr.mxu0 0.0
    %v2334 = vand.u32 %v2221, 4294901760
    %v2335 = vsub.f32 %v2221, %v2334
    %v2336 = vand.u32 %v2335, 4294901760
    %v2337 = vsub.f32 %v2335, %v2336
    %v2338 = vand.u32 %v2337, 4294901760
    %2339 = vmatpush1.msra.mxu0 %v2338
    %2340 = vmatprep.subr.mxu0 0.0
    %2341 = vmatpush1.msra.mxu0 0.0
    %2342 = vmatprep.subr.mxu0 0.0
    %2343 = vmatpush1.msra.mxu0 0.0
    %2344 = vmatprep.subr.mxu0 0.0
    %2345 = vmatpush1.msra.mxu0 0.0
    %2346 = vmatprep.subr.mxu0 0.0
    %2347 = vmatpush1.msra.mxu0 0.0
    %2348 = vmatprep.subr.mxu0 0.0
    %2349 = vmatpush1.msra.mxu0 0.0
    %2350 = vmatprep.subr.mxu0 0.0
    %2351 = vmatpush1.msra.mxu0 0.0
    %2352 = vmatprep.subr.mxu0 0.0
    %2353 = vmatpush1.msra.mxu0 0.0
    %2354 = vmatprep.subr.mxu0 0.0
    %2355 = vmatpush1.msra.mxu0 0.0
    %2356 = vmatprep.subr.mxu0 0.0
    %2357 = vmatpush1.msra.mxu0 0.0
    %2358 = vmatprep.subr.mxu0 0.0
    %2359 = vmatpush1.msra.mxu0 0.0
    %2360 = vmatprep.subr.mxu0 0.0
    %2361 = vmatpush1.msra.mxu0 0.0
    %2362 = vmatprep.subr.mxu0 0.0
    %2363 = vmatpush1.msra.mxu0 0.0
    %2364 = vmatprep.subr.mxu0 0.0
    %2365 = vmatpush1.msra.mxu0 0.0
    %2366 = vmatprep.subr.mxu0 0.0
    %2367 = vmatpush1.msra.mxu0 0.0
    %2368 = vmatprep.subr.mxu0 0.0
    %2369 = vmatpush1.msra.mxu0 0.0
    %2370 = vmatprep.subr.mxu0 0.0
    %2371 = vmatpush1.msra.mxu0 0.0
    %2372 = vmatprep.subr.mxu0 0.0
    %2373 = vmatpush1.msra.mxu0 0.0
    %2374 = vmatprep.subr.mxu0 0.0
    %2375 = vmatpush1.msra.mxu0 0.0
    %2376 = vmatprep.subr.mxu0 0.0
    %2377 = vmatpush1.msra.mxu0 0.0
    %2378 = vmatprep.subr.mxu0 0.0
    %2379 = vmatpush1.msra.mxu0 0.0
    %2380 = vmatprep.subr.mxu0 0.0
    %2381 = vmatpush1.msra.mxu0 0.0
    %2382 = vmatprep.subr.mxu0 0.0
    %2383 = vmatpush1.msra.mxu0 0.0
    %2384 = vmatprep.subr.mxu0 0.0
    %2385 = vmatpush1.msra.mxu0 0.0
    %2386 = vmatprep.subr.mxu0 0.0
    %2387 = vmatpush1.msra.mxu0 0.0
    %2388 = vmatprep.subr.mxu0 0.0
    %2389 = vmatpush1.msra.mxu0 0.0
    %2390 = vmatprep.subr.mxu0 0.0
    %2391 = vmatpush1.msra.mxu0 0.0
    %2392 = vmatprep.subr.mxu0 0.0
    %2393 = vmatpush1.msra.mxu0 0.0
    %2394 = vmatprep.subr.mxu0 0.0
    %2395 = vmatpush1.msra.mxu0 0.0
    %2396 = vmatprep.mubr.f32.mxu0 0.0
    %v2397 = vand.u32 %v2231, 4294901760
    %2398 = vmatmul.mubr.f32.gmra.mrb[0].mxu0 %v2397
    %v2399 = vpop.f32.mrb[0].mxu0
    %v2400 = vadd.f32 %v2309, %v2399
    %v2401 = vpop.f32.mrb[0].mxu0
    %2402 = vdwg.mxu0
    %2403 = vmatprep.subr.mxu0 0.0
    %v2404 = vand.u32 %v2218, 4294901760
    %v2405 = vsub.f32 %v2218, %v2404
    %2406 = vmatpush1.msra.mxu0 %v2405
    %2407 = vmatprep.subr.mxu0 0.0
    %v2408 = vand.u32 %v2219, 4294901760
    %v2409 = vsub.f32 %v2219, %v2408
    %2410 = vmatpush1.msra.mxu0 %v2409
    %2411 = vmatprep.subr.mxu0 0.0
    %v2412 = vand.u32 %v2220, 4294901760
    %v2413 = vsub.f32 %v2220, %v2412
    %2414 = vmatpush1.msra.mxu0 %v2413
    %2415 = vmatprep.subr.mxu0 0.0
    %v2416 = vand.u32 %v2221, 4294901760
    %v2417 = vsub.f32 %v2221, %v2416
    %2418 = vmatpush1.msra.mxu0 %v2417
    %2419 = vmatprep.subr.mxu0 0.0
    %2420 = vmatpush1.msra.mxu0 0.0
    %2421 = vmatprep.subr.mxu0 0.0
    %2422 = vmatpush1.msra.mxu0 0.0
    %2423 = vmatprep.subr.mxu0 0.0
    %2424 = vmatpush1.msra.mxu0 0.0
    %2425 = vmatprep.subr.mxu0 0.0
    %2426 = vmatpush1.msra.mxu0 0.0
    %2427 = vmatprep.subr.mxu0 0.0
    %2428 = vmatpush1.msra.mxu0 0.0
    %2429 = vmatprep.subr.mxu0 0.0
    %2430 = vmatpush1.msra.mxu0 0.0
    %2431 = vmatprep.subr.mxu0 0.0
    %2432 = vmatpush1.msra.mxu0 0.0
    %2433 = vmatprep.subr.mxu0 0.0
    %2434 = vmatpush1.msra.mxu0 0.0
    %2435 = vmatprep.subr.mxu0 0.0
    %2436 = vmatpush1.msra.mxu0 0.0
    %2437 = vmatprep.subr.mxu0 0.0
    %2438 = vmatpush1.msra.mxu0 0.0
    %2439 = vmatprep.subr.mxu0 0.0
    %2440 = vmatpush1.msra.mxu0 0.0
    %2441 = vmatprep.subr.mxu0 0.0
    %2442 = vmatpush1.msra.mxu0 0.0
    %2443 = vmatprep.subr.mxu0 0.0
    %2444 = vmatpush1.msra.mxu0 0.0
    %2445 = vmatprep.subr.mxu0 0.0
    %2446 = vmatpush1.msra.mxu0 0.0
    %2447 = vmatprep.subr.mxu0 0.0
    %2448 = vmatpush1.msra.mxu0 0.0
    %2449 = vmatprep.subr.mxu0 0.0
    %2450 = vmatpush1.msra.mxu0 0.0
    %2451 = vmatprep.subr.mxu0 0.0
    %2452 = vmatpush1.msra.mxu0 0.0
    %2453 = vmatprep.subr.mxu0 0.0
    %2454 = vmatpush1.msra.mxu0 0.0
    %2455 = vmatprep.subr.mxu0 0.0
    %2456 = vmatpush1.msra.mxu0 0.0
    %2457 = vmatprep.subr.mxu0 0.0
    %2458 = vmatpush1.msra.mxu0 0.0
    %2459 = vmatprep.subr.mxu0 0.0
    %2460 = vmatpush1.msra.mxu0 0.0
    %2461 = vmatprep.subr.mxu0 0.0
    %2462 = vmatpush1.msra.mxu0 0.0
    %2463 = vmatprep.subr.mxu0 0.0
    %2464 = vmatpush1.msra.mxu0 0.0
    %2465 = vmatprep.subr.mxu0 0.0
    %2466 = vmatpush1.msra.mxu0 0.0
    %2467 = vmatprep.subr.mxu0 0.0
    %2468 = vmatpush1.msra.mxu0 0.0
    %2469 = vmatprep.subr.mxu0 0.0
    %2470 = vmatpush1.msra.mxu0 0.0
    %2471 = vmatprep.subr.mxu0 0.0
    %2472 = vmatpush1.msra.mxu0 0.0
    %2473 = vmatprep.subr.mxu0 0.0
    %2474 = vmatpush1.msra.mxu0 0.0
    %2475 = vmatprep.mubr.f32.mxu0 0.0
    %v2476 = vand.u32 %v2231, 4294901760
    %v2477 = vsub.f32 %v2231, %v2476
    %2478 = vmatmul.mubr.f32.gmra.mrb[0].mxu0 %v2477
    %v2479 = vpop.f32.mrb[0].mxu0
    %v2480 = vadd.f32 %v2400, %v2479
    %v2481 = vpop.f32.mrb[0].mxu0
    %2482 = vdwg.mxu0
    %2483 = vmatprep.subr.mxu0 0.0
    %v2484 = vand.u32 %v2218, 4294901760
    %2485 = vmatpush1.msra.mxu0 %v2484
    %2486 = vmatprep.subr.mxu0 0.0
    %v2487 = vand.u32 %v2219, 4294901760
    %2488 = vmatpush1.msra.mxu0 %v2487
    %2489 = vmatprep.subr.mxu0 0.0
    %v2490 = vand.u32 %v2220, 4294901760
    %2491 = vmatpush1.msra.mxu0 %v2490
    %2492 = vmatprep.subr.mxu0 0.0
    %v2493 = vand.u32 %v2221, 4294901760
    %2494 = vmatpush1.msra.mxu0 %v2493
    %2495 = vmatprep.subr.mxu0 0.0
    %2496 = vmatpush1.msra.mxu0 0.0
    %2497 = vmatprep.subr.mxu0 0.0
    %2498 = vmatpush1.msra.mxu0 0.0
    %2499 = vmatprep.subr.mxu0 0.0
    %2500 = vmatpush1.msra.mxu0 0.0
    %2501 = vmatprep.subr.mxu0 0.0
    %2502 = vmatpush1.msra.mxu0 0.0
    %2503 = vmatprep.subr.mxu0 0.0
    %2504 = vmatpush1.msra.mxu0 0.0
    %2505 = vmatprep.subr.mxu0 0.0
    %2506 = vmatpush1.msra.mxu0 0.0
    %2507 = vmatprep.subr.mxu0 0.0
    %2508 = vmatpush1.msra.mxu0 0.0
    %2509 = vmatprep.subr.mxu0 0.0
    %2510 = vmatpush1.msra.mxu0 0.0
    %2511 = vmatprep.subr.mxu0 0.0
    %2512 = vmatpush1.msra.mxu0 0.0
    %2513 = vmatprep.subr.mxu0 0.0
    %2514 = vmatpush1.msra.mxu0 0.0
    %2515 = vmatprep.subr.mxu0 0.0
    %2516 = vmatpush1.msra.mxu0 0.0
    %2517 = vmatprep.subr.mxu0 0.0
    %2518 = vmatpush1.msra.mxu0 0.0
    %2519 = vmatprep.subr.mxu0 0.0
    %2520 = vmatpush1.msra.mxu0 0.0
    %2521 = vmatprep.subr.mxu0 0.0
    %2522 = vmatpush1.msra.mxu0 0.0
    %2523 = vmatprep.subr.mxu0 0.0
    %2524 = vmatpush1.msra.mxu0 0.0
    %2525 = vmatprep.subr.mxu0 0.0
    %2526 = vmatpush1.msra.mxu0 0.0
    %2527 = vmatprep.subr.mxu0 0.0
    %2528 = vmatpush1.msra.mxu0 0.0
    %2529 = vmatprep.subr.mxu0 0.0
    %2530 = vmatpush1.msra.mxu0 0.0
    %2531 = vmatprep.subr.mxu0 0.0
    %2532 = vmatpush1.msra.mxu0 0.0
    %2533 = vmatprep.subr.mxu0 0.0
    %2534 = vmatpush1.msra.mxu0 0.0
    %2535 = vmatprep.subr.mxu0 0.0
    %2536 = vmatpush1.msra.mxu0 0.0
    %2537 = vmatprep.subr.mxu0 0.0
    %2538 = vmatpush1.msra.mxu0 0.0
    %2539 = vmatprep.subr.mxu0 0.0
    %2540 = vmatpush1.msra.mxu0 0.0
    %2541 = vmatprep.subr.mxu0 0.0
    %2542 = vmatpush1.msra.mxu0 0.0
    %2543 = vmatprep.subr.mxu0 0.0
    %2544 = vmatpush1.msra.mxu0 0.0
    %2545 = vmatprep.subr.mxu0 0.0
    %2546 = vmatpush1.msra.mxu0 0.0
    %2547 = vmatprep.subr.mxu0 0.0
    %2548 = vmatpush1.msra.mxu0 0.0
    %2549 = vmatprep.subr.mxu0 0.0
    %2550 = vmatpush1.msra.mxu0 0.0
    %2551 = vmatprep.mubr.f32.mxu0 0.0
    %v2552 = vand.u32 %v2231, 4294901760
    %v2553 = vsub.f32 %v2231, %v2552
    %v2554 = vand.u32 %v2553, 4294901760
    %2555 = vmatmul.mubr.f32.gmra.mrb[0].mxu0 %v2554
    %v2556 = vpop.f32.mrb[0].mxu0
    %v2557 = vadd.f32 %v2480, %v2556
    %v2558 = vpop.f32.mrb[0].mxu0
    %2559 = vdwg.mxu0
    %2560 = vmatprep.subr.mxu0 0.0
    %v2561 = vand.u32 %v2218, 4294901760
    %v2562 = vsub.f32 %v2218, %v2561
    %v2563 = vand.u32 %v2562, 4294901760
    %2564 = vmatpush1.msra.mxu0 %v2563
    %2565 = vmatprep.subr.mxu0 0.0
    %v2566 = vand.u32 %v2219, 4294901760
    %v2567 = vsub.f32 %v2219, %v2566
    %v2568 = vand.u32 %v2567, 4294901760
    %2569 = vmatpush1.msra.mxu0 %v2568
    %2570 = vmatprep.subr.mxu0 0.0
    %v2571 = vand.u32 %v2220, 4294901760
    %v2572 = vsub.f32 %v2220, %v2571
    %v2573 = vand.u32 %v2572, 4294901760
    %2574 = vmatpush1.msra.mxu0 %v2573
    %2575 = vmatprep.subr.mxu0 0.0
    %v2576 = vand.u32 %v2221, 4294901760
    %v2577 = vsub.f32 %v2221, %v2576
    %v2578 = vand.u32 %v2577, 4294901760
    %2579 = vmatpush1.msra.mxu0 %v2578
    %2580 = vmatprep.subr.mxu0 0.0
    %2581 = vmatpush1.msra.mxu0 0.0
    %2582 = vmatprep.subr.mxu0 0.0
    %2583 = vmatpush1.msra.mxu0 0.0
    %2584 = vmatprep.subr.mxu0 0.0
    %2585 = vmatpush1.msra.mxu0 0.0
    %2586 = vmatprep.subr.mxu0 0.0
    %2587 = vmatpush1.msra.mxu0 0.0
    %2588 = vmatprep.subr.mxu0 0.0
    %2589 = vmatpush1.msra.mxu0 0.0
    %2590 = vmatprep.subr.mxu0 0.0
    %2591 = vmatpush1.msra.mxu0 0.0
    %2592 = vmatprep.subr.mxu0 0.0
    %2593 = vmatpush1.msra.mxu0 0.0
    %2594 = vmatprep.subr.mxu0 0.0
    %2595 = vmatpush1.msra.mxu0 0.0
    %2596 = vmatprep.subr.mxu0 0.0
    %2597 = vmatpush1.msra.mxu0 0.0
    %2598 = vmatprep.subr.mxu0 0.0
    %2599 = vmatpush1.msra.mxu0 0.0
    %2600 = vmatprep.subr.mxu0 0.0
    %2601 = vmatpush1.msra.mxu0 0.0
    %2602 = vmatprep.subr.mxu0 0.0
    %2603 = vmatpush1.msra.mxu0 0.0
    %2604 = vmatprep.subr.mxu0 0.0
    %2605 = vmatpush1.msra.mxu0 0.0
    %2606 = vmatprep.subr.mxu0 0.0
    %2607 = vmatpush1.msra.mxu0 0.0
    %2608 = vmatprep.subr.mxu0 0.0
    %2609 = vmatpush1.msra.mxu0 0.0
    %2610 = vmatprep.subr.mxu0 0.0
    %2611 = vmatpush1.msra.mxu0 0.0
    %2612 = vmatprep.subr.mxu0 0.0
    %2613 = vmatpush1.msra.mxu0 0.0
    %2614 = vmatprep.subr.mxu0 0.0
    %2615 = vmatpush1.msra.mxu0 0.0
    %2616 = vmatprep.subr.mxu0 0.0
    %2617 = vmatpush1.msra.mxu0 0.0
    %2618 = vmatprep.subr.mxu0 0.0
    %2619 = vmatpush1.msra.mxu0 0.0
    %2620 = vmatprep.subr.mxu0 0.0
    %2621 = vmatpush1.msra.mxu0 0.0
    %2622 = vmatprep.subr.mxu0 0.0
    %2623 = vmatpush1.msra.mxu0 0.0
    %2624 = vmatprep.subr.mxu0 0.0
    %2625 = vmatpush1.msra.mxu0 0.0
    %2626 = vmatprep.subr.mxu0 0.0
    %2627 = vmatpush1.msra.mxu0 0.0
    %2628 = vmatprep.subr.mxu0 0.0
    %2629 = vmatpush1.msra.mxu0 0.0
    %2630 = vmatprep.subr.mxu0 0.0
    %2631 = vmatpush1.msra.mxu0 0.0
    %2632 = vmatprep.subr.mxu0 0.0
    %2633 = vmatpush1.msra.mxu0 0.0
    %2634 = vmatprep.subr.mxu0 0.0
    %2635 = vmatpush1.msra.mxu0 0.0
    %2636 = vmatprep.mubr.f32.mxu0 0.0
    %v2637 = vand.u32 %v2231, 4294901760
    %2638 = vmatmul.mubr.f32.gmra.mrb[0].mxu0 %v2637
    %v2639 = vpop.f32.mrb[0].mxu0
    %v2640 = vadd.f32 %v2557, %v2639
    %v2641 = vpop.f32.mrb[0].mxu0
    %2642 = vdwg.mxu0
    %2643 = vmatprep.subr.mxu0 0.0
    %v2644 = vand.u32 %v2218, 4294901760
    %2645 = vmatpush1.msra.mxu0 %v2644
    %2646 = vmatprep.subr.mxu0 0.0
    %v2647 = vand.u32 %v2219, 4294901760
    %2648 = vmatpush1.msra.mxu0 %v2647
    %2649 = vmatprep.subr.mxu0 0.0
    %v2650 = vand.u32 %v2220, 4294901760
    %2651 = vmatpush1.msra.mxu0 %v2650
    %2652 = vmatprep.subr.mxu0 0.0
    %v2653 = vand.u32 %v2221, 4294901760
    %2654 = vmatpush1.msra.mxu0 %v2653
    %2655 = vmatprep.subr.mxu0 0.0
    %2656 = vmatpush1.msra.mxu0 0.0
    %2657 = vmatprep.subr.mxu0 0.0
    %2658 = vmatpush1.msra.mxu0 0.0
    %2659 = vmatprep.subr.mxu0 0.0
    %2660 = vmatpush1.msra.mxu0 0.0
    %2661 = vmatprep.subr.mxu0 0.0
    %2662 = vmatpush1.msra.mxu0 0.0
    %2663 = vmatprep.subr.mxu0 0.0
    %2664 = vmatpush1.msra.mxu0 0.0
    %2665 = vmatprep.subr.mxu0 0.0
    %2666 = vmatpush1.msra.mxu0 0.0
    %2667 = vmatprep.subr.mxu0 0.0
    %2668 = vmatpush1.msra.mxu0 0.0
    %2669 = vmatprep.subr.mxu0 0.0
    %2670 = vmatpush1.msra.mxu0 0.0
    %2671 = vmatprep.subr.mxu0 0.0
    %2672 = vmatpush1.msra.mxu0 0.0
    %2673 = vmatprep.subr.mxu0 0.0
    %2674 = vmatpush1.msra.mxu0 0.0
    %2675 = vmatprep.subr.mxu0 0.0
    %2676 = vmatpush1.msra.mxu0 0.0
    %2677 = vmatprep.subr.mxu0 0.0
    %2678 = vmatpush1.msra.mxu0 0.0
    %2679 = vmatprep.subr.mxu0 0.0
    %2680 = vmatpush1.msra.mxu0 0.0
    %2681 = vmatprep.subr.mxu0 0.0
    %2682 = vmatpush1.msra.mxu0 0.0
    %2683 = vmatprep.subr.mxu0 0.0
    %2684 = vmatpush1.msra.mxu0 0.0
    %2685 = vmatprep.subr.mxu0 0.0
    %2686 = vmatpush1.msra.mxu0 0.0
    %2687 = vmatprep.subr.mxu0 0.0
    %2688 = vmatpush1.msra.mxu0 0.0
    %2689 = vmatprep.subr.mxu0 0.0
    %2690 = vmatpush1.msra.mxu0 0.0
    %2691 = vmatprep.subr.mxu0 0.0
    %2692 = vmatpush1.msra.mxu0 0.0
    %2693 = vmatprep.subr.mxu0 0.0
    %2694 = vmatpush1.msra.mxu0 0.0
    %2695 = vmatprep.subr.mxu0 0.0
    %2696 = vmatpush1.msra.mxu0 0.0
    %2697 = vmatprep.subr.mxu0 0.0
    %2698 = vmatpush1.msra.mxu0 0.0
    %2699 = vmatprep.subr.mxu0 0.0
    %2700 = vmatpush1.msra.mxu0 0.0
    %2701 = vmatprep.subr.mxu0 0.0
    %2702 = vmatpush1.msra.mxu0 0.0
    %2703 = vmatprep.subr.mxu0 0.0
    %2704 = vmatpush1.msra.mxu0 0.0
    %2705 = vmatprep.subr.mxu0 0.0
    %2706 = vmatpush1.msra.mxu0 0.0
    %2707 = vmatprep.subr.mxu0 0.0
    %2708 = vmatpush1.msra.mxu0 0.0
    %2709 = vmatprep.subr.mxu0 0.0
    %2710 = vmatpush1.msra.mxu0 0.0
    %2711 = vmatprep.mubr.f32.mxu0 0.0
    %v2712 = vand.u32 %v2231, 4294901760
    %2713 = vmatmul.mubr.f32.gmra.mrb[0].mxu0 %v2712
    %v2714 = vpop.f32.mrb[0].mxu0
    %v2715 = vadd.f32 %v2640, %v2714
    %v2716 = vpop.f32.mrb[0].mxu0
    %2717 = vdwg.mxu0
    %v2718 = vmax.f32 %v2715, 0.0
    %v2719 = vld [vmem:[#allocation8] sm:$0x3]
    %v2720 = vld [vmem:[#allocation10] sm:$0x1]
    %v2722 = vlaneseq
    %v2723 = vshrl.u32 %v2722, 7
    %v2724 = vsub.s32 0, %v2723
    %v2725 = vrot.slane %v2720, %v2724
    %vm2727 = vcmask 15360
    %v2729 = vsel %vm2727, %v2718, 0
    %vm2731 = vcmask 1041408
    %v2733 = vsel %vm2731, %v2719, 0
    %2735 = vmatprep.subr.mxu0 0.0
    %v2736 = vand.u32 %v2733, 4294901760
    %2737 = vmatpush1.msra.mxu0 %v2736
    %2738 = vmatprep.subr.mxu0 0.0
    %2739 = vmatpush1.msra.mxu0 0.0
    %2740 = vmatprep.subr.mxu0 0.0
    %2741 = vmatpush1.msra.mxu0 0.0
    %2742 = vmatprep.subr.mxu0 0.0
    %2743 = vmatpush1.msra.mxu0 0.0
    %2744 = vmatprep.subr.mxu0 0.0
    %2745 = vmatpush1.msra.mxu0 0.0
    %2746 = vmatprep.subr.mxu0 0.0
    %2747 = vmatpush1.msra.mxu0 0.0
    %2748 = vmatprep.subr.mxu0 0.0
    %2749 = vmatpush1.msra.mxu0 0.0
    %2750 = vmatprep.subr.mxu0 0.0
    %2751 = vmatpush1.msra.mxu0 0.0
    %2752 = vmatprep.subr.mxu0 0.0
    %2753 = vmatpush1.msra.mxu0 0.0
    %2754 = vmatprep.subr.mxu0 0.0
    %2755 = vmatpush1.msra.mxu0 0.0
    %2756 = vmatprep.subr.mxu0 0.0
    %2757 = vmatpush1.msra.mxu0 0.0
    %2758 = vmatprep.subr.mxu0 0.0
    %2759 = vmatpush1.msra.mxu0 0.0
    %2760 = vmatprep.subr.mxu0 0.0
    %2761 = vmatpush1.msra.mxu0 0.0
    %2762 = vmatprep.subr.mxu0 0.0
    %2763 = vmatpush1.msra.mxu0 0.0
    %2764 = vmatprep.subr.mxu0 0.0
    %2765 = vmatpush1.msra.mxu0 0.0
    %2766 = vmatprep.subr.mxu0 0.0
    %2767 = vmatpush1.msra.mxu0 0.0
    %2768 = vmatprep.subr.mxu0 0.0
    %2769 = vmatpush1.msra.mxu0 0.0
    %2770 = vmatprep.subr.mxu0 0.0
    %2771 = vmatpush1.msra.mxu0 0.0
    %2772 = vmatprep.subr.mxu0 0.0
    %2773 = vmatpush1.msra.mxu0 0.0
    %2774 = vmatprep.subr.mxu0 0.0
    %2775 = vmatpush1.msra.mxu0 0.0
    %2776 = vmatprep.subr.mxu0 0.0
    %2777 = vmatpush1.msra.mxu0 0.0
    %2778 = vmatprep.subr.mxu0 0.0
    %2779 = vmatpush1.msra.mxu0 0.0
    %2780 = vmatprep.subr.mxu0 0.0
    %2781 = vmatpush1.msra.mxu0 0.0
    %2782 = vmatprep.subr.mxu0 0.0
    %2783 = vmatpush1.msra.mxu0 0.0
    %2784 = vmatprep.subr.mxu0 0.0
    %2785 = vmatpush1.msra.mxu0 0.0
    %2786 = vmatprep.subr.mxu0 0.0
    %2787 = vmatpush1.msra.mxu0 0.0
    %2788 = vmatprep.subr.mxu0 0.0
    %2789 = vmatpush1.msra.mxu0 0.0
    %2790 = vmatprep.subr.mxu0 0.0
    %2791 = vmatpush1.msra.mxu0 0.0
    %2792 = vmatprep.subr.mxu0 0.0
    %2793 = vmatpush1.msra.mxu0 0.0
    %2794 = vmatprep.subr.mxu0 0.0
    %2795 = vmatpush1.msra.mxu0 0.0
    %2796 = vmatprep.subr.mxu0 0.0
    %2797 = vmatpush1.msra.mxu0 0.0
    %2798 = vmatprep.subr.mxu0 0.0
    %2799 = vmatpush1.msra.mxu0 0.0
    %2800 = vmatprep.mubr.f32.mxu0 0.0
    %v2801 = vand.u32 %v2729, 4294901760
    %v2802 = vsub.f32 %v2729, %v2801
    %v2803 = vand.u32 %v2802, 4294901760
    %v2804 = vsub.f32 %v2802, %v2803
    %v2805 = vand.u32 %v2804, 4294901760
    %2806 = vmatmul.mubr.f32.gmra.mrb[0].mxu0 %v2805
    %v2807 = vpop.f32.mrb[0].mxu0
    %v2808 = vadd.f32 %v2725, %v2807
    %v2809 = vpop.f32.mrb[0].mxu0
    %2810 = vdwg.mxu0
    %2811 = vmatprep.subr.mxu0 0.0
    %v2812 = vand.u32 %v2733, 4294901760
    %v2813 = vsub.f32 %v2733, %v2812
    %v2814 = vand.u32 %v2813, 4294901760
    %v2815 = vsub.f32 %v2813, %v2814
    %v2816 = vand.u32 %v2815, 4294901760
    %2817 = vmatpush1.msra.mxu0 %v2816
    %2818 = vmatprep.subr.mxu0 0.0
    %2819 = vmatpush1.msra.mxu0 0.0
    %2820 = vmatprep.subr.mxu0 0.0
    %2821 = vmatpush1.msra.mxu0 0.0
    %2822 = vmatprep.subr.mxu0 0.0
    %2823 = vmatpush1.msra.mxu0 0.0
    %2824 = vmatprep.subr.mxu0 0.0
    %2825 = vmatpush1.msra.mxu0 0.0
    %2826 = vmatprep.subr.mxu0 0.0
    %2827 = vmatpush1.msra.mxu0 0.0
    %2828 = vmatprep.subr.mxu0 0.0
    %2829 = vmatpush1.msra.mxu0 0.0
    %2830 = vmatprep.subr.mxu0 0.0
    %2831 = vmatpush1.msra.mxu0 0.0
    %2832 = vmatprep.subr.mxu0 0.0
    %2833 = vmatpush1.msra.mxu0 0.0
    %2834 = vmatprep.subr.mxu0 0.0
    %2835 = vmatpush1.msra.mxu0 0.0
    %2836 = vmatprep.subr.mxu0 0.0
    %2837 = vmatpush1.msra.mxu0 0.0
    %2838 = vmatprep.subr.mxu0 0.0
    %2839 = vmatpush1.msra.mxu0 0.0
    %2840 = vmatprep.subr.mxu0 0.0
    %2841 = vmatpush1.msra.mxu0 0.0
    %2842 = vmatprep.subr.mxu0 0.0
    %2843 = vmatpush1.msra.mxu0 0.0
    %2844 = vmatprep.subr.mxu0 0.0
    %2845 = vmatpush1.msra.mxu0 0.0
    %2846 = vmatprep.subr.mxu0 0.0
    %2847 = vmatpush1.msra.mxu0 0.0
    %2848 = vmatprep.subr.mxu0 0.0
    %2849 = vmatpush1.msra.mxu0 0.0
    %2850 = vmatprep.subr.mxu0 0.0
    %2851 = vmatpush1.msra.mxu0 0.0
    %2852 = vmatprep.subr.mxu0 0.0
    %2853 = vmatpush1.msra.mxu0 0.0
    %2854 = vmatprep.subr.mxu0 0.0
    %2855 = vmatpush1.msra.mxu0 0.0
    %2856 = vmatprep.subr.mxu0 0.0
    %2857 = vmatpush1.msra.mxu0 0.0
    %2858 = vmatprep.subr.mxu0 0.0
    %2859 = vmatpush1.msra.mxu0 0.0
    %2860 = vmatprep.subr.mxu0 0.0
    %2861 = vmatpush1.msra.mxu0 0.0
    %2862 = vmatprep.subr.mxu0 0.0
    %2863 = vmatpush1.msra.mxu0 0.0
    %2864 = vmatprep.subr.mxu0 0.0
    %2865 = vmatpush1.msra.mxu0 0.0
    %2866 = vmatprep.subr.mxu0 0.0
    %2867 = vmatpush1.msra.mxu0 0.0
    %2868 = vmatprep.subr.mxu0 0.0
    %2869 = vmatpush1.msra.mxu0 0.0
    %2870 = vmatprep.subr.mxu0 0.0
    %2871 = vmatpush1.msra.mxu0 0.0
    %2872 = vmatprep.subr.mxu0 0.0
    %2873 = vmatpush1.msra.mxu0 0.0
    %2874 = vmatprep.subr.mxu0 0.0
    %2875 = vmatpush1.msra.mxu0 0.0
    %2876 = vmatprep.subr.mxu0 0.0
    %2877 = vmatpush1.msra.mxu0 0.0
    %2878 = vmatprep.subr.mxu0 0.0
    %2879 = vmatpush1.msra.mxu0 0.0
    %2880 = vmatprep.mubr.f32.mxu0 0.0
    %v2881 = vand.u32 %v2729, 4294901760
    %2882 = vmatmul.mubr.f32.gmra.mrb[0].mxu0 %v2881
    %v2883 = vpop.f32.mrb[0].mxu0
    %v2884 = vadd.f32 %v2808, %v2883
    %v2885 = vpop.f32.mrb[0].mxu0
    %2886 = vdwg.mxu0
    %2887 = vmatprep.subr.mxu0 0.0
    %v2888 = vand.u32 %v2733, 4294901760
    %v2889 = vsub.f32 %v2733, %v2888
    %2890 = vmatpush1.msra.mxu0 %v2889
    %2891 = vmatprep.subr.mxu0 0.0
    %2892 = vmatpush1.msra.mxu0 0.0
    %2893 = vmatprep.subr.mxu0 0.0
    %2894 = vmatpush1.msra.mxu0 0.0
    %2895 = vmatprep.subr.mxu0 0.0
    %2896 = vmatpush1.msra.mxu0 0.0
    %2897 = vmatprep.subr.mxu0 0.0
    %2898 = vmatpush1.msra.mxu0 0.0
    %2899 = vmatprep.subr.mxu0 0.0
    %2900 = vmatpush1.msra.mxu0 0.0
    %2901 = vmatprep.subr.mxu0 0.0
    %2902 = vmatpush1.msra.mxu0 0.0
    %2903 = vmatprep.subr.mxu0 0.0
    %2904 = vmatpush1.msra.mxu0 0.0
    %2905 = vmatprep.subr.mxu0 0.0
    %2906 = vmatpush1.msra.mxu0 0.0
    %2907 = vmatprep.subr.mxu0 0.0
    %2908 = vmatpush1.msra.mxu0 0.0
    %2909 = vmatprep.subr.mxu0 0.0
    %2910 = vmatpush1.msra.mxu0 0.0
    %2911 = vmatprep.subr.mxu0 0.0
    %2912 = vmatpush1.msra.mxu0 0.0
    %2913 = vmatprep.subr.mxu0 0.0
    %2914 = vmatpush1.msra.mxu0 0.0
    %2915 = vmatprep.subr.mxu0 0.0
    %2916 = vmatpush1.msra.mxu0 0.0
    %2917 = vmatprep.subr.mxu0 0.0
    %2918 = vmatpush1.msra.mxu0 0.0
    %2919 = vmatprep.subr.mxu0 0.0
    %2920 = vmatpush1.msra.mxu0 0.0
    %2921 = vmatprep.subr.mxu0 0.0
    %2922 = vmatpush1.msra.mxu0 0.0
    %2923 = vmatprep.subr.mxu0 0.0
    %2924 = vmatpush1.msra.mxu0 0.0
    %2925 = vmatprep.subr.mxu0 0.0
    %2926 = vmatpush1.msra.mxu0 0.0
    %2927 = vmatprep.subr.mxu0 0.0
    %2928 = vmatpush1.msra.mxu0 0.0
    %2929 = vmatprep.subr.mxu0 0.0
    %2930 = vmatpush1.msra.mxu0 0.0
    %2931 = vmatprep.subr.mxu0 0.0
    %2932 = vmatpush1.msra.mxu0 0.0
    %2933 = vmatprep.subr.mxu0 0.0
    %2934 = vmatpush1.msra.mxu0 0.0
    %2935 = vmatprep.subr.mxu0 0.0
    %2936 = vmatpush1.msra.mxu0 0.0
    %2937 = vmatprep.subr.mxu0 0.0
    %2938 = vmatpush1.msra.mxu0 0.0
    %2939 = vmatprep.subr.mxu0 0.0
    %2940 = vmatpush1.msra.mxu0 0.0
    %2941 = vmatprep.subr.mxu0 0.0
    %2942 = vmatpush1.msra.mxu0 0.0
    %2943 = vmatprep.subr.mxu0 0.0
    %2944 = vmatpush1.msra.mxu0 0.0
    %2945 = vmatprep.subr.mxu0 0.0
    %2946 = vmatpush1.msra.mxu0 0.0
    %2947 = vmatprep.subr.mxu0 0.0
    %2948 = vmatpush1.msra.mxu0 0.0
    %2949 = vmatprep.subr.mxu0 0.0
    %2950 = vmatpush1.msra.mxu0 0.0
    %2951 = vmatprep.subr.mxu0 0.0
    %2952 = vmatpush1.msra.mxu0 0.0
    %2953 = vmatprep.mubr.f32.mxu0 0.0
    %v2954 = vand.u32 %v2729, 4294901760
    %v2955 = vsub.f32 %v2729, %v2954
    %2956 = vmatmul.mubr.f32.gmra.mrb[0].mxu0 %v2955
    %v2957 = vpop.f32.mrb[0].mxu0
    %v2958 = vadd.f32 %v2884, %v2957
    %v2959 = vpop.f32.mrb[0].mxu0
    %2960 = vdwg.mxu0
    %2961 = vmatprep.subr.mxu0 0.0
    %v2962 = vand.u32 %v2733, 4294901760
    %2963 = vmatpush1.msra.mxu0 %v2962
    %2964 = vmatprep.subr.mxu0 0.0
    %2965 = vmatpush1.msra.mxu0 0.0
    %2966 = vmatprep.subr.mxu0 0.0
    %2967 = vmatpush1.msra.mxu0 0.0
    %2968 = vmatprep.subr.mxu0 0.0
    %2969 = vmatpush1.msra.mxu0 0.0
    %2970 = vmatprep.subr.mxu0 0.0
    %2971 = vmatpush1.msra.mxu0 0.0
    %2972 = vmatprep.subr.mxu0 0.0
    %2973 = vmatpush1.msra.mxu0 0.0
    %2974 = vmatprep.subr.mxu0 0.0
    %2975 = vmatpush1.msra.mxu0 0.0
    %2976 = vmatprep.subr.mxu0 0.0
    %2977 = vmatpush1.msra.mxu0 0.0
    %2978 = vmatprep.subr.mxu0 0.0
    %2979 = vmatpush1.msra.mxu0 0.0
    %2980 = vmatprep.subr.mxu0 0.0
    %2981 = vmatpush1.msra.mxu0 0.0
    %2982 = vmatprep.subr.mxu0 0.0
    %2983 = vmatpush1.msra.mxu0 0.0
    %2984 = vmatprep.subr.mxu0 0.0
    %2985 = vmatpush1.msra.mxu0 0.0
    %2986 = vmatprep.subr.mxu0 0.0
    %2987 = vmatpush1.msra.mxu0 0.0
    %2988 = vmatprep.subr.mxu0 0.0
    %2989 = vmatpush1.msra.mxu0 0.0
    %2990 = vmatprep.subr.mxu0 0.0
    %2991 = vmatpush1.msra.mxu0 0.0
    %2992 = vmatprep.subr.mxu0 0.0
    %2993 = vmatpush1.msra.mxu0 0.0
    %2994 = vmatprep.subr.mxu0 0.0
    %2995 = vmatpush1.msra.mxu0 0.0
    %2996 = vmatprep.subr.mxu0 0.0
    %2997 = vmatpush1.msra.mxu0 0.0
    %2998 = vmatprep.subr.mxu0 0.0
    %2999 = vmatpush1.msra.mxu0 0.0
    %3000 = vmatprep.subr.mxu0 0.0
    %3001 = vmatpush1.msra.mxu0 0.0
    %3002 = vmatprep.subr.mxu0 0.0
    %3003 = vmatpush1.msra.mxu0 0.0
    %3004 = vmatprep.subr.mxu0 0.0
    %3005 = vmatpush1.msra.mxu0 0.0
    %3006 = vmatprep.subr.mxu0 0.0
    %3007 = vmatpush1.msra.mxu0 0.0
    %3008 = vmatprep.subr.mxu0 0.0
    %3009 = vmatpush1.msra.mxu0 0.0
    %3010 = vmatprep.subr.mxu0 0.0
    %3011 = vmatpush1.msra.mxu0 0.0
    %3012 = vmatprep.subr.mxu0 0.0
    %3013 = vmatpush1.msra.mxu0 0.0
    %3014 = vmatprep.subr.mxu0 0.0
    %3015 = vmatpush1.msra.mxu0 0.0
    %3016 = vmatprep.subr.mxu0 0.0
    %3017 = vmatpush1.msra.mxu0 0.0
    %3018 = vmatprep.subr.mxu0 0.0
    %3019 = vmatpush1.msra.mxu0 0.0
    %3020 = vmatprep.subr.mxu0 0.0
    %3021 = vmatpush1.msra.mxu0 0.0
    %3022 = vmatprep.subr.mxu0 0.0
    %3023 = vmatpush1.msra.mxu0 0.0
    %3024 = vmatprep.subr.mxu0 0.0
    %3025 = vmatpush1.msra.mxu0 0.0
    %3026 = vmatprep.mubr.f32.mxu0 0.0
    %v3027 = vand.u32 %v2729, 4294901760
    %v3028 = vsub.f32 %v2729, %v3027
    %v3029 = vand.u32 %v3028, 4294901760
    %3030 = vmatmul.mubr.f32.gmra.mrb[0].mxu0 %v3029
    %v3031 = vpop.f32.mrb[0].mxu0
    %v3032 = vadd.f32 %v2958, %v3031
    %v3033 = vpop.f32.mrb[0].mxu0
    %3034 = vdwg.mxu0
    %3035 = vmatprep.subr.mxu0 0.0
    %v3036 = vand.u32 %v2733, 4294901760
    %v3037 = vsub.f32 %v2733, %v3036
    %v3038 = vand.u32 %v3037, 4294901760
    %3039 = vmatpush1.msra.mxu0 %v3038
    %3040 = vmatprep.subr.mxu0 0.0
    %3041 = vmatpush1.msra.mxu0 0.0
    %3042 = vmatprep.subr.mxu0 0.0
    %3043 = vmatpush1.msra.mxu0 0.0
    %3044 = vmatprep.subr.mxu0 0.0
    %3045 = vmatpush1.msra.mxu0 0.0
    %3046 = vmatprep.subr.mxu0 0.0
    %3047 = vmatpush1.msra.mxu0 0.0
    %3048 = vmatprep.subr.mxu0 0.0
    %3049 = vmatpush1.msra.mxu0 0.0
    %3050 = vmatprep.subr.mxu0 0.0
    %3051 = vmatpush1.msra.mxu0 0.0
    %3052 = vmatprep.subr.mxu0 0.0
    %3053 = vmatpush1.msra.mxu0 0.0
    %3054 = vmatprep.subr.mxu0 0.0
    %3055 = vmatpush1.msra.mxu0 0.0
    %3056 = vmatprep.subr.mxu0 0.0
    %3057 = vmatpush1.msra.mxu0 0.0
    %3058 = vmatprep.subr.mxu0 0.0
    %3059 = vmatpush1.msra.mxu0 0.0
    %3060 = vmatprep.subr.mxu0 0.0
    %3061 = vmatpush1.msra.mxu0 0.0
    %3062 = vmatprep.subr.mxu0 0.0
    %3063 = vmatpush1.msra.mxu0 0.0
    %3064 = vmatprep.subr.mxu0 0.0
    %3065 = vmatpush1.msra.mxu0 0.0
    %3066 = vmatprep.subr.mxu0 0.0
    %3067 = vmatpush1.msra.mxu0 0.0
    %3068 = vmatprep.subr.mxu0 0.0
    %3069 = vmatpush1.msra.mxu0 0.0
    %3070 = vmatprep.subr.mxu0 0.0
    %3071 = vmatpush1.msra.mxu0 0.0
    %3072 = vmatprep.subr.mxu0 0.0
    %3073 = vmatpush1.msra.mxu0 0.0
    %3074 = vmatprep.subr.mxu0 0.0
    %3075 = vmatpush1.msra.mxu0 0.0
    %3076 = vmatprep.subr.mxu0 0.0
    %3077 = vmatpush1.msra.mxu0 0.0
    %3078 = vmatprep.subr.mxu0 0.0
    %3079 = vmatpush1.msra.mxu0 0.0
    %3080 = vmatprep.subr.mxu0 0.0
    %3081 = vmatpush1.msra.mxu0 0.0
    %3082 = vmatprep.subr.mxu0 0.0
    %3083 = vmatpush1.msra.mxu0 0.0
    %3084 = vmatprep.subr.mxu0 0.0
    %3085 = vmatpush1.msra.mxu0 0.0
    %3086 = vmatprep.subr.mxu0 0.0
    %3087 = vmatpush1.msra.mxu0 0.0
    %3088 = vmatprep.subr.mxu0 0.0
    %3089 = vmatpush1.msra.mxu0 0.0
    %3090 = vmatprep.subr.mxu0 0.0
    %3091 = vmatpush1.msra.mxu0 0.0
    %3092 = vmatprep.subr.mxu0 0.0
    %3093 = vmatpush1.msra.mxu0 0.0
    %3094 = vmatprep.subr.mxu0 0.0
    %3095 = vmatpush1.msra.mxu0 0.0
    %3096 = vmatprep.subr.mxu0 0.0
    %3097 = vmatpush1.msra.mxu0 0.0
    %3098 = vmatprep.subr.mxu0 0.0
    %3099 = vmatpush1.msra.mxu0 0.0
    %3100 = vmatprep.subr.mxu0 0.0
    %3101 = vmatpush1.msra.mxu0 0.0
    %3102 = vmatprep.mubr.f32.mxu0 0.0
    %v3103 = vand.u32 %v2729, 4294901760
    %3104 = vmatmul.mubr.f32.gmra.mrb[0].mxu0 %v3103
    %v3105 = vpop.f32.mrb[0].mxu0
    %v3106 = vadd.f32 %v3032, %v3105
    %v3107 = vpop.f32.mrb[0].mxu0
    %3108 = vdwg.mxu0
    %3109 = vmatprep.subr.mxu0 0.0
    %v3110 = vand.u32 %v2733, 4294901760
    %3111 = vmatpush1.msra.mxu0 %v3110
    %3112 = vmatprep.subr.mxu0 0.0
    %3113 = vmatpush1.msra.mxu0 0.0
    %3114 = vmatprep.subr.mxu0 0.0
    %3115 = vmatpush1.msra.mxu0 0.0
    %3116 = vmatprep.subr.mxu0 0.0
    %3117 = vmatpush1.msra.mxu0 0.0
    %3118 = vmatprep.subr.mxu0 0.0
    %3119 = vmatpush1.msra.mxu0 0.0
    %3120 = vmatprep.subr.mxu0 0.0
    %3121 = vmatpush1.msra.mxu0 0.0
    %3122 = vmatprep.subr.mxu0 0.0
    %3123 = vmatpush1.msra.mxu0 0.0
    %3124 = vmatprep.subr.mxu0 0.0
    %3125 = vmatpush1.msra.mxu0 0.0
    %3126 = vmatprep.subr.mxu0 0.0
    %3127 = vmatpush1.msra.mxu0 0.0
    %3128 = vmatprep.subr.mxu0 0.0
    %3129 = vmatpush1.msra.mxu0 0.0
    %3130 = vmatprep.subr.mxu0 0.0
    %3131 = vmatpush1.msra.mxu0 0.0
    %3132 = vmatprep.subr.mxu0 0.0
    %3133 = vmatpush1.msra.mxu0 0.0
    %3134 = vmatprep.subr.mxu0 0.0
    %3135 = vmatpush1.msra.mxu0 0.0
    %3136 = vmatprep.subr.mxu0 0.0
    %3137 = vmatpush1.msra.mxu0 0.0
    %3138 = vmatprep.subr.mxu0 0.0
    %3139 = vmatpush1.msra.mxu0 0.0
    %3140 = vmatprep.subr.mxu0 0.0
    %3141 = vmatpush1.msra.mxu0 0.0
    %3142 = vmatprep.subr.mxu0 0.0
    %3143 = vmatpush1.msra.mxu0 0.0
    %3144 = vmatprep.subr.mxu0 0.0
    %3145 = vmatpush1.msra.mxu0 0.0
    %3146 = vmatprep.subr.mxu0 0.0
    %3147 = vmatpush1.msra.mxu0 0.0
    %3148 = vmatprep.subr.mxu0 0.0
    %3149 = vmatpush1.msra.mxu0 0.0
    %3150 = vmatprep.subr.mxu0 0.0
    %3151 = vmatpush1.msra.mxu0 0.0
    %3152 = vmatprep.subr.mxu0 0.0
    %3153 = vmatpush1.msra.mxu0 0.0
    %3154 = vmatprep.subr.mxu0 0.0
    %3155 = vmatpush1.msra.mxu0 0.0
    %3156 = vmatprep.subr.mxu0 0.0
    %3157 = vmatpush1.msra.mxu0 0.0
    %3158 = vmatprep.subr.mxu0 0.0
    %3159 = vmatpush1.msra.mxu0 0.0
    %3160 = vmatprep.subr.mxu0 0.0
    %3161 = vmatpush1.msra.mxu0 0.0
    %3162 = vmatprep.subr.mxu0 0.0
    %3163 = vmatpush1.msra.mxu0 0.0
    %3164 = vmatprep.subr.mxu0 0.0
    %3165 = vmatpush1.msra.mxu0 0.0
    %3166 = vmatprep.subr.mxu0 0.0
    %3167 = vmatpush1.msra.mxu0 0.0
    %3168 = vmatprep.subr.mxu0 0.0
    %3169 = vmatpush1.msra.mxu0 0.0
    %3170 = vmatprep.subr.mxu0 0.0
    %3171 = vmatpush1.msra.mxu0 0.0
    %3172 = vmatprep.subr.mxu0 0.0
    %3173 = vmatpush1.msra.mxu0 0.0
    %3174 = vmatprep.mubr.f32.mxu0 0.0
    %v3175 = vand.u32 %v2729, 4294901760
    %3176 = vmatmul.mubr.f32.gmra.mrb[0].mxu0 %v3175
    %v3177 = vpop.f32.mrb[0].mxu0
    %v3178 = vadd.f32 %v3106, %v3177
    %v3179 = vpop.f32.mrb[0].mxu0
    %3180 = vdwg.mxu0
    %v3181 = vxor.u32 %v3178, 2147483648
    %v3182 = vmul.f32 %v3181, 1.442695
    %v3183 = vpow.pop %v3182
    %v3184 = vadd.f32 %v3183, 1.0
    %v3185 = vrcp.pop %v3184
    %v3186 = vmul.f32 1.0, %v3185
    %v3187 = vmul.u32 %v83, 16
    %v3188 = vmul.u32 %v84, 16
    %v3189 = vmul.u32 %v85, 16
    %v3190 = vmul.u32 %v86, 16
    %v3191 = vadd.s32 %v148, 128
    %v3192 = vadd.s32 %v148, 256
    %v3193 = vadd.s32 %v148, 384
    %vm3194 = vcmp.ge.s32.totalorder %v148, %v3187
    %vm3195 = vcmp.ge.s32.totalorder %v3191, %v3187
    %vm3196 = vcmp.ge.s32.totalorder %v3192, %v3187
    %vm3197 = vcmp.ge.s32.totalorder %v3193, %v3187
    %vm3198 = vcmp.ge.s32.totalorder %v148, %v3188
    %vm3199 = vcmp.ge.s32.totalorder %v3191, %v3188
    %vm3200 = vcmp.ge.s32.totalorder %v3192, %v3188
    %vm3201 = vcmp.ge.s32.totalorder %v3193, %v3188
    %vm3202 = vcmp.ge.s32.totalorder %v148, %v3189
    %vm3203 = vcmp.ge.s32.totalorder %v3191, %v3189
    %vm3204 = vcmp.ge.s32.totalorder %v3192, %v3189
    %vm3205 = vcmp.ge.s32.totalorder %v3193, %v3189
    %vm3206 = vcmp.ge.s32.totalorder %v148, %v3190
    %vm3207 = vcmp.ge.s32.totalorder %v3191, %v3190
    %vm3208 = vcmp.ge.s32.totalorder %v3192, %v3190
    %vm3209 = vcmp.ge.s32.totalorder %v3193, %v3190
    %v3210 = vadd.s32 %v3187, 16
    %v3211 = vadd.s32 %v3188, 16
    %v3212 = vadd.s32 %v3189, 16
    %v3213 = vadd.s32 %v3190, 16
    %vm3214 = vcmp.lt.s32.totalorder %v148, %v3210
    %vm3215 = vcmp.lt.s32.totalorder %v3191, %v3210
    %vm3216 = vcmp.lt.s32.totalorder %v3192, %v3210
    %vm3217 = vcmp.lt.s32.totalorder %v3193, %v3210
    %vm3218 = vcmp.lt.s32.totalorder %v148, %v3211
    %vm3219 = vcmp.lt.s32.totalorder %v3191, %v3211
    %vm3220 = vcmp.lt.s32.totalorder %v3192, %v3211
    %vm3221 = vcmp.lt.s32.totalorder %v3193, %v3211
    %vm3222 = vcmp.lt.s32.totalorder %v148, %v3212
    %vm3223 = vcmp.lt.s32.totalorder %v3191, %v3212
    %vm3224 = vcmp.lt.s32.totalorder %v3192, %v3212
    %vm3225 = vcmp.lt.s32.totalorder %v3193, %v3212
    %vm3226 = vcmp.lt.s32.totalorder %v148, %v3213
    %vm3227 = vcmp.lt.s32.totalorder %v3191, %v3213
    %vm3228 = vcmp.lt.s32.totalorder %v3192, %v3213
    %vm3229 = vcmp.lt.s32.totalorder %v3193, %v3213
    %vm3230 = vmand %vm3194, %vm3214
    %vm3231 = vmand %vm3195, %vm3215
    %vm3232 = vmand %vm3196, %vm3216
    %vm3233 = vmand %vm3197, %vm3217
    %vm3234 = vmand %vm3198, %vm3218
    %vm3235 = vmand %vm3199, %vm3219
    %vm3236 = vmand %vm3200, %vm3220
    %vm3237 = vmand %vm3201, %vm3221
    %vm3238 = vmand %vm3202, %vm3222
    %vm3239 = vmand %vm3203, %vm3223
    %vm3240 = vmand %vm3204, %vm3224
    %vm3241 = vmand %vm3205, %vm3225
    %vm3242 = vmand %vm3206, %vm3226
    %vm3243 = vmand %vm3207, %vm3227
    %vm3244 = vmand %vm3208, %vm3228
    %vm3245 = vmand %vm3209, %vm3229
    %v3246 = vsel %vm3230, 1, 0
    %v3247 = vsel %vm3231, 1, 0
    %v3248 = vsel %vm3232, 1, 0
    %v3249 = vsel %vm3233, 1, 0
    %v3250 = vsel %vm3234, 1, 0
    %v3251 = vsel %vm3235, 1, 0
    %v3252 = vsel %vm3236, 1, 0
    %v3253 = vsel %vm3237, 1, 0
    %v3254 = vsel %vm3238, 1, 0
    %v3255 = vsel %vm3239, 1, 0
    %v3256 = vsel %vm3240, 1, 0
    %v3257 = vsel %vm3241, 1, 0
    %v3258 = vsel %vm3242, 1, 0
    %v3259 = vsel %vm3243, 1, 0
    %v3260 = vsel %vm3244, 1, 0
    %v3261 = vsel %vm3245, 1, 0
    %v3262 = vcvt.s32.f32 %v3246
    %v3263 = vcvt.s32.f32 %v3247
    %v3264 = vcvt.s32.f32 %v3248
    %v3265 = vcvt.s32.f32 %v3249
    %v3266 = vcvt.s32.f32 %v3250
    %v3267 = vcvt.s32.f32 %v3251
    %v3268 = vcvt.s32.f32 %v3252
    %v3269 = vcvt.s32.f32 %v3253
    %v3270 = vcvt.s32.f32 %v3254
    %v3271 = vcvt.s32.f32 %v3255
    %v3272 = vcvt.s32.f32 %v3256
    %v3273 = vcvt.s32.f32 %v3257
    %v3274 = vcvt.s32.f32 %v3258
    %v3275 = vcvt.s32.f32 %v3259
    %v3276 = vcvt.s32.f32 %v3260
    %v3277 = vcvt.s32.f32 %v3261
    %v3279 = vsel %vm2229, %v3186, 0
    %v3281 = vand.u32 %v3263, 4294901760
    %3282 = vmatprep.subr.mxu0 %v3281
    %v3283 = vand.u32 %v3262, 4294901760
    %3284 = vmatpush1.msra.mxu0 %v3283
    %v3285 = vand.u32 %v3267, 4294901760
    %3286 = vmatprep.subr.mxu0 %v3285
    %v3287 = vand.u32 %v3266, 4294901760
    %3288 = vmatpush1.msra.mxu0 %v3287
    %v3289 = vand.u32 %v3271, 4294901760
    %3290 = vmatprep.subr.mxu0 %v3289
    %v3291 = vand.u32 %v3270, 4294901760
    %3292 = vmatpush1.msra.mxu0 %v3291
    %v3293 = vand.u32 %v3275, 4294901760
    %3294 = vmatprep.subr.mxu0 %v3293
    %v3295 = vand.u32 %v3274, 4294901760
    %3296 = vmatpush1.msra.mxu0 %v3295
    %3297 = vmatprep.subr.mxu0 0.0
    %3298 = vmatpush1.msra.mxu0 0.0
    %3299 = vmatprep.subr.mxu0 0.0
    %3300 = vmatpush1.msra.mxu0 0.0
    %3301 = vmatprep.subr.mxu0 0.0
    %3302 = vmatpush1.msra.mxu0 0.0
    %3303 = vmatprep.subr.mxu0 0.0
    %3304 = vmatpush1.msra.mxu0 0.0
    %3305 = vmatprep.subr.mxu0 0.0
    %3306 = vmatpush1.msra.mxu0 0.0
    %3307 = vmatprep.subr.mxu0 0.0
    %3308 = vmatpush1.msra.mxu0 0.0
    %3309 = vmatprep.subr.mxu0 0.0
    %3310 = vmatpush1.msra.mxu0 0.0
    %3311 = vmatprep.subr.mxu0 0.0
    %3312 = vmatpush1.msra.mxu0 0.0
    %3313 = vmatprep.subr.mxu0 0.0
    %3314 = vmatpush1.msra.mxu0 0.0
    %3315 = vmatprep.subr.mxu0 0.0
    %3316 = vmatpush1.msra.mxu0 0.0
    %3317 = vmatprep.subr.mxu0 0.0
    %3318 = vmatpush1.msra.mxu0 0.0
    %3319 = vmatprep.subr.mxu0 0.0
    %3320 = vmatpush1.msra.mxu0 0.0
    %3321 = vmatprep.subr.mxu0 0.0
    %3322 = vmatpush1.msra.mxu0 0.0
    %3323 = vmatprep.subr.mxu0 0.0
    %3324 = vmatpush1.msra.mxu0 0.0
    %3325 = vmatprep.subr.mxu0 0.0
    %3326 = vmatpush1.msra.mxu0 0.0
    %3327 = vmatprep.subr.mxu0 0.0
    %3328 = vmatpush1.msra.mxu0 0.0
    %3329 = vmatprep.subr.mxu0 0.0
    %3330 = vmatpush1.msra.mxu0 0.0
    %3331 = vmatprep.subr.mxu0 0.0
    %3332 = vmatpush1.msra.mxu0 0.0
    %3333 = vmatprep.subr.mxu0 0.0
    %3334 = vmatpush1.msra.mxu0 0.0
    %3335 = vmatprep.subr.mxu0 0.0
    %3336 = vmatpush1.msra.mxu0 0.0
    %3337 = vmatprep.subr.mxu0 0.0
    %3338 = vmatpush1.msra.mxu0 0.0
    %3339 = vmatprep.subr.mxu0 0.0
    %3340 = vmatpush1.msra.mxu0 0.0
    %3341 = vmatprep.subr.mxu0 0.0
    %3342 = vmatpush1.msra.mxu0 0.0
    %3343 = vmatprep.subr.mxu0 0.0
    %3344 = vmatpush1.msra.mxu0 0.0
    %3345 = vmatprep.subr.mxu0 0.0
    %3346 = vmatpush1.msra.mxu0 0.0
    %3347 = vmatprep.subr.mxu0 0.0
    %3348 = vmatpush1.msra.mxu0 0.0
    %3349 = vmatprep.subr.mxu0 0.0
    %3350 = vmatpush1.msra.mxu0 0.0
    %3351 = vmatprep.subr.mxu0 0.0
    %3352 = vmatpush1.msra.mxu0 0.0
    %3353 = vmatprep.mubr.f32.mxu0 0.0
    %v3354 = vand.u32 %v3279, 4294901760
    %v3355 = vsub.f32 %v3279, %v3354
    %v3356 = vand.u32 %v3355, 4294901760
    %v3357 = vsub.f32 %v3355, %v3356
    %v3358 = vand.u32 %v3357, 4294901760
    %3359 = vmatmul.mubr.f32.gmra.mrb[0].mxu0 %v3358
    %v3360 = vpop.f32.mrb[0].mxu0
    %v3361 = vadd.f32 0.0, %v3360
    %v3362 = vpop.f32.mrb[0].mxu0
    %v3363 = vadd.f32 0.0, %v3362
    %3364 = vdwg.mxu0
    %v3365 = vand.u32 %v3263, 4294901760
    %v3366 = vsub.f32 %v3263, %v3365
    %v3367 = vand.u32 %v3366, 4294901760
    %v3368 = vsub.f32 %v3366, %v3367
    %v3369 = vand.u32 %v3368, 4294901760
    %3370 = vmatprep.subr.mxu0 %v3369
    %v3371 = vand.u32 %v3262, 4294901760
    %v3372 = vsub.f32 %v3262, %v3371
    %v3373 = vand.u32 %v3372, 4294901760
    %v3374 = vsub.f32 %v3372, %v3373
    %v3375 = vand.u32 %v3374, 4294901760
    %3376 = vmatpush1.msra.mxu0 %v3375
    %v3377 = vand.u32 %v3267, 4294901760
    %v3378 = vsub.f32 %v3267, %v3377
    %v3379 = vand.u32 %v3378, 4294901760
    %v3380 = vsub.f32 %v3378, %v3379
    %v3381 = vand.u32 %v3380, 4294901760
    %3382 = vmatprep.subr.mxu0 %v3381
    %v3383 = vand.u32 %v3266, 4294901760
    %v3384 = vsub.f32 %v3266, %v3383
    %v3385 = vand.u32 %v3384, 4294901760
    %v3386 = vsub.f32 %v3384, %v3385
    %v3387 = vand.u32 %v3386, 4294901760
    %3388 = vmatpush1.msra.mxu0 %v3387
    %v3389 = vand.u32 %v3271, 4294901760
    %v3390 = vsub.f32 %v3271, %v3389
    %v3391 = vand.u32 %v3390, 4294901760
    %v3392 = vsub.f32 %v3390, %v3391
    %v3393 = vand.u32 %v3392, 4294901760
    %3394 = vmatprep.subr.mxu0 %v3393
    %v3395 = vand.u32 %v3270, 4294901760
    %v3396 = vsub.f32 %v3270, %v3395
    %v3397 = vand.u32 %v3396, 4294901760
    %v3398 = vsub.f32 %v3396, %v3397
    %v3399 = vand.u32 %v3398, 4294901760
    %3400 = vmatpush1.msra.mxu0 %v3399
    %v3401 = vand.u32 %v3275, 4294901760
    %v3402 = vsub.f32 %v3275, %v3401
    %v3403 = vand.u32 %v3402, 4294901760
    %v3404 = vsub.f32 %v3402, %v3403
    %v3405 = vand.u32 %v3404, 4294901760
    %3406 = vmatprep.subr.mxu0 %v3405
    %v3407 = vand.u32 %v3274, 4294901760
    %v3408 = vsub.f32 %v3274, %v3407
    %v3409 = vand.u32 %v3408, 4294901760
    %v3410 = vsub.f32 %v3408, %v3409
    %v3411 = vand.u32 %v3410, 4294901760
    %3412 = vmatpush1.msra.mxu0 %v3411
    %3413 = vmatprep.subr.mxu0 0.0
    %3414 = vmatpush1.msra.mxu0 0.0
    %3415 = vmatprep.subr.mxu0 0.0
    %3416 = vmatpush1.msra.mxu0 0.0
    %3417 = vmatprep.subr.mxu0 0.0
    %3418 = vmatpush1.msra.mxu0 0.0
    %3419 = vmatprep.subr.mxu0 0.0
    %3420 = vmatpush1.msra.mxu0 0.0
    %3421 = vmatprep.subr.mxu0 0.0
    %3422 = vmatpush1.msra.mxu0 0.0
    %3423 = vmatprep.subr.mxu0 0.0
    %3424 = vmatpush1.msra.mxu0 0.0
    %3425 = vmatprep.subr.mxu0 0.0
    %3426 = vmatpush1.msra.mxu0 0.0
    %3427 = vmatprep.subr.mxu0 0.0
    %3428 = vmatpush1.msra.mxu0 0.0
    %3429 = vmatprep.subr.mxu0 0.0
    %3430 = vmatpush1.msra.mxu0 0.0
    %3431 = vmatprep.subr.mxu0 0.0
    %3432 = vmatpush1.msra.mxu0 0.0
    %3433 = vmatprep.subr.mxu0 0.0
    %3434 = vmatpush1.msra.mxu0 0.0
    %3435 = vmatprep.subr.mxu0 0.0
    %3436 = vmatpush1.msra.mxu0 0.0
    %3437 = vmatprep.subr.mxu0 0.0
    %3438 = vmatpush1.msra.mxu0 0.0
    %3439 = vmatprep.subr.mxu0 0.0
    %3440 = vmatpush1.msra.mxu0 0.0
    %3441 = vmatprep.subr.mxu0 0.0
    %3442 = vmatpush1.msra.mxu0 0.0
    %3443 = vmatprep.subr.mxu0 0.0
    %3444 = vmatpush1.msra.mxu0 0.0
    %3445 = vmatprep.subr.mxu0 0.0
    %3446 = vmatpush1.msra.mxu0 0.0
    %3447 = vmatprep.subr.mxu0 0.0
    %3448 = vmatpush1.msra.mxu0 0.0
    %3449 = vmatprep.subr.mxu0 0.0
    %3450 = vmatpush1.msra.mxu0 0.0
    %3451 = vmatprep.subr.mxu0 0.0
    %3452 = vmatpush1.msra.mxu0 0.0
    %3453 = vmatprep.subr.mxu0 0.0
    %3454 = vmatpush1.msra.mxu0 0.0
    %3455 = vmatprep.subr.mxu0 0.0
    %3456 = vmatpush1.msra.mxu0 0.0
    %3457 = vmatprep.subr.mxu0 0.0
    %3458 = vmatpush1.msra.mxu0 0.0
    %3459 = vmatprep.subr.mxu0 0.0
    %3460 = vmatpush1.msra.mxu0 0.0
    %3461 = vmatprep.subr.mxu0 0.0
    %3462 = vmatpush1.msra.mxu0 0.0
    %3463 = vmatprep.subr.mxu0 0.0
    %3464 = vmatpush1.msra.mxu0 0.0
    %3465 = vmatprep.subr.mxu0 0.0
    %3466 = vmatpush1.msra.mxu0 0.0
    %3467 = vmatprep.subr.mxu0 0.0
    %3468 = vmatpush1.msra.mxu0 0.0
    %3469 = vmatprep.mubr.f32.mxu0 0.0
    %v3470 = vand.u32 %v3279, 4294901760
    %3471 = vmatmul.mubr.f32.gmra.mrb[0].mxu0 %v3470
    %v3472 = vpop.f32.mrb[0].mxu0
    %v3473 = vadd.f32 %v3361, %v3472
    %v3474 = vpop.f32.mrb[0].mxu0
    %v3475 = vadd.f32 %v3363, %v3474
    %3476 = vdwg.mxu0
    %v3477 = vand.u32 %v3263, 4294901760
    %v3478 = vsub.f32 %v3263, %v3477
    %3479 = vmatprep.subr.mxu0 %v3478
    %v3480 = vand.u32 %v3262, 4294901760
    %v3481 = vsub.f32 %v3262, %v3480
    %3482 = vmatpush1.msra.mxu0 %v3481
    %v3483 = vand.u32 %v3267, 4294901760
    %v3484 = vsub.f32 %v3267, %v3483
    %3485 = vmatprep.subr.mxu0 %v3484
    %v3486 = vand.u32 %v3266, 4294901760
    %v3487 = vsub.f32 %v3266, %v3486
    %3488 = vmatpush1.msra.mxu0 %v3487
    %v3489 = vand.u32 %v3271, 4294901760
    %v3490 = vsub.f32 %v3271, %v3489
    %3491 = vmatprep.subr.mxu0 %v3490
    %v3492 = vand.u32 %v3270, 4294901760
    %v3493 = vsub.f32 %v3270, %v3492
    %3494 = vmatpush1.msra.mxu0 %v3493
    %v3495 = vand.u32 %v3275, 4294901760
    %v3496 = vsub.f32 %v3275, %v3495
    %3497 = vmatprep.subr.mxu0 %v3496
    %v3498 = vand.u32 %v3274, 4294901760
    %v3499 = vsub.f32 %v3274, %v3498
    %3500 = vmatpush1.msra.mxu0 %v3499
    %3501 = vmatprep.subr.mxu0 0.0
    %3502 = vmatpush1.msra.mxu0 0.0
    %3503 = vmatprep.subr.mxu0 0.0
    %3504 = vmatpush1.msra.mxu0 0.0
    %3505 = vmatprep.subr.mxu0 0.0
    %3506 = vmatpush1.msra.mxu0 0.0
    %3507 = vmatprep.subr.mxu0 0.0
    %3508 = vmatpush1.msra.mxu0 0.0
    %3509 = vmatprep.subr.mxu0 0.0
    %3510 = vmatpush1.msra.mxu0 0.0
    %3511 = vmatprep.subr.mxu0 0.0
    %3512 = vmatpush1.msra.mxu0 0.0
    %3513 = vmatprep.subr.mxu0 0.0
    %3514 = vmatpush1.msra.mxu0 0.0
    %3515 = vmatprep.subr.mxu0 0.0
    %3516 = vmatpush1.msra.mxu0 0.0
    %3517 = vmatprep.subr.mxu0 0.0
    %3518 = vmatpush1.msra.mxu0 0.0
    %3519 = vmatprep.subr.mxu0 0.0
    %3520 = vmatpush1.msra.mxu0 0.0
    %3521 = vmatprep.subr.mxu0 0.0
    %3522 = vmatpush1.msra.mxu0 0.0
    %3523 = vmatprep.subr.mxu0 0.0
    %3524 = vmatpush1.msra.mxu0 0.0
    %3525 = vmatprep.subr.mxu0 0.0
    %3526 = vmatpush1.msra.mxu0 0.0
    %3527 = vmatprep.subr.mxu0 0.0
    %3528 = vmatpush1.msra.mxu0 0.0
    %3529 = vmatprep.subr.mxu0 0.0
    %3530 = vmatpush1.msra.mxu0 0.0
    %3531 = vmatprep.subr.mxu0 0.0
    %3532 = vmatpush1.msra.mxu0 0.0
    %3533 = vmatprep.subr.mxu0 0.0
    %3534 = vmatpush1.msra.mxu0 0.0
    %3535 = vmatprep.subr.mxu0 0.0
    %3536 = vmatpush1.msra.mxu0 0.0
    %3537 = vmatprep.subr.mxu0 0.0
    %3538 = vmatpush1.msra.mxu0 0.0
    %3539 = vmatprep.subr.mxu0 0.0
    %3540 = vmatpush1.msra.mxu0 0.0
    %3541 = vmatprep.subr.mxu0 0.0
    %3542 = vmatpush1.msra.mxu0 0.0
    %3543 = vmatprep.subr.mxu0 0.0
    %3544 = vmatpush1.msra.mxu0 0.0
    %3545 = vmatprep.subr.mxu0 0.0
    %3546 = vmatpush1.msra.mxu0 0.0
    %3547 = vmatprep.subr.mxu0 0.0
    %3548 = vmatpush1.msra.mxu0 0.0
    %3549 = vmatprep.subr.mxu0 0.0
    %3550 = vmatpush1.msra.mxu0 0.0
    %3551 = vmatprep.subr.mxu0 0.0
    %3552 = vmatpush1.msra.mxu0 0.0
    %3553 = vmatprep.subr.mxu0 0.0
    %3554 = vmatpush1.msra.mxu0 0.0
    %3555 = vmatprep.subr.mxu0 0.0
    %3556 = vmatpush1.msra.mxu0 0.0
    %3557 = vmatprep.mubr.f32.mxu0 0.0
    %v3558 = vand.u32 %v3279, 4294901760
    %v3559 = vsub.f32 %v3279, %v3558
    %3560 = vmatmul.mubr.f32.gmra.mrb[0].mxu0 %v3559
    %v3561 = vpop.f32.mrb[0].mxu0
    %v3562 = vadd.f32 %v3473, %v3561
    %v3563 = vpop.f32.mrb[0].mxu0
    %v3564 = vadd.f32 %v3475, %v3563
    %3565 = vdwg.mxu0
    %v3566 = vand.u32 %v3263, 4294901760
    %3567 = vmatprep.subr.mxu0 %v3566
    %v3568 = vand.u32 %v3262, 4294901760
    %3569 = vmatpush1.msra.mxu0 %v3568
    %v3570 = vand.u32 %v3267, 4294901760
    %3571 = vmatprep.subr.mxu0 %v3570
    %v3572 = vand.u32 %v3266, 4294901760
    %3573 = vmatpush1.msra.mxu0 %v3572
    %v3574 = vand.u32 %v3271, 4294901760
    %3575 = vmatprep.subr.mxu0 %v3574
    %v3576 = vand.u32 %v3270, 4294901760
    %3577 = vmatpush1.msra.mxu0 %v3576
    %v3578 = vand.u32 %v3275, 4294901760
    %3579 = vmatprep.subr.mxu0 %v3578
    %v3580 = vand.u32 %v3274, 4294901760
    %3581 = vmatpush1.msra.mxu0 %v3580
    %3582 = vmatprep.subr.mxu0 0.0
    %3583 = vmatpush1.msra.mxu0 0.0
    %3584 = vmatprep.subr.mxu0 0.0
    %3585 = vmatpush1.msra.mxu0 0.0
    %3586 = vmatprep.subr.mxu0 0.0
    %3587 = vmatpush1.msra.mxu0 0.0
    %3588 = vmatprep.subr.mxu0 0.0
    %3589 = vmatpush1.msra.mxu0 0.0
    %3590 = vmatprep.subr.mxu0 0.0
    %3591 = vmatpush1.msra.mxu0 0.0
    %3592 = vmatprep.subr.mxu0 0.0
    %3593 = vmatpush1.msra.mxu0 0.0
    %3594 = vmatprep.subr.mxu0 0.0
    %3595 = vmatpush1.msra.mxu0 0.0
    %3596 = vmatprep.subr.mxu0 0.0
    %3597 = vmatpush1.msra.mxu0 0.0
    %3598 = vmatprep.subr.mxu0 0.0
    %3599 = vmatpush1.msra.mxu0 0.0
    %3600 = vmatprep.subr.mxu0 0.0
    %3601 = vmatpush1.msra.mxu0 0.0
    %3602 = vmatprep.subr.mxu0 0.0
    %3603 = vmatpush1.msra.mxu0 0.0
    %3604 = vmatprep.subr.mxu0 0.0
    %3605 = vmatpush1.msra.mxu0 0.0
    %3606 = vmatprep.subr.mxu0 0.0
    %3607 = vmatpush1.msra.mxu0 0.0
    %3608 = vmatprep.subr.mxu0 0.0
    %3609 = vmatpush1.msra.mxu0 0.0
    %3610 = vmatprep.subr.mxu0 0.0
    %3611 = vmatpush1.msra.mxu0 0.0
    %3612 = vmatprep.subr.mxu0 0.0
    %3613 = vmatpush1.msra.mxu0 0.0
    %3614 = vmatprep.subr.mxu0 0.0
    %3615 = vmatpush1.msra.mxu0 0.0
    %3616 = vmatprep.subr.mxu0 0.0
    %3617 = vmatpush1.msra.mxu0 0.0
    %3618 = vmatprep.subr.mxu0 0.0
    %3619 = vmatpush1.msra.mxu0 0.0
    %3620 = vmatprep.subr.mxu0 0.0
    %3621 = vmatpush1.msra.mxu0 0.0
    %3622 = vmatprep.subr.mxu0 0.0
    %3623 = vmatpush1.msra.mxu0 0.0
    %3624 = vmatprep.subr.mxu0 0.0
    %3625 = vmatpush1.msra.mxu0 0.0
    %3626 = vmatprep.subr.mxu0 0.0
    %3627 = vmatpush1.msra.mxu0 0.0
    %3628 = vmatprep.subr.mxu0 0.0
    %3629 = vmatpush1.msra.mxu0 0.0
    %3630 = vmatprep.subr.mxu0 0.0
    %3631 = vmatpush1.msra.mxu0 0.0
    %3632 = vmatprep.subr.mxu0 0.0
    %3633 = vmatpush1.msra.mxu0 0.0
    %3634 = vmatprep.subr.mxu0 0.0
    %3635 = vmatpush1.msra.mxu0 0.0
    %3636 = vmatprep.subr.mxu0 0.0
    %3637 = vmatpush1.msra.mxu0 0.0
    %3638 = vmatprep.mubr.f32.mxu0 0.0
    %v3639 = vand.u32 %v3279, 4294901760
    %v3640 = vsub.f32 %v3279, %v3639
    %v3641 = vand.u32 %v3640, 4294901760
    %3642 = vmatmul.mubr.f32.gmra.mrb[0].mxu0 %v3641
    %v3643 = vpop.f32.mrb[0].mxu0
    %v3644 = vadd.f32 %v3562, %v3643
    %v3645 = vpop.f32.mrb[0].mxu0
    %v3646 = vadd.f32 %v3564, %v3645
    %3647 = vdwg.mxu0
    %v3648 = vand.u32 %v3263, 4294901760
    %v3649 = vsub.f32 %v3263, %v3648
    %v3650 = vand.u32 %v3649, 4294901760
    %3651 = vmatprep.subr.mxu0 %v3650
    %v3652 = vand.u32 %v3262, 4294901760
    %v3653 = vsub.f32 %v3262, %v3652
    %v3654 = vand.u32 %v3653, 4294901760
    %3655 = vmatpush1.msra.mxu0 %v3654
    %v3656 = vand.u32 %v3267, 4294901760
    %v3657 = vsub.f32 %v3267, %v3656
    %v3658 = vand.u32 %v3657, 4294901760
    %3659 = vmatprep.subr.mxu0 %v3658
    %v3660 = vand.u32 %v3266, 4294901760
    %v3661 = vsub.f32 %v3266, %v3660
    %v3662 = vand.u32 %v3661, 4294901760
    %3663 = vmatpush1.msra.mxu0 %v3662
    %v3664 = vand.u32 %v3271, 4294901760
    %v3665 = vsub.f32 %v3271, %v3664
    %v3666 = vand.u32 %v3665, 4294901760
    %3667 = vmatprep.subr.mxu0 %v3666
    %v3668 = vand.u32 %v3270, 4294901760
    %v3669 = vsub.f32 %v3270, %v3668
    %v3670 = vand.u32 %v3669, 4294901760
    %3671 = vmatpush1.msra.mxu0 %v3670
    %v3672 = vand.u32 %v3275, 4294901760
    %v3673 = vsub.f32 %v3275, %v3672
    %v3674 = vand.u32 %v3673, 4294901760
    %3675 = vmatprep.subr.mxu0 %v3674
    %v3676 = vand.u32 %v3274, 4294901760
    %v3677 = vsub.f32 %v3274, %v3676
    %v3678 = vand.u32 %v3677, 4294901760
    %3679 = vmatpush1.msra.mxu0 %v3678
    %3680 = vmatprep.subr.mxu0 0.0
    %3681 = vmatpush1.msra.mxu0 0.0
    %3682 = vmatprep.subr.mxu0 0.0
    %3683 = vmatpush1.msra.mxu0 0.0
    %3684 = vmatprep.subr.mxu0 0.0
    %3685 = vmatpush1.msra.mxu0 0.0
    %3686 = vmatprep.subr.mxu0 0.0
    %3687 = vmatpush1.msra.mxu0 0.0
    %3688 = vmatprep.subr.mxu0 0.0
    %3689 = vmatpush1.msra.mxu0 0.0
    %3690 = vmatprep.subr.mxu0 0.0
    %3691 = vmatpush1.msra.mxu0 0.0
    %3692 = vmatprep.subr.mxu0 0.0
    %3693 = vmatpush1.msra.mxu0 0.0
    %3694 = vmatprep.subr.mxu0 0.0
    %3695 = vmatpush1.msra.mxu0 0.0
    %3696 = vmatprep.subr.mxu0 0.0
    %3697 = vmatpush1.msra.mxu0 0.0
    %3698 = vmatprep.subr.mxu0 0.0
    %3699 = vmatpush1.msra.mxu0 0.0
    %3700 = vmatprep.subr.mxu0 0.0
    %3701 = vmatpush1.msra.mxu0 0.0
    %3702 = vmatprep.subr.mxu0 0.0
    %3703 = vmatpush1.msra.mxu0 0.0
    %3704 = vmatprep.subr.mxu0 0.0
    %3705 = vmatpush1.msra.mxu0 0.0
    %3706 = vmatprep.subr.mxu0 0.0
    %3707 = vmatpush1.msra.mxu0 0.0
    %3708 = vmatprep.subr.mxu0 0.0
    %3709 = vmatpush1.msra.mxu0 0.0
    %3710 = vmatprep.subr.mxu0 0.0
    %3711 = vmatpush1.msra.mxu0 0.0
    %3712 = vmatprep.subr.mxu0 0.0
    %3713 = vmatpush1.msra.mxu0 0.0
    %3714 = vmatprep.subr.mxu0 0.0
    %3715 = vmatpush1.msra.mxu0 0.0
    %3716 = vmatprep.subr.mxu0 0.0
    %3717 = vmatpush1.msra.mxu0 0.0
    %3718 = vmatprep.subr.mxu0 0.0
    %3719 = vmatpush1.msra.mxu0 0.0
    %3720 = vmatprep.subr.mxu0 0.0
    %3721 = vmatpush1.msra.mxu0 0.0
    %3722 = vmatprep.subr.mxu0 0.0
    %3723 = vmatpush1.msra.mxu0 0.0
    %3724 = vmatprep.subr.mxu0 0.0
    %3725 = vmatpush1.msra.mxu0 0.0
    %3726 = vmatprep.subr.mxu0 0.0
    %3727 = vmatpush1.msra.mxu0 0.0
    %3728 = vmatprep.subr.mxu0 0.0
    %3729 = vmatpush1.msra.mxu0 0.0
    %3730 = vmatprep.subr.mxu0 0.0
    %3731 = vmatpush1.msra.mxu0 0.0
    %3732 = vmatprep.subr.mxu0 0.0
    %3733 = vmatpush1.msra.mxu0 0.0
    %3734 = vmatprep.subr.mxu0 0.0
    %3735 = vmatpush1.msra.mxu0 0.0
    %3736 = vmatprep.mubr.f32.mxu0 0.0
    %v3737 = vand.u32 %v3279, 4294901760
    %3738 = vmatmul.mubr.f32.gmra.mrb[0].mxu0 %v3737
    %v3739 = vpop.f32.mrb[0].mxu0
    %v3740 = vadd.f32 %v3644, %v3739
    %v3741 = vpop.f32.mrb[0].mxu0
    %v3742 = vadd.f32 %v3646, %v3741
    %3743 = vdwg.mxu0
    %v3744 = vand.u32 %v3263, 4294901760
    %3745 = vmatprep.subr.mxu0 %v3744
    %v3746 = vand.u32 %v3262, 4294901760
    %3747 = vmatpush1.msra.mxu0 %v3746
    %v3748 = vand.u32 %v3267, 4294901760
    %3749 = vmatprep.subr.mxu0 %v3748
    %v3750 = vand.u32 %v3266, 4294901760
    %3751 = vmatpush1.msra.mxu0 %v3750
    %v3752 = vand.u32 %v3271, 4294901760
    %3753 = vmatprep.subr.mxu0 %v3752
    %v3754 = vand.u32 %v3270, 4294901760
    %3755 = vmatpush1.msra.mxu0 %v3754
    %v3756 = vand.u32 %v3275, 4294901760
    %3757 = vmatprep.subr.mxu0 %v3756
    %v3758 = vand.u32 %v3274, 4294901760
    %3759 = vmatpush1.msra.mxu0 %v3758
    %3760 = vmatprep.subr.mxu0 0.0
    %3761 = vmatpush1.msra.mxu0 0.0
    %3762 = vmatprep.subr.mxu0 0.0
    %3763 = vmatpush1.msra.mxu0 0.0
    %3764 = vmatprep.subr.mxu0 0.0
    %3765 = vmatpush1.msra.mxu0 0.0
    %3766 = vmatprep.subr.mxu0 0.0
    %3767 = vmatpush1.msra.mxu0 0.0
    %3768 = vmatprep.subr.mxu0 0.0
    %3769 = vmatpush1.msra.mxu0 0.0
    %3770 = vmatprep.subr.mxu0 0.0
    %3771 = vmatpush1.msra.mxu0 0.0
    %3772 = vmatprep.subr.mxu0 0.0
    %3773 = vmatpush1.msra.mxu0 0.0
    %3774 = vmatprep.subr.mxu0 0.0
    %3775 = vmatpush1.msra.mxu0 0.0
    %3776 = vmatprep.subr.mxu0 0.0
    %3777 = vmatpush1.msra.mxu0 0.0
    %3778 = vmatprep.subr.mxu0 0.0
    %3779 = vmatpush1.msra.mxu0 0.0
    %3780 = vmatprep.subr.mxu0 0.0
    %3781 = vmatpush1.msra.mxu0 0.0
    %3782 = vmatprep.subr.mxu0 0.0
    %3783 = vmatpush1.msra.mxu0 0.0
    %3784 = vmatprep.subr.mxu0 0.0
    %3785 = vmatpush1.msra.mxu0 0.0
    %3786 = vmatprep.subr.mxu0 0.0
    %3787 = vmatpush1.msra.mxu0 0.0
    %3788 = vmatprep.subr.mxu0 0.0
    %3789 = vmatpush1.msra.mxu0 0.0
    %3790 = vmatprep.subr.mxu0 0.0
    %3791 = vmatpush1.msra.mxu0 0.0
    %3792 = vmatprep.subr.mxu0 0.0
    %3793 = vmatpush1.msra.mxu0 0.0
    %3794 = vmatprep.subr.mxu0 0.0
    %3795 = vmatpush1.msra.mxu0 0.0
    %3796 = vmatprep.subr.mxu0 0.0
    %3797 = vmatpush1.msra.mxu0 0.0
    %3798 = vmatprep.subr.mxu0 0.0
    %3799 = vmatpush1.msra.mxu0 0.0
    %3800 = vmatprep.subr.mxu0 0.0
    %3801 = vmatpush1.msra.mxu0 0.0
    %3802 = vmatprep.subr.mxu0 0.0
    %3803 = vmatpush1.msra.mxu0 0.0
    %3804 = vmatprep.subr.mxu0 0.0
    %3805 = vmatpush1.msra.mxu0 0.0
    %3806 = vmatprep.subr.mxu0 0.0
    %3807 = vmatpush1.msra.mxu0 0.0
    %3808 = vmatprep.subr.mxu0 0.0
    %3809 = vmatpush1.msra.mxu0 0.0
    %3810 = vmatprep.subr.mxu0 0.0
    %3811 = vmatpush1.msra.mxu0 0.0
    %3812 = vmatprep.subr.mxu0 0.0
    %3813 = vmatpush1.msra.mxu0 0.0
    %3814 = vmatprep.subr.mxu0 0.0
    %3815 = vmatpush1.msra.mxu0 0.0
    %3816 = vmatprep.mubr.f32.mxu0 0.0
    %v3817 = vand.u32 %v3279, 4294901760
    %3818 = vmatmul.mubr.f32.gmra.mrb[0].mxu0 %v3817
    %v3819 = vpop.f32.mrb[0].mxu0
    %v3820 = vadd.f32 %v3740, %v3819
    %v3821 = vpop.f32.mrb[0].mxu0
    %v3822 = vadd.f32 %v3742, %v3821
    %3823 = vdwg.mxu0
    %v3824 = vand.u32 %v3265, 4294901760
    %3825 = vmatprep.subr.mxu0 %v3824
    %v3826 = vand.u32 %v3264, 4294901760
    %3827 = vmatpush1.msra.mxu0 %v3826
    %v3828 = vand.u32 %v3269, 4294901760
    %3829 = vmatprep.subr.mxu0 %v3828
    %v3830 = vand.u32 %v3268, 4294901760
    %3831 = vmatpush1.msra.mxu0 %v3830
    %v3832 = vand.u32 %v3273, 4294901760
    %3833 = vmatprep.subr.mxu0 %v3832
    %v3834 = vand.u32 %v3272, 4294901760
    %3835 = vmatpush1.msra.mxu0 %v3834
    %v3836 = vand.u32 %v3277, 4294901760
    %3837 = vmatprep.subr.mxu0 %v3836
    %v3838 = vand.u32 %v3276, 4294901760
    %3839 = vmatpush1.msra.mxu0 %v3838
    %3840 = vmatprep.subr.mxu0 0.0
    %3841 = vmatpush1.msra.mxu0 0.0
    %3842 = vmatprep.subr.mxu0 0.0
    %3843 = vmatpush1.msra.mxu0 0.0
    %3844 = vmatprep.subr.mxu0 0.0
    %3845 = vmatpush1.msra.mxu0 0.0
    %3846 = vmatprep.subr.mxu0 0.0
    %3847 = vmatpush1.msra.mxu0 0.0
    %3848 = vmatprep.subr.mxu0 0.0
    %3849 = vmatpush1.msra.mxu0 0.0
    %3850 = vmatprep.subr.mxu0 0.0
    %3851 = vmatpush1.msra.mxu0 0.0
    %3852 = vmatprep.subr.mxu0 0.0
    %3853 = vmatpush1.msra.mxu0 0.0
    %3854 = vmatprep.subr.mxu0 0.0
    %3855 = vmatpush1.msra.mxu0 0.0
    %3856 = vmatprep.subr.mxu0 0.0
    %3857 = vmatpush1.msra.mxu0 0.0
    %3858 = vmatprep.subr.mxu0 0.0
    %3859 = vmatpush1.msra.mxu0 0.0
    %3860 = vmatprep.subr.mxu0 0.0
    %3861 = vmatpush1.msra.mxu0 0.0
    %3862 = vmatprep.subr.mxu0 0.0
    %3863 = vmatpush1.msra.mxu0 0.0
    %3864 = vmatprep.subr.mxu0 0.0
    %3865 = vmatpush1.msra.mxu0 0.0
    %3866 = vmatprep.subr.mxu0 0.0
    %3867 = vmatpush1.msra.mxu0 0.0
    %3868 = vmatprep.subr.mxu0 0.0
    %3869 = vmatpush1.msra.mxu0 0.0
    %3870 = vmatprep.subr.mxu0 0.0
    %3871 = vmatpush1.msra.mxu0 0.0
    %3872 = vmatprep.subr.mxu0 0.0
    %3873 = vmatpush1.msra.mxu0 0.0
    %3874 = vmatprep.subr.mxu0 0.0
    %3875 = vmatpush1.msra.mxu0 0.0
    %3876 = vmatprep.subr.mxu0 0.0
    %3877 = vmatpush1.msra.mxu0 0.0
    %3878 = vmatprep.subr.mxu0 0.0
    %3879 = vmatpush1.msra.mxu0 0.0
    %3880 = vmatprep.subr.mxu0 0.0
    %3881 = vmatpush1.msra.mxu0 0.0
    %3882 = vmatprep.subr.mxu0 0.0
    %3883 = vmatpush1.msra.mxu0 0.0
    %3884 = vmatprep.subr.mxu0 0.0
    %3885 = vmatpush1.msra.mxu0 0.0
    %3886 = vmatprep.subr.mxu0 0.0
    %3887 = vmatpush1.msra.mxu0 0.0
    %3888 = vmatprep.subr.mxu0 0.0
    %3889 = vmatpush1.msra.mxu0 0.0
    %3890 = vmatprep.subr.mxu0 0.0
    %3891 = vmatpush1.msra.mxu0 0.0
    %3892 = vmatprep.subr.mxu0 0.0
    %3893 = vmatpush1.msra.mxu0 0.0
    %3894 = vmatprep.subr.mxu0 0.0
    %3895 = vmatpush1.msra.mxu0 0.0
    %3896 = vmatprep.mubr.f32.mxu0 0.0
    %v3897 = vand.u32 %v3279, 4294901760
    %v3898 = vsub.f32 %v3279, %v3897
    %v3899 = vand.u32 %v3898, 4294901760
    %v3900 = vsub.f32 %v3898, %v3899
    %v3901 = vand.u32 %v3900, 4294901760
    %3902 = vmatmul.mubr.f32.gmra.mrb[0].mxu0 %v3901
    %v3903 = vpop.f32.mrb[0].mxu0
    %v3904 = vadd.f32 0.0, %v3903
    %v3905 = vpop.f32.mrb[0].mxu0
    %v3906 = vadd.f32 0.0, %v3905
    %3907 = vdwg.mxu0
    %v3908 = vand.u32 %v3265, 4294901760
    %v3909 = vsub.f32 %v3265, %v3908
    %v3910 = vand.u32 %v3909, 4294901760
    %v3911 = vsub.f32 %v3909, %v3910
    %v3912 = vand.u32 %v3911, 4294901760
    %3913 = vmatprep.subr.mxu0 %v3912
    %v3914 = vand.u32 %v3264, 4294901760
    %v3915 = vsub.f32 %v3264, %v3914
    %v3916 = vand.u32 %v3915, 4294901760
    %v3917 = vsub.f32 %v3915, %v3916
    %v3918 = vand.u32 %v3917, 4294901760
    %3919 = vmatpush1.msra.mxu0 %v3918
    %v3920 = vand.u32 %v3269, 4294901760
    %v3921 = vsub.f32 %v3269, %v3920
    %v3922 = vand.u32 %v3921, 4294901760
    %v3923 = vsub.f32 %v3921, %v3922
    %v3924 = vand.u32 %v3923, 4294901760
    %3925 = vmatprep.subr.mxu0 %v3924
    %v3926 = vand.u32 %v3268, 4294901760
    %v3927 = vsub.f32 %v3268, %v3926
    %v3928 = vand.u32 %v3927, 4294901760
    %v3929 = vsub.f32 %v3927, %v3928
    %v3930 = vand.u32 %v3929, 4294901760
    %3931 = vmatpush1.msra.mxu0 %v3930
    %v3932 = vand.u32 %v3273, 4294901760
    %v3933 = vsub.f32 %v3273, %v3932
    %v3934 = vand.u32 %v3933, 4294901760
    %v3935 = vsub.f32 %v3933, %v3934
    %v3936 = vand.u32 %v3935, 4294901760
    %3937 = vmatprep.subr.mxu0 %v3936
    %v3938 = vand.u32 %v3272, 4294901760
    %v3939 = vsub.f32 %v3272, %v3938
    %v3940 = vand.u32 %v3939, 4294901760
    %v3941 = vsub.f32 %v3939, %v3940
    %v3942 = vand.u32 %v3941, 4294901760
    %3943 = vmatpush1.msra.mxu0 %v3942
    %v3944 = vand.u32 %v3277, 4294901760
    %v3945 = vsub.f32 %v3277, %v3944
    %v3946 = vand.u32 %v3945, 4294901760
    %v3947 = vsub.f32 %v3945, %v3946
    %v3948 = vand.u32 %v3947, 4294901760
    %3949 = vmatprep.subr.mxu0 %v3948
    %v3950 = vand.u32 %v3276, 4294901760
    %v3951 = vsub.f32 %v3276, %v3950
    %v3952 = vand.u32 %v3951, 4294901760
    %v3953 = vsub.f32 %v3951, %v3952
    %v3954 = vand.u32 %v3953, 4294901760
    %3955 = vmatpush1.msra.mxu0 %v3954
    %3956 = vmatprep.subr.mxu0 0.0
    %3957 = vmatpush1.msra.mxu0 0.0
    %3958 = vmatprep.subr.mxu0 0.0
    %3959 = vmatpush1.msra.mxu0 0.0
    %3960 = vmatprep.subr.mxu0 0.0
    %3961 = vmatpush1.msra.mxu0 0.0
    %3962 = vmatprep.subr.mxu0 0.0
    %3963 = vmatpush1.msra.mxu0 0.0
    %3964 = vmatprep.subr.mxu0 0.0
    %3965 = vmatpush1.msra.mxu0 0.0
    %3966 = vmatprep.subr.mxu0 0.0
    %3967 = vmatpush1.msra.mxu0 0.0
    %3968 = vmatprep.subr.mxu0 0.0
    %3969 = vmatpush1.msra.mxu0 0.0
    %3970 = vmatprep.subr.mxu0 0.0
    %3971 = vmatpush1.msra.mxu0 0.0
    %3972 = vmatprep.subr.mxu0 0.0
    %3973 = vmatpush1.msra.mxu0 0.0
    %3974 = vmatprep.subr.mxu0 0.0
    %3975 = vmatpush1.msra.mxu0 0.0
    %3976 = vmatprep.subr.mxu0 0.0
    %3977 = vmatpush1.msra.mxu0 0.0
    %3978 = vmatprep.subr.mxu0 0.0
    %3979 = vmatpush1.msra.mxu0 0.0
    %3980 = vmatprep.subr.mxu0 0.0
    %3981 = vmatpush1.msra.mxu0 0.0
    %3982 = vmatprep.subr.mxu0 0.0
    %3983 = vmatpush1.msra.mxu0 0.0
    %3984 = vmatprep.subr.mxu0 0.0
    %3985 = vmatpush1.msra.mxu0 0.0
    %3986 = vmatprep.subr.mxu0 0.0
    %3987 = vmatpush1.msra.mxu0 0.0
    %3988 = vmatprep.subr.mxu0 0.0
    %3989 = vmatpush1.msra.mxu0 0.0
    %3990 = vmatprep.subr.mxu0 0.0
    %3991 = vmatpush1.msra.mxu0 0.0
    %3992 = vmatprep.subr.mxu0 0.0
    %3993 = vmatpush1.msra.mxu0 0.0
    %3994 = vmatprep.subr.mxu0 0.0
    %3995 = vmatpush1.msra.mxu0 0.0
    %3996 = vmatprep.subr.mxu0 0.0
    %3997 = vmatpush1.msra.mxu0 0.0
    %3998 = vmatprep.subr.mxu0 0.0
    %3999 = vmatpush1.msra.mxu0 0.0
    %4000 = vmatprep.subr.mxu0 0.0
    %4001 = vmatpush1.msra.mxu0 0.0
    %4002 = vmatprep.subr.mxu0 0.0
    %4003 = vmatpush1.msra.mxu0 0.0
    %4004 = vmatprep.subr.mxu0 0.0
    %4005 = vmatpush1.msra.mxu0 0.0
    %4006 = vmatprep.subr.mxu0 0.0
    %4007 = vmatpush1.msra.mxu0 0.0
    %4008 = vmatprep.subr.mxu0 0.0
    %4009 = vmatpush1.msra.mxu0 0.0
    %4010 = vmatprep.subr.mxu0 0.0
    %4011 = vmatpush1.msra.mxu0 0.0
    %4012 = vmatprep.mubr.f32.mxu0 0.0
    %v4013 = vand.u32 %v3279, 4294901760
    %4014 = vmatmul.mubr.f32.gmra.mrb[0].mxu0 %v4013
    %v4015 = vpop.f32.mrb[0].mxu0
    %v4016 = vadd.f32 %v3904, %v4015
    %v4017 = vpop.f32.mrb[0].mxu0
    %v4018 = vadd.f32 %v3906, %v4017
    %4019 = vdwg.mxu0
    %v4020 = vand.u32 %v3265, 4294901760
    %v4021 = vsub.f32 %v3265, %v4020
    %4022 = vmatprep.subr.mxu0 %v4021
    %v4023 = vand.u32 %v3264, 4294901760
    %v4024 = vsub.f32 %v3264, %v4023
    %4025 = vmatpush1.msra.mxu0 %v4024
    %v4026 = vand.u32 %v3269, 4294901760
    %v4027 = vsub.f32 %v3269, %v4026
    %4028 = vmatprep.subr.mxu0 %v4027
    %v4029 = vand.u32 %v3268, 4294901760
    %v4030 = vsub.f32 %v3268, %v4029
    %4031 = vmatpush1.msra.mxu0 %v4030
    %v4032 = vand.u32 %v3273, 4294901760
    %v4033 = vsub.f32 %v3273, %v4032
    %4034 = vmatprep.subr.mxu0 %v4033
    %v4035 = vand.u32 %v3272, 4294901760
    %v4036 = vsub.f32 %v3272, %v4035
    %4037 = vmatpush1.msra.mxu0 %v4036
    %v4038 = vand.u32 %v3277, 4294901760
    %v4039 = vsub.f32 %v3277, %v4038
    %4040 = vmatprep.subr.mxu0 %v4039
    %v4041 = vand.u32 %v3276, 4294901760
    %v4042 = vsub.f32 %v3276, %v4041
    %4043 = vmatpush1.msra.mxu0 %v4042
    %4044 = vmatprep.subr.mxu0 0.0
    %4045 = vmatpush1.msra.mxu0 0.0
    %4046 = vmatprep.subr.mxu0 0.0
    %4047 = vmatpush1.msra.mxu0 0.0
    %4048 = vmatprep.subr.mxu0 0.0
    %4049 = vmatpush1.msra.mxu0 0.0
    %4050 = vmatprep.subr.mxu0 0.0
    %4051 = vmatpush1.msra.mxu0 0.0
    %4052 = vmatprep.subr.mxu0 0.0
    %4053 = vmatpush1.msra.mxu0 0.0
    %4054 = vmatprep.subr.mxu0 0.0
    %4055 = vmatpush1.msra.mxu0 0.0
    %4056 = vmatprep.subr.mxu0 0.0
    %4057 = vmatpush1.msra.mxu0 0.0
    %4058 = vmatprep.subr.mxu0 0.0
    %4059 = vmatpush1.msra.mxu0 0.0
    %4060 = vmatprep.subr.mxu0 0.0
    %4061 = vmatpush1.msra.mxu0 0.0
    %4062 = vmatprep.subr.mxu0 0.0
    %4063 = vmatpush1.msra.mxu0 0.0
    %4064 = vmatprep.subr.mxu0 0.0
    %4065 = vmatpush1.msra.mxu0 0.0
    %4066 = vmatprep.subr.mxu0 0.0
    %4067 = vmatpush1.msra.mxu0 0.0
    %4068 = vmatprep.subr.mxu0 0.0
    %4069 = vmatpush1.msra.mxu0 0.0
    %4070 = vmatprep.subr.mxu0 0.0
    %4071 = vmatpush1.msra.mxu0 0.0
    %4072 = vmatprep.subr.mxu0 0.0
    %4073 = vmatpush1.msra.mxu0 0.0
    %4074 = vmatprep.subr.mxu0 0.0
    %4075 = vmatpush1.msra.mxu0 0.0
    %4076 = vmatprep.subr.mxu0 0.0
    %4077 = vmatpush1.msra.mxu0 0.0
    %4078 = vmatprep.subr.mxu0 0.0
    %4079 = vmatpush1.msra.mxu0 0.0
    %4080 = vmatprep.subr.mxu0 0.0
    %4081 = vmatpush1.msra.mxu0 0.0
    %4082 = vmatprep.subr.mxu0 0.0
    %4083 = vmatpush1.msra.mxu0 0.0
    %4084 = vmatprep.subr.mxu0 0.0
    %4085 = vmatpush1.msra.mxu0 0.0
    %4086 = vmatprep.subr.mxu0 0.0
    %4087 = vmatpush1.msra.mxu0 0.0
    %4088 = vmatprep.subr.mxu0 0.0
    %4089 = vmatpush1.msra.mxu0 0.0
    %4090 = vmatprep.subr.mxu0 0.0
    %4091 = vmatpush1.msra.mxu0 0.0
    %4092 = vmatprep.subr.mxu0 0.0
    %4093 = vmatpush1.msra.mxu0 0.0
    %4094 = vmatprep.subr.mxu0 0.0
    %4095 = vmatpush1.msra.mxu0 0.0
    %4096 = vmatprep.subr.mxu0 0.0
    %4097 = vmatpush1.msra.mxu0 0.0
    %4098 = vmatprep.subr.mxu0 0.0
    %4099 = vmatpush1.msra.mxu0 0.0
    %4100 = vmatprep.mubr.f32.mxu0 0.0
    %v4101 = vand.u32 %v3279, 4294901760
    %v4102 = vsub.f32 %v3279, %v4101
    %4103 = vmatmul.mubr.f32.gmra.mrb[0].mxu0 %v4102
    %v4104 = vpop.f32.mrb[0].mxu0
    %v4105 = vadd.f32 %v4016, %v4104
    %v4106 = vpop.f32.mrb[0].mxu0
    %v4107 = vadd.f32 %v4018, %v4106
    %4108 = vdwg.mxu0
    %v4109 = vand.u32 %v3265, 4294901760
    %4110 = vmatprep.subr.mxu0 %v4109
    %v4111 = vand.u32 %v3264, 4294901760
    %4112 = vmatpush1.msra.mxu0 %v4111
    %v4113 = vand.u32 %v3269, 4294901760
    %4114 = vmatprep.subr.mxu0 %v4113
    %v4115 = vand.u32 %v3268, 4294901760
    %4116 = vmatpush1.msra.mxu0 %v4115
    %v4117 = vand.u32 %v3273, 4294901760
    %4118 = vmatprep.subr.mxu0 %v4117
    %v4119 = vand.u32 %v3272, 4294901760
    %4120 = vmatpush1.msra.mxu0 %v4119
    %v4121 = vand.u32 %v3277, 4294901760
    %4122 = vmatprep.subr.mxu0 %v4121
    %v4123 = vand.u32 %v3276, 4294901760
    %4124 = vmatpush1.msra.mxu0 %v4123
    %4125 = vmatprep.subr.mxu0 0.0
    %4126 = vmatpush1.msra.mxu0 0.0
    %4127 = vmatprep.subr.mxu0 0.0
    %4128 = vmatpush1.msra.mxu0 0.0
    %4129 = vmatprep.subr.mxu0 0.0
    %4130 = vmatpush1.msra.mxu0 0.0
    %4131 = vmatprep.subr.mxu0 0.0
    %4132 = vmatpush1.msra.mxu0 0.0
    %4133 = vmatprep.subr.mxu0 0.0
    %4134 = vmatpush1.msra.mxu0 0.0
    %4135 = vmatprep.subr.mxu0 0.0
    %4136 = vmatpush1.msra.mxu0 0.0
    %4137 = vmatprep.subr.mxu0 0.0
    %4138 = vmatpush1.msra.mxu0 0.0
    %4139 = vmatprep.subr.mxu0 0.0
    %4140 = vmatpush1.msra.mxu0 0.0
    %4141 = vmatprep.subr.mxu0 0.0
    %4142 = vmatpush1.msra.mxu0 0.0
    %4143 = vmatprep.subr.mxu0 0.0
    %4144 = vmatpush1.msra.mxu0 0.0
    %4145 = vmatprep.subr.mxu0 0.0
    %4146 = vmatpush1.msra.mxu0 0.0
    %4147 = vmatprep.subr.mxu0 0.0
    %4148 = vmatpush1.msra.mxu0 0.0
    %4149 = vmatprep.subr.mxu0 0.0
    %4150 = vmatpush1.msra.mxu0 0.0
    %4151 = vmatprep.subr.mxu0 0.0
    %4152 = vmatpush1.msra.mxu0 0.0
    %4153 = vmatprep.subr.mxu0 0.0
    %4154 = vmatpush1.msra.mxu0 0.0
    %4155 = vmatprep.subr.mxu0 0.0
    %4156 = vmatpush1.msra.mxu0 0.0
    %4157 = vmatprep.subr.mxu0 0.0
    %4158 = vmatpush1.msra.mxu0 0.0
    %4159 = vmatprep.subr.mxu0 0.0
    %4160 = vmatpush1.msra.mxu0 0.0
    %4161 = vmatprep.subr.mxu0 0.0
    %4162 = vmatpush1.msra.mxu0 0.0
    %4163 = vmatprep.subr.mxu0 0.0
    %4164 = vmatpush1.msra.mxu0 0.0
    %4165 = vmatprep.subr.mxu0 0.0
    %4166 = vmatpush1.msra.mxu0 0.0
    %4167 = vmatprep.subr.mxu0 0.0
    %4168 = vmatpush1.msra.mxu0 0.0
    %4169 = vmatprep.subr.mxu0 0.0
    %4170 = vmatpush1.msra.mxu0 0.0
    %4171 = vmatprep.subr.mxu0 0.0
    %4172 = vmatpush1.msra.mxu0 0.0
    %4173 = vmatprep.subr.mxu0 0.0
    %4174 = vmatpush1.msra.mxu0 0.0
    %4175 = vmatprep.subr.mxu0 0.0
    %4176 = vmatpush1.msra.mxu0 0.0
    %4177 = vmatprep.subr.mxu0 0.0
    %4178 = vmatpush1.msra.mxu0 0.0
    %4179 = vmatprep.subr.mxu0 0.0
    %4180 = vmatpush1.msra.mxu0 0.0
    %4181 = vmatprep.mubr.f32.mxu0 0.0
    %v4182 = vand.u32 %v3279, 4294901760
    %v4183 = vsub.f32 %v3279, %v4182
    %v4184 = vand.u32 %v4183, 4294901760
    %4185 = vmatmul.mubr.f32.gmra.mrb[0].mxu0 %v4184
    %v4186 = vpop.f32.mrb[0].mxu0
    %v4187 = vadd.f32 %v4105, %v4186
    %v4188 = vpop.f32.mrb[0].mxu0
    %v4189 = vadd.f32 %v4107, %v4188
    %4190 = vdwg.mxu0
    %v4191 = vand.u32 %v3265, 4294901760
    %v4192 = vsub.f32 %v3265, %v4191
    %v4193 = vand.u32 %v4192, 4294901760
    %4194 = vmatprep.subr.mxu0 %v4193
    %v4195 = vand.u32 %v3264, 4294901760
    %v4196 = vsub.f32 %v3264, %v4195
    %v4197 = vand.u32 %v4196, 4294901760
    %4198 = vmatpush1.msra.mxu0 %v4197
    %v4199 = vand.u32 %v3269, 4294901760
    %v4200 = vsub.f32 %v3269, %v4199
    %v4201 = vand.u32 %v4200, 4294901760
    %4202 = vmatprep.subr.mxu0 %v4201
    %v4203 = vand.u32 %v3268, 4294901760
    %v4204 = vsub.f32 %v3268, %v4203
    %v4205 = vand.u32 %v4204, 4294901760
    %4206 = vmatpush1.msra.mxu0 %v4205
    %v4207 = vand.u32 %v3273, 4294901760
    %v4208 = vsub.f32 %v3273, %v4207
    %v4209 = vand.u32 %v4208, 4294901760
    %4210 = vmatprep.subr.mxu0 %v4209
    %v4211 = vand.u32 %v3272, 4294901760
    %v4212 = vsub.f32 %v3272, %v4211
    %v4213 = vand.u32 %v4212, 4294901760
    %4214 = vmatpush1.msra.mxu0 %v4213
    %v4215 = vand.u32 %v3277, 4294901760
    %v4216 = vsub.f32 %v3277, %v4215
    %v4217 = vand.u32 %v4216, 4294901760
    %4218 = vmatprep.subr.mxu0 %v4217
    %v4219 = vand.u32 %v3276, 4294901760
    %v4220 = vsub.f32 %v3276, %v4219
    %v4221 = vand.u32 %v4220, 4294901760
    %4222 = vmatpush1.msra.mxu0 %v4221
    %4223 = vmatprep.subr.mxu0 0.0
    %4224 = vmatpush1.msra.mxu0 0.0
    %4225 = vmatprep.subr.mxu0 0.0
    %4226 = vmatpush1.msra.mxu0 0.0
    %4227 = vmatprep.subr.mxu0 0.0
    %4228 = vmatpush1.msra.mxu0 0.0
    %4229 = vmatprep.subr.mxu0 0.0
    %4230 = vmatpush1.msra.mxu0 0.0
    %4231 = vmatprep.subr.mxu0 0.0
    %4232 = vmatpush1.msra.mxu0 0.0
    %4233 = vmatprep.subr.mxu0 0.0
    %4234 = vmatpush1.msra.mxu0 0.0
    %4235 = vmatprep.subr.mxu0 0.0
    %4236 = vmatpush1.msra.mxu0 0.0
    %4237 = vmatprep.subr.mxu0 0.0
    %4238 = vmatpush1.msra.mxu0 0.0
    %4239 = vmatprep.subr.mxu0 0.0
    %4240 = vmatpush1.msra.mxu0 0.0
    %4241 = vmatprep.subr.mxu0 0.0
    %4242 = vmatpush1.msra.mxu0 0.0
    %4243 = vmatprep.subr.mxu0 0.0
    %4244 = vmatpush1.msra.mxu0 0.0
    %4245 = vmatprep.subr.mxu0 0.0
    %4246 = vmatpush1.msra.mxu0 0.0
    %4247 = vmatprep.subr.mxu0 0.0
    %4248 = vmatpush1.msra.mxu0 0.0
    %4249 = vmatprep.subr.mxu0 0.0
    %4250 = vmatpush1.msra.mxu0 0.0
    %4251 = vmatprep.subr.mxu0 0.0
    %4252 = vmatpush1.msra.mxu0 0.0
    %4253 = vmatprep.subr.mxu0 0.0
    %4254 = vmatpush1.msra.mxu0 0.0
    %4255 = vmatprep.subr.mxu0 0.0
    %4256 = vmatpush1.msra.mxu0 0.0
    %4257 = vmatprep.subr.mxu0 0.0
    %4258 = vmatpush1.msra.mxu0 0.0
    %4259 = vmatprep.subr.mxu0 0.0
    %4260 = vmatpush1.msra.mxu0 0.0
    %4261 = vmatprep.subr.mxu0 0.0
    %4262 = vmatpush1.msra.mxu0 0.0
    %4263 = vmatprep.subr.mxu0 0.0
    %4264 = vmatpush1.msra.mxu0 0.0
    %4265 = vmatprep.subr.mxu0 0.0
    %4266 = vmatpush1.msra.mxu0 0.0
    %4267 = vmatprep.subr.mxu0 0.0
    %4268 = vmatpush1.msra.mxu0 0.0
    %4269 = vmatprep.subr.mxu0 0.0
    %4270 = vmatpush1.msra.mxu0 0.0
    %4271 = vmatprep.subr.mxu0 0.0
    %4272 = vmatpush1.msra.mxu0 0.0
    %4273 = vmatprep.subr.mxu0 0.0
    %4274 = vmatpush1.msra.mxu0 0.0
    %4275 = vmatprep.subr.mxu0 0.0
    %4276 = vmatpush1.msra.mxu0 0.0
    %4277 = vmatprep.subr.mxu0 0.0
    %4278 = vmatpush1.msra.mxu0 0.0
    %4279 = vmatprep.mubr.f32.mxu0 0.0
    %v4280 = vand.u32 %v3279, 4294901760
    %4281 = vmatmul.mubr.f32.gmra.mrb[0].mxu0 %v4280
    %v4282 = vpop.f32.mrb[0].mxu0
    %v4283 = vadd.f32 %v4187, %v4282
    %v4284 = vpop.f32.mrb[0].mxu0
    %v4285 = vadd.f32 %v4189, %v4284
    %4286 = vdwg.mxu0
    %v4287 = vand.u32 %v3265, 4294901760
    %4288 = vmatprep.subr.mxu0 %v4287
    %v4289 = vand.u32 %v3264, 4294901760
    %4290 = vmatpush1.msra.mxu0 %v4289
    %v4291 = vand.u32 %v3269, 4294901760
    %4292 = vmatprep.subr.mxu0 %v4291
    %v4293 = vand.u32 %v3268, 4294901760
    %4294 = vmatpush1.msra.mxu0 %v4293
    %v4295 = vand.u32 %v3273, 4294901760
    %4296 = vmatprep.subr.mxu0 %v4295
    %v4297 = vand.u32 %v3272, 4294901760
    %4298 = vmatpush1.msra.mxu0 %v4297
    %v4299 = vand.u32 %v3277, 4294901760
    %4300 = vmatprep.subr.mxu0 %v4299
    %v4301 = vand.u32 %v3276, 4294901760
    %4302 = vmatpush1.msra.mxu0 %v4301
    %4303 = vmatprep.subr.mxu0 0.0
    %4304 = vmatpush1.msra.mxu0 0.0
    %4305 = vmatprep.subr.mxu0 0.0
    %4306 = vmatpush1.msra.mxu0 0.0
    %4307 = vmatprep.subr.mxu0 0.0
    %4308 = vmatpush1.msra.mxu0 0.0
    %4309 = vmatprep.subr.mxu0 0.0
    %4310 = vmatpush1.msra.mxu0 0.0
    %4311 = vmatprep.subr.mxu0 0.0
    %4312 = vmatpush1.msra.mxu0 0.0
    %4313 = vmatprep.subr.mxu0 0.0
    %4314 = vmatpush1.msra.mxu0 0.0
    %4315 = vmatprep.subr.mxu0 0.0
    %4316 = vmatpush1.msra.mxu0 0.0
    %4317 = vmatprep.subr.mxu0 0.0
    %4318 = vmatpush1.msra.mxu0 0.0
    %4319 = vmatprep.subr.mxu0 0.0
    %4320 = vmatpush1.msra.mxu0 0.0
    %4321 = vmatprep.subr.mxu0 0.0
    %4322 = vmatpush1.msra.mxu0 0.0
    %4323 = vmatprep.subr.mxu0 0.0
    %4324 = vmatpush1.msra.mxu0 0.0
    %4325 = vmatprep.subr.mxu0 0.0
    %4326 = vmatpush1.msra.mxu0 0.0
    %4327 = vmatprep.subr.mxu0 0.0
    %4328 = vmatpush1.msra.mxu0 0.0
    %4329 = vmatprep.subr.mxu0 0.0
    %4330 = vmatpush1.msra.mxu0 0.0
    %4331 = vmatprep.subr.mxu0 0.0
    %4332 = vmatpush1.msra.mxu0 0.0
    %4333 = vmatprep.subr.mxu0 0.0
    %4334 = vmatpush1.msra.mxu0 0.0
    %4335 = vmatprep.subr.mxu0 0.0
    %4336 = vmatpush1.msra.mxu0 0.0
    %4337 = vmatprep.subr.mxu0 0.0
    %4338 = vmatpush1.msra.mxu0 0.0
    %4339 = vmatprep.subr.mxu0 0.0
    %4340 = vmatpush1.msra.mxu0 0.0
    %4341 = vmatprep.subr.mxu0 0.0
    %4342 = vmatpush1.msra.mxu0 0.0
    %4343 = vmatprep.subr.mxu0 0.0
    %4344 = vmatpush1.msra.mxu0 0.0
    %4345 = vmatprep.subr.mxu0 0.0
    %4346 = vmatpush1.msra.mxu0 0.0
    %4347 = vmatprep.subr.mxu0 0.0
    %4348 = vmatpush1.msra.mxu0 0.0
    %4349 = vmatprep.subr.mxu0 0.0
    %4350 = vmatpush1.msra.mxu0 0.0
    %4351 = vmatprep.subr.mxu0 0.0
    %4352 = vmatpush1.msra.mxu0 0.0
    %4353 = vmatprep.subr.mxu0 0.0
    %4354 = vmatpush1.msra.mxu0 0.0
    %4355 = vmatprep.subr.mxu0 0.0
    %4356 = vmatpush1.msra.mxu0 0.0
    %4357 = vmatprep.subr.mxu0 0.0
    %4358 = vmatpush1.msra.mxu0 0.0
    %4359 = vmatprep.mubr.f32.mxu0 0.0
    %v4360 = vand.u32 %v3279, 4294901760
    %4361 = vmatmul.mubr.f32.gmra.mrb[0].mxu0 %v4360
    %v4362 = vpop.f32.mrb[0].mxu0
    %v4363 = vadd.f32 %v4283, %v4362
    %v4364 = vpop.f32.mrb[0].mxu0
    %v4365 = vadd.f32 %v4285, %v4364
    %4366 = vdwg.mxu0
    %v4371 = vcombine.low %v3820, %v3822
    %v4372 = vcombine.low %v4363, %v4365
    %v4374 = vunpack.c.l.s4 1983009808
    %v4375 = vunpack.c.0.s8 %v4374
    %v4376 = vlaneseq
    %v4377 = vshrl.u32 %v4376, 7
    %v4378 = vsub.s32 %v4375, %v4377
    %v4379 = vrot.slane %v4371, %v4378
    %v4381 = vunpack.c.l.s4 1983009808
    %v4382 = vunpack.c.0.s8 %v4381
    %v4383 = vlaneseq
    %v4384 = vshrl.u32 %v4383, 7
    %v4385 = vsub.s32 %v4382, %v4384
    %v4386 = vrot.slane %v4372, %v4385
    %v4387 = vcombine.low %v4379, %v4386
    %v4389 = vmul.f32 %v81, %v4387
    %4390 = vst [vmem:[#allocation11] sm:$0xff] %v4389
    // Predicated region
    $region42: #{tpu_custom_call.1} parent=1 // pred_check
      _
    $region43: #{tpu_custom_call.1} parent=1 // pred_check_branch
      %4392 = sbr.rel (0) target = $region45
    $region44: #{tpu_custom_call.1} parent=1 // pred_region
      %s4394 = ssub.s32 128, 128
      %4395 = vsyncadd [#allocation4], %s4394
      %s4397 = sshll.u32 [#allocation11], 4
      %s4398 = int_to_ptr.vmem [resolvable:$true] %s4397
      %4400 = dma.vmem_to_hbm [thread:$0]  %s4398, 128, %s5, [#allocation4]
    $region45: #{tpu_custom_call.1} parent=1 // pred_fallthru
      _
    // Predicated region
    $region46: #{tpu_custom_call.1} parent=1 // pred_check
      _
    $region47: #{tpu_custom_call.1} parent=1 // pred_check_branch
      %4402 = sbr.rel (0) target = $region49
    $region48: #{tpu_custom_call.1} parent=1 // pred_region
      %4403 = dma.done [#allocation4], 128
    $region49: #{tpu_custom_call.1} parent=1 // pred_fallthru
      _
    %4404 = vsyncpa [#allocation3], 1
    %4405 = vsyncpa [#allocation6], 1
    %4406 = vsyncpa [#allocation9], 1
    %4407 = vsyncpa [#allocation4], 1

</llo_original>
